<compile_context>
chip_gen: v7x
topology: tpu7x:2x2x1
jax: 0.10.0
libtpu: 0.0.40
codegen_flags: <defaults>
</compile_context>

<pallas_src>
import functools

import jax
import jax.numpy as jnp
from jax.experimental import pallas as pl
from jax.experimental.pallas import tpu as pltpu  # noqa: F401  (TPU backend)


# ----------------------------- in-kernel helpers -----------------------------

def _layernorm(x, g, b, eps=1e-12):
    mean = jnp.mean(x, axis=-1, keepdims=True)
    var = jnp.mean(jnp.square(x - mean), axis=-1, keepdims=True)
    return (x - mean) * jax.lax.rsqrt(var + eps) * g + b


def _gelu(x):
    # TODO(synk): BERT uses exact erf GELU; tanh approximation used here.
    c = 0.7978845608028654  # sqrt(2/pi)
    return 0.5 * x * (1.0 + jnp.tanh(c * (x + 0.044715 * x * x * x)))


# ----------------------------- fused whole-model kernel -----------------------------

def _bert_kernel(emb_ref, bias_ref,
                 emb_ln_g_ref, emb_ln_b_ref,
                 wqkv_ref, bqkv_ref, wo_ref, bo_ref,
                 ln1_g_ref, ln1_b_ref,
                 w1_ref, b1_ref, w2_ref, b2_ref,
                 ln2_g_ref, ln2_b_ref,
                 pool_w_ref, pool_b_ref,
                 cls_w_ref, cls_b_ref,
                 o_ref,
                 *, n_layers, n_heads, head_dim, hidden, seq, batch, scale):
    H = hidden
    bias = bias_ref[...]                                     # [M, M] additive

    # embedding LayerNorm (no zeros residual)
    h = _layernorm(emb_ref[...], emb_ln_g_ref[...], emb_ln_b_ref[...])

    # transformer encoder layers (statically unrolled)
    for l in range(n_layers):
        # fused QKV projection: [M, H] @ [H, 3H]
        qkv = jnp.dot(h, wqkv_ref[l],
                      preferred_element_type=jnp.float32) + bqkv_ref[l]

        # per-head attention (heads split by static lane slices)
        ctx_heads = []
        for hh in range(n_heads):
            lo = hh * head_dim
            qh = qkv[:, 0 * H + lo: 0 * H + lo + head_dim]   # [M, dh]
            kh = qkv[:, 1 * H + lo: 1 * H + lo + head_dim]
            vh = qkv[:, 2 * H + lo: 2 * H + lo + head_dim]

            s = jax.lax.dot_general(
                qh, kh, (((1,), (1,)), ((), ())),
                preferred_element_type=jnp.float32) * scale  # [M, M]
            s = s + bias                                     # batch block-diag + key mask
            m = jnp.max(s, axis=-1, keepdims=True)
            p = jnp.exp(s - m)
            p = p * pl.reciprocal(jnp.sum(p, axis=-1, keepdims=True), approx=True)
            ctx_heads.append(jnp.dot(p, vh,
                                     preferred_element_type=jnp.float32))  # [M, dh]
        ctx = jnp.concatenate(ctx_heads, axis=-1)            # [M, H]

        attn_out = jnp.dot(ctx, wo_ref[l],
                           preferred_element_type=jnp.float32) + bo_ref[l]
        h = _layernorm(attn_out + h, ln1_g_ref[l], ln1_b_ref[l])

        ff = _gelu(jnp.dot(h, w1_ref[l],
                           preferred_element_type=jnp.float32) + b1_ref[l])
        ff = jnp.dot(ff, w2_ref[l],
                     preferred_element_type=jnp.float32) + b2_ref[l]
        h = _layernorm(ff + h, ln2_g_ref[l], ln2_b_ref[l])

    # pooler on the CLS token of each sequence (rows b*seq)
    cls_rows = jnp.concatenate(
        [h[b * seq: b * seq + 1, :] for b in range(batch)], axis=0)   # [B, H]
    pooled = jnp.tanh(jnp.dot(cls_rows, pool_w_ref[...],
                              preferred_element_type=jnp.float32) + pool_b_ref[...])

    # TODO(synk): Dropout(0.3) is identity here (eval-mode / inference semantics).

    # classifier, padded to 128 output lanes for a lane-dense store
    logits = jnp.dot(pooled, cls_w_ref[...],
                     preferred_element_type=jnp.float32) + cls_b_ref[...]
    o_ref[...] = logits.astype(o_ref.dtype)


def _full_spec(shape):
    nd = len(shape)
    return pl.BlockSpec(shape, lambda nd=nd: (0,) * nd)


# ----------------------------- parameters -----------------------------

def init_bert_params(key, cfg):
    H, I, L = cfg["hidden"], cfg["intermediate"], cfg["n_layers"]
    NCP = 128  # classifier output padded to one full 128-lane tile
    keys = iter(jax.random.split(key, 64))

    def norm(shape):
        return jax.random.normal(next(keys), shape, jnp.float32) * 0.02

    cls_w = norm((H, cfg["num_classes"]))
    params = {
        "word_emb": norm((cfg["vocab"], H)),
        "pos_emb": norm((cfg["max_pos"], H)),
        "type_emb": norm((cfg["type_vocab"], H)),
        "emb_ln_g": jnp.ones((1, H), jnp.float32),
        "emb_ln_b": jnp.zeros((1, H), jnp.float32),
        # per-layer weights stacked along a leading layer axis
        "wqkv": norm((L, H, 3 * H)),                     # fused [Wq | Wk | Wv]
        "bqkv": jnp.zeros((L, 1, 3 * H), jnp.float32),
        "wo": norm((L, H, H)),
        "bo": jnp.zeros((L, 1, H), jnp.float32),
        "ln1_g": jnp.ones((L, 1, H), jnp.float32),
        "ln1_b": jnp.zeros((L, 1, H), jnp.float32),
        "w1": norm((L, H, I)),
        "b1": jnp.zeros((L, 1, I), jnp.float32),
        "w2": norm((L, I, H)),
        "b2": jnp.zeros((L, 1, H), jnp.float32),
        "ln2_g": jnp.ones((L, 1, H), jnp.float32),
        "ln2_b": jnp.zeros((L, 1, H), jnp.float32),
        "pool_w": norm((H, H)),
        "pool_b": jnp.zeros((1, H), jnp.float32),
        # l3: Linear(hidden, 100), padded 100 -> 128 lanes (sliced back in glue)
        "cls_w": jnp.pad(cls_w, ((0, 0), (0, NCP - cfg["num_classes"]))),
        "cls_b": jnp.zeros((1, NCP), jnp.float32),
    }
    return params


# ----------------------------- forward pass -----------------------------

def make_forward(cfg):
    H = cfg["hidden"]
    L, nh, dh = cfg["n_layers"], cfg["n_heads"], cfg["head_dim"]
    NC = cfg["num_classes"]
    NCP = 128
    scale = 1.0 / (dh ** 0.5)

    def forward(params, ids, mask, token_type_ids):
        B, S = ids.shape
        M = B * S

        # --- embeddings (gathers are XLA glue) ---
        we = params["word_emb"][ids]                           # [B, S, H]
        pe = params["pos_emb"][jnp.arange(S)][None, :, :]      # [1, S, H]
        te = params["type_emb"][token_type_ids]                # [B, S, H]
        emb = (we + pe + te).reshape(M, H)

        # [M, M] additive attention bias: block-diagonal over batch elements
        # combined with the key padding mask (0 -> -10000, like BERT's
        # extended attention mask).
        batch_ids = jnp.repeat(jnp.arange(B), S)
        same_batch = batch_ids[:, None] == batch_ids[None, :]
        key_ok = mask.reshape(M) > 0
        att_bias = jnp.where(same_batch & key_ok[None, :],
                             0.0, -10000.0).astype(jnp.float32)

        kernel = functools.partial(
            _bert_kernel, n_layers=L, n_heads=nh, head_dim=dh,
            hidden=H, seq=S, batch=B, scale=scale)

        inputs = (emb, att_bias,
                  params["emb_ln_g"], params["emb_ln_b"],
                  params["wqkv"], params["bqkv"],
                  params["wo"], params["bo"],
                  params["ln1_g"], params["ln1_b"],
                  params["w1"], params["b1"],
                  params["w2"], params["b2"],
                  params["ln2_g"], params["ln2_b"],
                  params["pool_w"], params["pool_b"],
                  params["cls_w"], params["cls_b"])

        logits_pad = pl.pallas_call(
            kernel,
            out_shape=jax.ShapeDtypeStruct((B, NCP), jnp.float32),
            in_specs=[_full_spec(x.shape) for x in inputs],
            out_specs=_full_spec((B, NCP)),
        )(*inputs)

        return logits_pad[:, :NC]

    return jax.jit(forward)


# ----------------------------- main -----------------------------

if __name__ == "__main__":
    cfg = dict(vocab=100, max_pos=32, type_vocab=2, hidden=128, n_layers=2,
               n_heads=4, head_dim=32, intermediate=512, num_classes=100)
    B, S = 2, 8

    key = jax.random.PRNGKey(0)
    pkey, ikey = jax.random.split(key)
    params = init_bert_params(pkey, cfg)

    ids = jax.random.randint(ikey, (B, S), 0, cfg["vocab"], dtype=jnp.int32)
    mask = jnp.ones((B, S), jnp.int32).at[1, 6:].set(0)        # pad last 2 tokens of row 1
    token_type_ids = jnp.concatenate(
        [jnp.zeros((B, S // 2), jnp.int32), jnp.ones((B, S // 2), jnp.int32)], axis=1)

    forward = make_forward(cfg)
    out = forward(params, ids, mask, token_type_ids)
    out = jax.block_until_ready(out)

    assert out.shape == (B, cfg["num_classes"]), out.shape
    assert out.dtype == jnp.float32
    assert bool(jnp.all(jnp.isfinite(out)))
    print("KERNEL_OK")
</pallas_src>

<mosaic_0001>
module attributes {stable_mosaic.version = 11 : i64} {
  func.func @_bert_kernel(%arg0: memref<16x128xf32, #tpu.memory_space<vmem>>, %arg1: memref<16x16xf32, #tpu.memory_space<vmem>>, %arg2: memref<1x128xf32, #tpu.memory_space<vmem>>, %arg3: memref<1x128xf32, #tpu.memory_space<vmem>>, %arg4: memref<2x128x384xf32, #tpu.memory_space<vmem>>, %arg5: memref<2x1x384xf32, #tpu.memory_space<vmem>>, %arg6: memref<2x128x128xf32, #tpu.memory_space<vmem>>, %arg7: memref<2x1x128xf32, #tpu.memory_space<vmem>>, %arg8: memref<2x1x128xf32, #tpu.memory_space<vmem>>, %arg9: memref<2x1x128xf32, #tpu.memory_space<vmem>>, %arg10: memref<2x128x512xf32, #tpu.memory_space<vmem>>, %arg11: memref<2x1x512xf32, #tpu.memory_space<vmem>>, %arg12: memref<2x512x128xf32, #tpu.memory_space<vmem>>, %arg13: memref<2x1x128xf32, #tpu.memory_space<vmem>>, %arg14: memref<2x1x128xf32, #tpu.memory_space<vmem>>, %arg15: memref<2x1x128xf32, #tpu.memory_space<vmem>>, %arg16: memref<128x128xf32, #tpu.memory_space<vmem>>, %arg17: memref<1x128xf32, #tpu.memory_space<vmem>>, %arg18: memref<128x128xf32, #tpu.memory_space<vmem>>, %arg19: memref<1x128xf32, #tpu.memory_space<vmem>>, %arg20: memref<2x128xf32, #tpu.memory_space<vmem>>) attributes {dimension_semantics = [], scalar_prefetch = 0 : i64, scratch_operands = 0 : i64, tpu.core_type = #tpu.core_type<tc>} {
    %c0 = arith.constant 0 : index
    %c0_0 = arith.constant 0 : index
    %0 = vector.load %arg1[%c0, %c0_0] : memref<16x16xf32, #tpu.memory_space<vmem>>, vector<16x16xf32>
    %c0_1 = arith.constant 0 : index
    %c0_2 = arith.constant 0 : index
    %1 = vector.load %arg0[%c0_1, %c0_2] : memref<16x128xf32, #tpu.memory_space<vmem>>, vector<16x128xf32>
    %c0_3 = arith.constant 0 : index
    %c0_4 = arith.constant 0 : index
    %2 = vector.load %arg2[%c0_3, %c0_4] : memref<1x128xf32, #tpu.memory_space<vmem>>, vector<1x128xf32>
    %c0_5 = arith.constant 0 : index
    %c0_6 = arith.constant 0 : index
    %3 = vector.load %arg3[%c0_5, %c0_6] : memref<1x128xf32, #tpu.memory_space<vmem>>, vector<1x128xf32>
    %cst = arith.constant dense<0.000000e+00> : vector<16xf32>
    %4 = vector.multi_reduction <add>, %1, %cst [1] : vector<16x128xf32> to vector<16xf32>
    %5 = vector.shape_cast %4 : vector<16xf32> to vector<16x1xf32>
    %cst_7 = arith.constant 1.280000e+02 : f32
    %6 = vector.broadcast %cst_7 : f32 to vector<16x1xf32>
    %7 = arith.divf %5, %6 : vector<16x1xf32>
    %8 = vector.broadcast %7 : vector<16x1xf32> to vector<16x128xf32>
    %9 = arith.subf %1, %8 : vector<16x128xf32>
    %10 = arith.mulf %9, %9 : vector<16x128xf32>
    %cst_8 = arith.constant dense<0.000000e+00> : vector<16xf32>
    %11 = vector.multi_reduction <add>, %10, %cst_8 [1] : vector<16x128xf32> to vector<16xf32>
    %12 = vector.shape_cast %11 : vector<16xf32> to vector<16x1xf32>
    %cst_9 = arith.constant 1.280000e+02 : f32
    %13 = vector.broadcast %cst_9 : f32 to vector<16x1xf32>
    %14 = arith.divf %12, %13 : vector<16x1xf32>
    %15 = vector.broadcast %7 : vector<16x1xf32> to vector<16x128xf32>
    %16 = arith.subf %1, %15 : vector<16x128xf32>
    %cst_10 = arith.constant 9.99999996E-13 : f32
    %17 = vector.broadcast %cst_10 : f32 to vector<16x1xf32>
    %18 = arith.addf %14, %17 : vector<16x1xf32>
    %19 = math.rsqrt %18 : vector<16x1xf32>
    %20 = vector.broadcast %19 : vector<16x1xf32> to vector<16x128xf32>
    %21 = arith.mulf %16, %20 : vector<16x128xf32>
    %22 = vector.broadcast %2 : vector<1x128xf32> to vector<16x128xf32>
    %23 = arith.mulf %21, %22 : vector<16x128xf32>
    %24 = vector.broadcast %3 : vector<1x128xf32> to vector<16x128xf32>
    %25 = arith.addf %23, %24 : vector<16x128xf32>
    %c0_11 = arith.constant 0 : index
    %c0_12 = arith.constant 0 : index
    %c0_13 = arith.constant 0 : index
    %26 = vector.load %arg4[%c0_11, %c0_12, %c0_13] : memref<2x128x384xf32, #tpu.memory_space<vmem>>, vector<1x128x384xf32>
    %27 = vector.shape_cast %26 : vector<1x128x384xf32> to vector<128x384xf32>
    %cst_14 = arith.constant dense<0.000000e+00> : vector<16x384xf32>
    %28 = tpu.matmul %25, %27, %cst_14 {dimension_numbers = #tpu.dot_dimension_numbers<[1], [0], [0], [1], [0, 0, 1, 1], [], []>} : vector<16x128xf32>, vector<128x384xf32>, vector<16x384xf32> -> vector<16x384xf32>
    %c0_15 = arith.constant 0 : index
    %c0_16 = arith.constant 0 : index
    %c0_17 = arith.constant 0 : index
    %29 = vector.load %arg5[%c0_15, %c0_16, %c0_17] : memref<2x1x384xf32, #tpu.memory_space<vmem>>, vector<1x1x384xf32>
    %30 = vector.shape_cast %29 : vector<1x1x384xf32> to vector<1x384xf32>
    %31 = vector.broadcast %30 : vector<1x384xf32> to vector<16x384xf32>
    %32 = arith.addf %28, %31 : vector<16x384xf32>
    %33 = vector.extract_strided_slice %32 {offsets = [0, 0], sizes = [16, 32], strides = [1, 1]} : vector<16x384xf32> to vector<16x32xf32>
    %34 = vector.extract_strided_slice %32 {offsets = [0, 128], sizes = [16, 32], strides = [1, 1]} : vector<16x384xf32> to vector<16x32xf32>
    %35 = vector.extract_strided_slice %32 {offsets = [0, 256], sizes = [16, 32], strides = [1, 1]} : vector<16x384xf32> to vector<16x32xf32>
    %cst_18 = arith.constant dense<0.000000e+00> : vector<16x16xf32>
    %36 = tpu.matmul %33, %34, %cst_18 {dimension_numbers = #tpu.dot_dimension_numbers<[1], [1], [0], [0], [0, 0, 1, 0], [], []>} : vector<16x32xf32>, vector<16x32xf32>, vector<16x16xf32> -> vector<16x16xf32>
    %cst_19 = arith.constant 0.176776692 : f32
    %37 = vector.broadcast %cst_19 : f32 to vector<16x16xf32>
    %38 = arith.mulf %36, %37 : vector<16x16xf32>
    %39 = arith.addf %38, %0 : vector<16x16xf32>
    %cst_20 = arith.constant dense<0xFF800000> : vector<16xf32>
    %40 = vector.multi_reduction <maximumf>, %39, %cst_20 [1] : vector<16x16xf32> to vector<16xf32>
    %41 = vector.shape_cast %40 : vector<16xf32> to vector<16x1xf32>
    %42 = vector.broadcast %41 : vector<16x1xf32> to vector<16x16xf32>
    %43 = arith.subf %39, %42 : vector<16x16xf32>
    %44 = math.exp %43 : vector<16x16xf32>
    %cst_21 = arith.constant dense<0.000000e+00> : vector<16xf32>
    %45 = vector.multi_reduction <add>, %44, %cst_21 [1] : vector<16x16xf32> to vector<16xf32>
    %46 = vector.shape_cast %45 : vector<16xf32> to vector<16x1xf32>
    %47 = tpu.reciprocal %46 {approx = true} : vector<16x1xf32> -> vector<16x1xf32>
    %48 = vector.broadcast %47 : vector<16x1xf32> to vector<16x16xf32>
    %49 = arith.mulf %44, %48 : vector<16x16xf32>
    %cst_22 = arith.constant dense<0.000000e+00> : vector<16x32xf32>
    %50 = tpu.matmul %49, %35, %cst_22 {dimension_numbers = #tpu.dot_dimension_numbers<[1], [0], [0], [1], [0, 0, 1, 1], [], []>} : vector<16x16xf32>, vector<16x32xf32>, vector<16x32xf32> -> vector<16x32xf32>
    %51 = vector.extract_strided_slice %32 {offsets = [0, 32], sizes = [16, 32], strides = [1, 1]} : vector<16x384xf32> to vector<16x32xf32>
    %52 = vector.extract_strided_slice %32 {offsets = [0, 160], sizes = [16, 32], strides = [1, 1]} : vector<16x384xf32> to vector<16x32xf32>
    %53 = vector.extract_strided_slice %32 {offsets = [0, 288], sizes = [16, 32], strides = [1, 1]} : vector<16x384xf32> to vector<16x32xf32>
    %cst_23 = arith.constant dense<0.000000e+00> : vector<16x16xf32>
    %54 = tpu.matmul %51, %52, %cst_23 {dimension_numbers = #tpu.dot_dimension_numbers<[1], [1], [0], [0], [0, 0, 1, 0], [], []>} : vector<16x32xf32>, vector<16x32xf32>, vector<16x16xf32> -> vector<16x16xf32>
    %cst_24 = arith.constant 0.176776692 : f32
    %55 = vector.broadcast %cst_24 : f32 to vector<16x16xf32>
    %56 = arith.mulf %54, %55 : vector<16x16xf32>
    %57 = arith.addf %56, %0 : vector<16x16xf32>
    %cst_25 = arith.constant dense<0xFF800000> : vector<16xf32>
    %58 = vector.multi_reduction <maximumf>, %57, %cst_25 [1] : vector<16x16xf32> to vector<16xf32>
    %59 = vector.shape_cast %58 : vector<16xf32> to vector<16x1xf32>
    %60 = vector.broadcast %59 : vector<16x1xf32> to vector<16x16xf32>
    %61 = arith.subf %57, %60 : vector<16x16xf32>
    %62 = math.exp %61 : vector<16x16xf32>
    %cst_26 = arith.constant dense<0.000000e+00> : vector<16xf32>
    %63 = vector.multi_reduction <add>, %62, %cst_26 [1] : vector<16x16xf32> to vector<16xf32>
    %64 = vector.shape_cast %63 : vector<16xf32> to vector<16x1xf32>
    %65 = tpu.reciprocal %64 {approx = true} : vector<16x1xf32> -> vector<16x1xf32>
    %66 = vector.broadcast %65 : vector<16x1xf32> to vector<16x16xf32>
    %67 = arith.mulf %62, %66 : vector<16x16xf32>
    %cst_27 = arith.constant dense<0.000000e+00> : vector<16x32xf32>
    %68 = tpu.matmul %67, %53, %cst_27 {dimension_numbers = #tpu.dot_dimension_numbers<[1], [0], [0], [1], [0, 0, 1, 1], [], []>} : vector<16x16xf32>, vector<16x32xf32>, vector<16x32xf32> -> vector<16x32xf32>
    %69 = vector.extract_strided_slice %32 {offsets = [0, 64], sizes = [16, 32], strides = [1, 1]} : vector<16x384xf32> to vector<16x32xf32>
    %70 = vector.extract_strided_slice %32 {offsets = [0, 192], sizes = [16, 32], strides = [1, 1]} : vector<16x384xf32> to vector<16x32xf32>
    %71 = vector.extract_strided_slice %32 {offsets = [0, 320], sizes = [16, 32], strides = [1, 1]} : vector<16x384xf32> to vector<16x32xf32>
    %cst_28 = arith.constant dense<0.000000e+00> : vector<16x16xf32>
    %72 = tpu.matmul %69, %70, %cst_28 {dimension_numbers = #tpu.dot_dimension_numbers<[1], [1], [0], [0], [0, 0, 1, 0], [], []>} : vector<16x32xf32>, vector<16x32xf32>, vector<16x16xf32> -> vector<16x16xf32>
    %cst_29 = arith.constant 0.176776692 : f32
    %73 = vector.broadcast %cst_29 : f32 to vector<16x16xf32>
    %74 = arith.mulf %72, %73 : vector<16x16xf32>
    %75 = arith.addf %74, %0 : vector<16x16xf32>
    %cst_30 = arith.constant dense<0xFF800000> : vector<16xf32>
    %76 = vector.multi_reduction <maximumf>, %75, %cst_30 [1] : vector<16x16xf32> to vector<16xf32>
    %77 = vector.shape_cast %76 : vector<16xf32> to vector<16x1xf32>
    %78 = vector.broadcast %77 : vector<16x1xf32> to vector<16x16xf32>
    %79 = arith.subf %75, %78 : vector<16x16xf32>
    %80 = math.exp %79 : vector<16x16xf32>
    %cst_31 = arith.constant dense<0.000000e+00> : vector<16xf32>
    %81 = vector.multi_reduction <add>, %80, %cst_31 [1] : vector<16x16xf32> to vector<16xf32>
    %82 = vector.shape_cast %81 : vector<16xf32> to vector<16x1xf32>
    %83 = tpu.reciprocal %82 {approx = true} : vector<16x1xf32> -> vector<16x1xf32>
    %84 = vector.broadcast %83 : vector<16x1xf32> to vector<16x16xf32>
    %85 = arith.mulf %80, %84 : vector<16x16xf32>
    %cst_32 = arith.constant dense<0.000000e+00> : vector<16x32xf32>
    %86 = tpu.matmul %85, %71, %cst_32 {dimension_numbers = #tpu.dot_dimension_numbers<[1], [0], [0], [1], [0, 0, 1, 1], [], []>} : vector<16x16xf32>, vector<16x32xf32>, vector<16x32xf32> -> vector<16x32xf32>
    %87 = vector.extract_strided_slice %32 {offsets = [0, 96], sizes = [16, 32], strides = [1, 1]} : vector<16x384xf32> to vector<16x32xf32>
    %88 = vector.extract_strided_slice %32 {offsets = [0, 224], sizes = [16, 32], strides = [1, 1]} : vector<16x384xf32> to vector<16x32xf32>
    %89 = vector.extract_strided_slice %32 {offsets = [0, 352], sizes = [16, 32], strides = [1, 1]} : vector<16x384xf32> to vector<16x32xf32>
    %cst_33 = arith.constant dense<0.000000e+00> : vector<16x16xf32>
    %90 = tpu.matmul %87, %88, %cst_33 {dimension_numbers = #tpu.dot_dimension_numbers<[1], [1], [0], [0], [0, 0, 1, 0], [], []>} : vector<16x32xf32>, vector<16x32xf32>, vector<16x16xf32> -> vector<16x16xf32>
    %cst_34 = arith.constant 0.176776692 : f32
    %91 = vector.broadcast %cst_34 : f32 to vector<16x16xf32>
    %92 = arith.mulf %90, %91 : vector<16x16xf32>
    %93 = arith.addf %92, %0 : vector<16x16xf32>
    %cst_35 = arith.constant dense<0xFF800000> : vector<16xf32>
    %94 = vector.multi_reduction <maximumf>, %93, %cst_35 [1] : vector<16x16xf32> to vector<16xf32>
    %95 = vector.shape_cast %94 : vector<16xf32> to vector<16x1xf32>
    %96 = vector.broadcast %95 : vector<16x1xf32> to vector<16x16xf32>
    %97 = arith.subf %93, %96 : vector<16x16xf32>
    %98 = math.exp %97 : vector<16x16xf32>
    %cst_36 = arith.constant dense<0.000000e+00> : vector<16xf32>
    %99 = vector.multi_reduction <add>, %98, %cst_36 [1] : vector<16x16xf32> to vector<16xf32>
    %100 = vector.shape_cast %99 : vector<16xf32> to vector<16x1xf32>
    %101 = tpu.reciprocal %100 {approx = true} : vector<16x1xf32> -> vector<16x1xf32>
    %102 = vector.broadcast %101 : vector<16x1xf32> to vector<16x16xf32>
    %103 = arith.mulf %98, %102 : vector<16x16xf32>
    %cst_37 = arith.constant dense<0.000000e+00> : vector<16x32xf32>
    %104 = tpu.matmul %103, %89, %cst_37 {dimension_numbers = #tpu.dot_dimension_numbers<[1], [0], [0], [1], [0, 0, 1, 1], [], []>} : vector<16x16xf32>, vector<16x32xf32>, vector<16x32xf32> -> vector<16x32xf32>
    %105 = tpu.concatenate %50, %68, %86, %104 in 1 : vector<16x32xf32>, vector<16x32xf32>, vector<16x32xf32>, vector<16x32xf32> -> vector<16x128xf32>
    %c0_38 = arith.constant 0 : index
    %c0_39 = arith.constant 0 : index
    %c0_40 = arith.constant 0 : index
    %106 = vector.load %arg6[%c0_38, %c0_39, %c0_40] : memref<2x128x128xf32, #tpu.memory_space<vmem>>, vector<1x128x128xf32>
    %107 = vector.shape_cast %106 : vector<1x128x128xf32> to vector<128x128xf32>
    %cst_41 = arith.constant dense<0.000000e+00> : vector<16x128xf32>
    %108 = tpu.matmul %105, %107, %cst_41 {dimension_numbers = #tpu.dot_dimension_numbers<[1], [0], [0], [1], [0, 0, 1, 1], [], []>} : vector<16x128xf32>, vector<128x128xf32>, vector<16x128xf32> -> vector<16x128xf32>
    %c0_42 = arith.constant 0 : index
    %c0_43 = arith.constant 0 : index
    %c0_44 = arith.constant 0 : index
    %109 = vector.load %arg7[%c0_42, %c0_43, %c0_44] : memref<2x1x128xf32, #tpu.memory_space<vmem>>, vector<1x1x128xf32>
    %110 = vector.shape_cast %109 : vector<1x1x128xf32> to vector<1x128xf32>
    %111 = vector.broadcast %110 : vector<1x128xf32> to vector<16x128xf32>
    %112 = arith.addf %108, %111 : vector<16x128xf32>
    %113 = arith.addf %112, %25 : vector<16x128xf32>
    %c0_45 = arith.constant 0 : index
    %c0_46 = arith.constant 0 : index
    %c0_47 = arith.constant 0 : index
    %114 = vector.load %arg8[%c0_45, %c0_46, %c0_47] : memref<2x1x128xf32, #tpu.memory_space<vmem>>, vector<1x1x128xf32>
    %115 = vector.shape_cast %114 : vector<1x1x128xf32> to vector<1x128xf32>
    %c0_48 = arith.constant 0 : index
    %c0_49 = arith.constant 0 : index
    %c0_50 = arith.constant 0 : index
    %116 = vector.load %arg9[%c0_48, %c0_49, %c0_50] : memref<2x1x128xf32, #tpu.memory_space<vmem>>, vector<1x1x128xf32>
    %117 = vector.shape_cast %116 : vector<1x1x128xf32> to vector<1x128xf32>
    %cst_51 = arith.constant dense<0.000000e+00> : vector<16xf32>
    %118 = vector.multi_reduction <add>, %113, %cst_51 [1] : vector<16x128xf32> to vector<16xf32>
    %119 = vector.shape_cast %118 : vector<16xf32> to vector<16x1xf32>
    %cst_52 = arith.constant 1.280000e+02 : f32
    %120 = vector.broadcast %cst_52 : f32 to vector<16x1xf32>
    %121 = arith.divf %119, %120 : vector<16x1xf32>
    %122 = vector.broadcast %121 : vector<16x1xf32> to vector<16x128xf32>
    %123 = arith.subf %113, %122 : vector<16x128xf32>
    %124 = arith.mulf %123, %123 : vector<16x128xf32>
    %cst_53 = arith.constant dense<0.000000e+00> : vector<16xf32>
    %125 = vector.multi_reduction <add>, %124, %cst_53 [1] : vector<16x128xf32> to vector<16xf32>
    %126 = vector.shape_cast %125 : vector<16xf32> to vector<16x1xf32>
    %cst_54 = arith.constant 1.280000e+02 : f32
    %127 = vector.broadcast %cst_54 : f32 to vector<16x1xf32>
    %128 = arith.divf %126, %127 : vector<16x1xf32>
    %129 = vector.broadcast %121 : vector<16x1xf32> to vector<16x128xf32>
    %130 = arith.subf %113, %129 : vector<16x128xf32>
    %cst_55 = arith.constant 9.99999996E-13 : f32
    %131 = vector.broadcast %cst_55 : f32 to vector<16x1xf32>
    %132 = arith.addf %128, %131 : vector<16x1xf32>
    %133 = math.rsqrt %132 : vector<16x1xf32>
    %134 = vector.broadcast %133 : vector<16x1xf32> to vector<16x128xf32>
    %135 = arith.mulf %130, %134 : vector<16x128xf32>
    %136 = vector.broadcast %115 : vector<1x128xf32> to vector<16x128xf32>
    %137 = arith.mulf %135, %136 : vector<16x128xf32>
    %138 = vector.broadcast %117 : vector<1x128xf32> to vector<16x128xf32>
    %139 = arith.addf %137, %138 : vector<16x128xf32>
    %c0_56 = arith.constant 0 : index
    %c0_57 = arith.constant 0 : index
    %c0_58 = arith.constant 0 : index
    %140 = vector.load %arg10[%c0_56, %c0_57, %c0_58] : memref<2x128x512xf32, #tpu.memory_space<vmem>>, vector<1x128x512xf32>
    %141 = vector.shape_cast %140 : vector<1x128x512xf32> to vector<128x512xf32>
    %cst_59 = arith.constant dense<0.000000e+00> : vector<16x512xf32>
    %142 = tpu.matmul %139, %141, %cst_59 {dimension_numbers = #tpu.dot_dimension_numbers<[1], [0], [0], [1], [0, 0, 1, 1], [], []>} : vector<16x128xf32>, vector<128x512xf32>, vector<16x512xf32> -> vector<16x512xf32>
    %c0_60 = arith.constant 0 : index
    %c0_61 = arith.constant 0 : index
    %c0_62 = arith.constant 0 : index
    %143 = vector.load %arg11[%c0_60, %c0_61, %c0_62] : memref<2x1x512xf32, #tpu.memory_space<vmem>>, vector<1x1x512xf32>
    %144 = vector.shape_cast %143 : vector<1x1x512xf32> to vector<1x512xf32>
    %145 = vector.broadcast %144 : vector<1x512xf32> to vector<16x512xf32>
    %146 = arith.addf %142, %145 : vector<16x512xf32>
    %cst_63 = arith.constant 5.000000e-01 : f32
    %147 = vector.broadcast %cst_63 : f32 to vector<16x512xf32>
    %148 = arith.mulf %147, %146 : vector<16x512xf32>
    %cst_64 = arith.constant 4.471500e-02 : f32
    %149 = vector.broadcast %cst_64 : f32 to vector<16x512xf32>
    %150 = arith.mulf %149, %146 : vector<16x512xf32>
    %151 = arith.mulf %150, %146 : vector<16x512xf32>
    %152 = arith.mulf %151, %146 : vector<16x512xf32>
    %153 = arith.addf %146, %152 : vector<16x512xf32>
    %cst_65 = arith.constant 0.797884583 : f32
    %154 = vector.broadcast %cst_65 : f32 to vector<16x512xf32>
    %155 = arith.mulf %154, %153 : vector<16x512xf32>
    %156 = math.tanh %155 : vector<16x512xf32>
    %cst_66 = arith.constant 1.000000e+00 : f32
    %157 = vector.broadcast %cst_66 : f32 to vector<16x512xf32>
    %158 = arith.addf %157, %156 : vector<16x512xf32>
    %159 = arith.mulf %148, %158 : vector<16x512xf32>
    %c0_67 = arith.constant 0 : index
    %c0_68 = arith.constant 0 : index
    %c0_69 = arith.constant 0 : index
    %160 = vector.load %arg12[%c0_67, %c0_68, %c0_69] : memref<2x512x128xf32, #tpu.memory_space<vmem>>, vector<1x512x128xf32>
    %161 = vector.shape_cast %160 : vector<1x512x128xf32> to vector<512x128xf32>
    %cst_70 = arith.constant dense<0.000000e+00> : vector<16x128xf32>
    %162 = tpu.matmul %159, %161, %cst_70 {dimension_numbers = #tpu.dot_dimension_numbers<[1], [0], [0], [1], [0, 0, 1, 1], [], []>} : vector<16x512xf32>, vector<512x128xf32>, vector<16x128xf32> -> vector<16x128xf32>
    %c0_71 = arith.constant 0 : index
    %c0_72 = arith.constant 0 : index
    %c0_73 = arith.constant 0 : index
    %163 = vector.load %arg13[%c0_71, %c0_72, %c0_73] : memref<2x1x128xf32, #tpu.memory_space<vmem>>, vector<1x1x128xf32>
    %164 = vector.shape_cast %163 : vector<1x1x128xf32> to vector<1x128xf32>
    %165 = vector.broadcast %164 : vector<1x128xf32> to vector<16x128xf32>
    %166 = arith.addf %162, %165 : vector<16x128xf32>
    %167 = arith.addf %166, %139 : vector<16x128xf32>
    %c0_74 = arith.constant 0 : index
    %c0_75 = arith.constant 0 : index
    %c0_76 = arith.constant 0 : index
    %168 = vector.load %arg14[%c0_74, %c0_75, %c0_76] : memref<2x1x128xf32, #tpu.memory_space<vmem>>, vector<1x1x128xf32>
    %169 = vector.shape_cast %168 : vector<1x1x128xf32> to vector<1x128xf32>
    %c0_77 = arith.constant 0 : index
    %c0_78 = arith.constant 0 : index
    %c0_79 = arith.constant 0 : index
    %170 = vector.load %arg15[%c0_77, %c0_78, %c0_79] : memref<2x1x128xf32, #tpu.memory_space<vmem>>, vector<1x1x128xf32>
    %171 = vector.shape_cast %170 : vector<1x1x128xf32> to vector<1x128xf32>
    %cst_80 = arith.constant dense<0.000000e+00> : vector<16xf32>
    %172 = vector.multi_reduction <add>, %167, %cst_80 [1] : vector<16x128xf32> to vector<16xf32>
    %173 = vector.shape_cast %172 : vector<16xf32> to vector<16x1xf32>
    %cst_81 = arith.constant 1.280000e+02 : f32
    %174 = vector.broadcast %cst_81 : f32 to vector<16x1xf32>
    %175 = arith.divf %173, %174 : vector<16x1xf32>
    %176 = vector.broadcast %175 : vector<16x1xf32> to vector<16x128xf32>
    %177 = arith.subf %167, %176 : vector<16x128xf32>
    %178 = arith.mulf %177, %177 : vector<16x128xf32>
    %cst_82 = arith.constant dense<0.000000e+00> : vector<16xf32>
    %179 = vector.multi_reduction <add>, %178, %cst_82 [1] : vector<16x128xf32> to vector<16xf32>
    %180 = vector.shape_cast %179 : vector<16xf32> to vector<16x1xf32>
    %cst_83 = arith.constant 1.280000e+02 : f32
    %181 = vector.broadcast %cst_83 : f32 to vector<16x1xf32>
    %182 = arith.divf %180, %181 : vector<16x1xf32>
    %183 = vector.broadcast %175 : vector<16x1xf32> to vector<16x128xf32>
    %184 = arith.subf %167, %183 : vector<16x128xf32>
    %cst_84 = arith.constant 9.99999996E-13 : f32
    %185 = vector.broadcast %cst_84 : f32 to vector<16x1xf32>
    %186 = arith.addf %182, %185 : vector<16x1xf32>
    %187 = math.rsqrt %186 : vector<16x1xf32>
    %188 = vector.broadcast %187 : vector<16x1xf32> to vector<16x128xf32>
    %189 = arith.mulf %184, %188 : vector<16x128xf32>
    %190 = vector.broadcast %169 : vector<1x128xf32> to vector<16x128xf32>
    %191 = arith.mulf %189, %190 : vector<16x128xf32>
    %192 = vector.broadcast %171 : vector<1x128xf32> to vector<16x128xf32>
    %193 = arith.addf %191, %192 : vector<16x128xf32>
    %c1 = arith.constant 1 : index
    %c0_85 = arith.constant 0 : index
    %c0_86 = arith.constant 0 : index
    %194 = vector.load %arg4[%c1, %c0_85, %c0_86] : memref<2x128x384xf32, #tpu.memory_space<vmem>>, vector<1x128x384xf32>
    %195 = vector.shape_cast %194 : vector<1x128x384xf32> to vector<128x384xf32>
    %cst_87 = arith.constant dense<0.000000e+00> : vector<16x384xf32>
    %196 = tpu.matmul %193, %195, %cst_87 {dimension_numbers = #tpu.dot_dimension_numbers<[1], [0], [0], [1], [0, 0, 1, 1], [], []>} : vector<16x128xf32>, vector<128x384xf32>, vector<16x384xf32> -> vector<16x384xf32>
    %c1_88 = arith.constant 1 : index
    %c0_89 = arith.constant 0 : index
    %c0_90 = arith.constant 0 : index
    %197 = vector.load %arg5[%c1_88, %c0_89, %c0_90] : memref<2x1x384xf32, #tpu.memory_space<vmem>>, vector<1x1x384xf32>
    %198 = vector.shape_cast %197 : vector<1x1x384xf32> to vector<1x384xf32>
    %199 = vector.broadcast %198 : vector<1x384xf32> to vector<16x384xf32>
    %200 = arith.addf %196, %199 : vector<16x384xf32>
    %201 = vector.extract_strided_slice %200 {offsets = [0, 0], sizes = [16, 32], strides = [1, 1]} : vector<16x384xf32> to vector<16x32xf32>
    %202 = vector.extract_strided_slice %200 {offsets = [0, 128], sizes = [16, 32], strides = [1, 1]} : vector<16x384xf32> to vector<16x32xf32>
    %203 = vector.extract_strided_slice %200 {offsets = [0, 256], sizes = [16, 32], strides = [1, 1]} : vector<16x384xf32> to vector<16x32xf32>
    %cst_91 = arith.constant dense<0.000000e+00> : vector<16x16xf32>
    %204 = tpu.matmul %201, %202, %cst_91 {dimension_numbers = #tpu.dot_dimension_numbers<[1], [1], [0], [0], [0, 0, 1, 0], [], []>} : vector<16x32xf32>, vector<16x32xf32>, vector<16x16xf32> -> vector<16x16xf32>
    %cst_92 = arith.constant 0.176776692 : f32
    %205 = vector.broadcast %cst_92 : f32 to vector<16x16xf32>
    %206 = arith.mulf %204, %205 : vector<16x16xf32>
    %207 = arith.addf %206, %0 : vector<16x16xf32>
    %cst_93 = arith.constant dense<0xFF800000> : vector<16xf32>
    %208 = vector.multi_reduction <maximumf>, %207, %cst_93 [1] : vector<16x16xf32> to vector<16xf32>
    %209 = vector.shape_cast %208 : vector<16xf32> to vector<16x1xf32>
    %210 = vector.broadcast %209 : vector<16x1xf32> to vector<16x16xf32>
    %211 = arith.subf %207, %210 : vector<16x16xf32>
    %212 = math.exp %211 : vector<16x16xf32>
    %cst_94 = arith.constant dense<0.000000e+00> : vector<16xf32>
    %213 = vector.multi_reduction <add>, %212, %cst_94 [1] : vector<16x16xf32> to vector<16xf32>
    %214 = vector.shape_cast %213 : vector<16xf32> to vector<16x1xf32>
    %215 = tpu.reciprocal %214 {approx = true} : vector<16x1xf32> -> vector<16x1xf32>
    %216 = vector.broadcast %215 : vector<16x1xf32> to vector<16x16xf32>
    %217 = arith.mulf %212, %216 : vector<16x16xf32>
    %cst_95 = arith.constant dense<0.000000e+00> : vector<16x32xf32>
    %218 = tpu.matmul %217, %203, %cst_95 {dimension_numbers = #tpu.dot_dimension_numbers<[1], [0], [0], [1], [0, 0, 1, 1], [], []>} : vector<16x16xf32>, vector<16x32xf32>, vector<16x32xf32> -> vector<16x32xf32>
    %219 = vector.extract_strided_slice %200 {offsets = [0, 32], sizes = [16, 32], strides = [1, 1]} : vector<16x384xf32> to vector<16x32xf32>
    %220 = vector.extract_strided_slice %200 {offsets = [0, 160], sizes = [16, 32], strides = [1, 1]} : vector<16x384xf32> to vector<16x32xf32>
    %221 = vector.extract_strided_slice %200 {offsets = [0, 288], sizes = [16, 32], strides = [1, 1]} : vector<16x384xf32> to vector<16x32xf32>
    %cst_96 = arith.constant dense<0.000000e+00> : vector<16x16xf32>
    %222 = tpu.matmul %219, %220, %cst_96 {dimension_numbers = #tpu.dot_dimension_numbers<[1], [1], [0], [0], [0, 0, 1, 0], [], []>} : vector<16x32xf32>, vector<16x32xf32>, vector<16x16xf32> -> vector<16x16xf32>
    %cst_97 = arith.constant 0.176776692 : f32
    %223 = vector.broadcast %cst_97 : f32 to vector<16x16xf32>
    %224 = arith.mulf %222, %223 : vector<16x16xf32>
    %225 = arith.addf %224, %0 : vector<16x16xf32>
    %cst_98 = arith.constant dense<0xFF800000> : vector<16xf32>
    %226 = vector.multi_reduction <maximumf>, %225, %cst_98 [1] : vector<16x16xf32> to vector<16xf32>
    %227 = vector.shape_cast %226 : vector<16xf32> to vector<16x1xf32>
    %228 = vector.broadcast %227 : vector<16x1xf32> to vector<16x16xf32>
    %229 = arith.subf %225, %228 : vector<16x16xf32>
    %230 = math.exp %229 : vector<16x16xf32>
    %cst_99 = arith.constant dense<0.000000e+00> : vector<16xf32>
    %231 = vector.multi_reduction <add>, %230, %cst_99 [1] : vector<16x16xf32> to vector<16xf32>
    %232 = vector.shape_cast %231 : vector<16xf32> to vector<16x1xf32>
    %233 = tpu.reciprocal %232 {approx = true} : vector<16x1xf32> -> vector<16x1xf32>
    %234 = vector.broadcast %233 : vector<16x1xf32> to vector<16x16xf32>
    %235 = arith.mulf %230, %234 : vector<16x16xf32>
    %cst_100 = arith.constant dense<0.000000e+00> : vector<16x32xf32>
    %236 = tpu.matmul %235, %221, %cst_100 {dimension_numbers = #tpu.dot_dimension_numbers<[1], [0], [0], [1], [0, 0, 1, 1], [], []>} : vector<16x16xf32>, vector<16x32xf32>, vector<16x32xf32> -> vector<16x32xf32>
    %237 = vector.extract_strided_slice %200 {offsets = [0, 64], sizes = [16, 32], strides = [1, 1]} : vector<16x384xf32> to vector<16x32xf32>
    %238 = vector.extract_strided_slice %200 {offsets = [0, 192], sizes = [16, 32], strides = [1, 1]} : vector<16x384xf32> to vector<16x32xf32>
    %239 = vector.extract_strided_slice %200 {offsets = [0, 320], sizes = [16, 32], strides = [1, 1]} : vector<16x384xf32> to vector<16x32xf32>
    %cst_101 = arith.constant dense<0.000000e+00> : vector<16x16xf32>
    %240 = tpu.matmul %237, %238, %cst_101 {dimension_numbers = #tpu.dot_dimension_numbers<[1], [1], [0], [0], [0, 0, 1, 0], [], []>} : vector<16x32xf32>, vector<16x32xf32>, vector<16x16xf32> -> vector<16x16xf32>
    %cst_102 = arith.constant 0.176776692 : f32
    %241 = vector.broadcast %cst_102 : f32 to vector<16x16xf32>
    %242 = arith.mulf %240, %241 : vector<16x16xf32>
    %243 = arith.addf %242, %0 : vector<16x16xf32>
    %cst_103 = arith.constant dense<0xFF800000> : vector<16xf32>
    %244 = vector.multi_reduction <maximumf>, %243, %cst_103 [1] : vector<16x16xf32> to vector<16xf32>
    %245 = vector.shape_cast %244 : vector<16xf32> to vector<16x1xf32>
    %246 = vector.broadcast %245 : vector<16x1xf32> to vector<16x16xf32>
    %247 = arith.subf %243, %246 : vector<16x16xf32>
    %248 = math.exp %247 : vector<16x16xf32>
    %cst_104 = arith.constant dense<0.000000e+00> : vector<16xf32>
    %249 = vector.multi_reduction <add>, %248, %cst_104 [1] : vector<16x16xf32> to vector<16xf32>
    %250 = vector.shape_cast %249 : vector<16xf32> to vector<16x1xf32>
    %251 = tpu.reciprocal %250 {approx = true} : vector<16x1xf32> -> vector<16x1xf32>
    %252 = vector.broadcast %251 : vector<16x1xf32> to vector<16x16xf32>
    %253 = arith.mulf %248, %252 : vector<16x16xf32>
    %cst_105 = arith.constant dense<0.000000e+00> : vector<16x32xf32>
    %254 = tpu.matmul %253, %239, %cst_105 {dimension_numbers = #tpu.dot_dimension_numbers<[1], [0], [0], [1], [0, 0, 1, 1], [], []>} : vector<16x16xf32>, vector<16x32xf32>, vector<16x32xf32> -> vector<16x32xf32>
    %255 = vector.extract_strided_slice %200 {offsets = [0, 96], sizes = [16, 32], strides = [1, 1]} : vector<16x384xf32> to vector<16x32xf32>
    %256 = vector.extract_strided_slice %200 {offsets = [0, 224], sizes = [16, 32], strides = [1, 1]} : vector<16x384xf32> to vector<16x32xf32>
    %257 = vector.extract_strided_slice %200 {offsets = [0, 352], sizes = [16, 32], strides = [1, 1]} : vector<16x384xf32> to vector<16x32xf32>
    %cst_106 = arith.constant dense<0.000000e+00> : vector<16x16xf32>
    %258 = tpu.matmul %255, %256, %cst_106 {dimension_numbers = #tpu.dot_dimension_numbers<[1], [1], [0], [0], [0, 0, 1, 0], [], []>} : vector<16x32xf32>, vector<16x32xf32>, vector<16x16xf32> -> vector<16x16xf32>
    %cst_107 = arith.constant 0.176776692 : f32
    %259 = vector.broadcast %cst_107 : f32 to vector<16x16xf32>
    %260 = arith.mulf %258, %259 : vector<16x16xf32>
    %261 = arith.addf %260, %0 : vector<16x16xf32>
    %cst_108 = arith.constant dense<0xFF800000> : vector<16xf32>
    %262 = vector.multi_reduction <maximumf>, %261, %cst_108 [1] : vector<16x16xf32> to vector<16xf32>
    %263 = vector.shape_cast %262 : vector<16xf32> to vector<16x1xf32>
    %264 = vector.broadcast %263 : vector<16x1xf32> to vector<16x16xf32>
    %265 = arith.subf %261, %264 : vector<16x16xf32>
    %266 = math.exp %265 : vector<16x16xf32>
    %cst_109 = arith.constant dense<0.000000e+00> : vector<16xf32>
    %267 = vector.multi_reduction <add>, %266, %cst_109 [1] : vector<16x16xf32> to vector<16xf32>
    %268 = vector.shape_cast %267 : vector<16xf32> to vector<16x1xf32>
    %269 = tpu.reciprocal %268 {approx = true} : vector<16x1xf32> -> vector<16x1xf32>
    %270 = vector.broadcast %269 : vector<16x1xf32> to vector<16x16xf32>
    %271 = arith.mulf %266, %270 : vector<16x16xf32>
    %cst_110 = arith.constant dense<0.000000e+00> : vector<16x32xf32>
    %272 = tpu.matmul %271, %257, %cst_110 {dimension_numbers = #tpu.dot_dimension_numbers<[1], [0], [0], [1], [0, 0, 1, 1], [], []>} : vector<16x16xf32>, vector<16x32xf32>, vector<16x32xf32> -> vector<16x32xf32>
    %273 = tpu.concatenate %218, %236, %254, %272 in 1 : vector<16x32xf32>, vector<16x32xf32>, vector<16x32xf32>, vector<16x32xf32> -> vector<16x128xf32>
    %c1_111 = arith.constant 1 : index
    %c0_112 = arith.constant 0 : index
    %c0_113 = arith.constant 0 : index
    %274 = vector.load %arg6[%c1_111, %c0_112, %c0_113] : memref<2x128x128xf32, #tpu.memory_space<vmem>>, vector<1x128x128xf32>
    %275 = vector.shape_cast %274 : vector<1x128x128xf32> to vector<128x128xf32>
    %cst_114 = arith.constant dense<0.000000e+00> : vector<16x128xf32>
    %276 = tpu.matmul %273, %275, %cst_114 {dimension_numbers = #tpu.dot_dimension_numbers<[1], [0], [0], [1], [0, 0, 1, 1], [], []>} : vector<16x128xf32>, vector<128x128xf32>, vector<16x128xf32> -> vector<16x128xf32>
    %c1_115 = arith.constant 1 : index
    %c0_116 = arith.constant 0 : index
    %c0_117 = arith.constant 0 : index
    %277 = vector.load %arg7[%c1_115, %c0_116, %c0_117] : memref<2x1x128xf32, #tpu.memory_space<vmem>>, vector<1x1x128xf32>
    %278 = vector.shape_cast %277 : vector<1x1x128xf32> to vector<1x128xf32>
    %279 = vector.broadcast %278 : vector<1x128xf32> to vector<16x128xf32>
    %280 = arith.addf %276, %279 : vector<16x128xf32>
    %281 = arith.addf %280, %193 : vector<16x128xf32>
    %c1_118 = arith.constant 1 : index
    %c0_119 = arith.constant 0 : index
    %c0_120 = arith.constant 0 : index
    %282 = vector.load %arg8[%c1_118, %c0_119, %c0_120] : memref<2x1x128xf32, #tpu.memory_space<vmem>>, vector<1x1x128xf32>
    %283 = vector.shape_cast %282 : vector<1x1x128xf32> to vector<1x128xf32>
    %c1_121 = arith.constant 1 : index
    %c0_122 = arith.constant 0 : index
    %c0_123 = arith.constant 0 : index
    %284 = vector.load %arg9[%c1_121, %c0_122, %c0_123] : memref<2x1x128xf32, #tpu.memory_space<vmem>>, vector<1x1x128xf32>
    %285 = vector.shape_cast %284 : vector<1x1x128xf32> to vector<1x128xf32>
    %cst_124 = arith.constant dense<0.000000e+00> : vector<16xf32>
    %286 = vector.multi_reduction <add>, %281, %cst_124 [1] : vector<16x128xf32> to vector<16xf32>
    %287 = vector.shape_cast %286 : vector<16xf32> to vector<16x1xf32>
    %cst_125 = arith.constant 1.280000e+02 : f32
    %288 = vector.broadcast %cst_125 : f32 to vector<16x1xf32>
    %289 = arith.divf %287, %288 : vector<16x1xf32>
    %290 = vector.broadcast %289 : vector<16x1xf32> to vector<16x128xf32>
    %291 = arith.subf %281, %290 : vector<16x128xf32>
    %292 = arith.mulf %291, %291 : vector<16x128xf32>
    %cst_126 = arith.constant dense<0.000000e+00> : vector<16xf32>
    %293 = vector.multi_reduction <add>, %292, %cst_126 [1] : vector<16x128xf32> to vector<16xf32>
    %294 = vector.shape_cast %293 : vector<16xf32> to vector<16x1xf32>
    %cst_127 = arith.constant 1.280000e+02 : f32
    %295 = vector.broadcast %cst_127 : f32 to vector<16x1xf32>
    %296 = arith.divf %294, %295 : vector<16x1xf32>
    %297 = vector.broadcast %289 : vector<16x1xf32> to vector<16x128xf32>
    %298 = arith.subf %281, %297 : vector<16x128xf32>
    %cst_128 = arith.constant 9.99999996E-13 : f32
    %299 = vector.broadcast %cst_128 : f32 to vector<16x1xf32>
    %300 = arith.addf %296, %299 : vector<16x1xf32>
    %301 = math.rsqrt %300 : vector<16x1xf32>
    %302 = vector.broadcast %301 : vector<16x1xf32> to vector<16x128xf32>
    %303 = arith.mulf %298, %302 : vector<16x128xf32>
    %304 = vector.broadcast %283 : vector<1x128xf32> to vector<16x128xf32>
    %305 = arith.mulf %303, %304 : vector<16x128xf32>
    %306 = vector.broadcast %285 : vector<1x128xf32> to vector<16x128xf32>
    %307 = arith.addf %305, %306 : vector<16x128xf32>
    %c1_129 = arith.constant 1 : index
    %c0_130 = arith.constant 0 : index
    %c0_131 = arith.constant 0 : index
    %308 = vector.load %arg10[%c1_129, %c0_130, %c0_131] : memref<2x128x512xf32, #tpu.memory_space<vmem>>, vector<1x128x512xf32>
    %309 = vector.shape_cast %308 : vector<1x128x512xf32> to vector<128x512xf32>
    %cst_132 = arith.constant dense<0.000000e+00> : vector<16x512xf32>
    %310 = tpu.matmul %307, %309, %cst_132 {dimension_numbers = #tpu.dot_dimension_numbers<[1], [0], [0], [1], [0, 0, 1, 1], [], []>} : vector<16x128xf32>, vector<128x512xf32>, vector<16x512xf32> -> vector<16x512xf32>
    %c1_133 = arith.constant 1 : index
    %c0_134 = arith.constant 0 : index
    %c0_135 = arith.constant 0 : index
    %311 = vector.load %arg11[%c1_133, %c0_134, %c0_135] : memref<2x1x512xf32, #tpu.memory_space<vmem>>, vector<1x1x512xf32>
    %312 = vector.shape_cast %311 : vector<1x1x512xf32> to vector<1x512xf32>
    %313 = vector.broadcast %312 : vector<1x512xf32> to vector<16x512xf32>
    %314 = arith.addf %310, %313 : vector<16x512xf32>
    %cst_136 = arith.constant 5.000000e-01 : f32
    %315 = vector.broadcast %cst_136 : f32 to vector<16x512xf32>
    %316 = arith.mulf %315, %314 : vector<16x512xf32>
    %cst_137 = arith.constant 4.471500e-02 : f32
    %317 = vector.broadcast %cst_137 : f32 to vector<16x512xf32>
    %318 = arith.mulf %317, %314 : vector<16x512xf32>
    %319 = arith.mulf %318, %314 : vector<16x512xf32>
    %320 = arith.mulf %319, %314 : vector<16x512xf32>
    %321 = arith.addf %314, %320 : vector<16x512xf32>
    %cst_138 = arith.constant 0.797884583 : f32
    %322 = vector.broadcast %cst_138 : f32 to vector<16x512xf32>
    %323 = arith.mulf %322, %321 : vector<16x512xf32>
    %324 = math.tanh %323 : vector<16x512xf32>
    %cst_139 = arith.constant 1.000000e+00 : f32
    %325 = vector.broadcast %cst_139 : f32 to vector<16x512xf32>
    %326 = arith.addf %325, %324 : vector<16x512xf32>
    %327 = arith.mulf %316, %326 : vector<16x512xf32>
    %c1_140 = arith.constant 1 : index
    %c0_141 = arith.constant 0 : index
    %c0_142 = arith.constant 0 : index
    %328 = vector.load %arg12[%c1_140, %c0_141, %c0_142] : memref<2x512x128xf32, #tpu.memory_space<vmem>>, vector<1x512x128xf32>
    %329 = vector.shape_cast %328 : vector<1x512x128xf32> to vector<512x128xf32>
    %cst_143 = arith.constant dense<0.000000e+00> : vector<16x128xf32>
    %330 = tpu.matmul %327, %329, %cst_143 {dimension_numbers = #tpu.dot_dimension_numbers<[1], [0], [0], [1], [0, 0, 1, 1], [], []>} : vector<16x512xf32>, vector<512x128xf32>, vector<16x128xf32> -> vector<16x128xf32>
    %c1_144 = arith.constant 1 : index
    %c0_145 = arith.constant 0 : index
    %c0_146 = arith.constant 0 : index
    %331 = vector.load %arg13[%c1_144, %c0_145, %c0_146] : memref<2x1x128xf32, #tpu.memory_space<vmem>>, vector<1x1x128xf32>
    %332 = vector.shape_cast %331 : vector<1x1x128xf32> to vector<1x128xf32>
    %333 = vector.broadcast %332 : vector<1x128xf32> to vector<16x128xf32>
    %334 = arith.addf %330, %333 : vector<16x128xf32>
    %335 = arith.addf %334, %307 : vector<16x128xf32>
    %c1_147 = arith.constant 1 : index
    %c0_148 = arith.constant 0 : index
    %c0_149 = arith.constant 0 : index
    %336 = vector.load %arg14[%c1_147, %c0_148, %c0_149] : memref<2x1x128xf32, #tpu.memory_space<vmem>>, vector<1x1x128xf32>
    %337 = vector.shape_cast %336 : vector<1x1x128xf32> to vector<1x128xf32>
    %c1_150 = arith.constant 1 : index
    %c0_151 = arith.constant 0 : index
    %c0_152 = arith.constant 0 : index
    %338 = vector.load %arg15[%c1_150, %c0_151, %c0_152] : memref<2x1x128xf32, #tpu.memory_space<vmem>>, vector<1x1x128xf32>
    %339 = vector.shape_cast %338 : vector<1x1x128xf32> to vector<1x128xf32>
    %cst_153 = arith.constant dense<0.000000e+00> : vector<16xf32>
    %340 = vector.multi_reduction <add>, %335, %cst_153 [1] : vector<16x128xf32> to vector<16xf32>
    %341 = vector.shape_cast %340 : vector<16xf32> to vector<16x1xf32>
    %cst_154 = arith.constant 1.280000e+02 : f32
    %342 = vector.broadcast %cst_154 : f32 to vector<16x1xf32>
    %343 = arith.divf %341, %342 : vector<16x1xf32>
    %344 = vector.broadcast %343 : vector<16x1xf32> to vector<16x128xf32>
    %345 = arith.subf %335, %344 : vector<16x128xf32>
    %346 = arith.mulf %345, %345 : vector<16x128xf32>
    %cst_155 = arith.constant dense<0.000000e+00> : vector<16xf32>
    %347 = vector.multi_reduction <add>, %346, %cst_155 [1] : vector<16x128xf32> to vector<16xf32>
    %348 = vector.shape_cast %347 : vector<16xf32> to vector<16x1xf32>
    %cst_156 = arith.constant 1.280000e+02 : f32
    %349 = vector.broadcast %cst_156 : f32 to vector<16x1xf32>
    %350 = arith.divf %348, %349 : vector<16x1xf32>
    %351 = vector.broadcast %343 : vector<16x1xf32> to vector<16x128xf32>
    %352 = arith.subf %335, %351 : vector<16x128xf32>
    %cst_157 = arith.constant 9.99999996E-13 : f32
    %353 = vector.broadcast %cst_157 : f32 to vector<16x1xf32>
    %354 = arith.addf %350, %353 : vector<16x1xf32>
    %355 = math.rsqrt %354 : vector<16x1xf32>
    %356 = vector.broadcast %355 : vector<16x1xf32> to vector<16x128xf32>
    %357 = arith.mulf %352, %356 : vector<16x128xf32>
    %358 = vector.broadcast %337 : vector<1x128xf32> to vector<16x128xf32>
    %359 = arith.mulf %357, %358 : vector<16x128xf32>
    %360 = vector.broadcast %339 : vector<1x128xf32> to vector<16x128xf32>
    %361 = arith.addf %359, %360 : vector<16x128xf32>
    %362 = vector.extract_strided_slice %361 {offsets = [0, 0], sizes = [1, 128], strides = [1, 1]} : vector<16x128xf32> to vector<1x128xf32>
    %363 = vector.extract_strided_slice %361 {offsets = [8, 0], sizes = [1, 128], strides = [1, 1]} : vector<16x128xf32> to vector<1x128xf32>
    %364 = tpu.concatenate %362, %363 in 0 : vector<1x128xf32>, vector<1x128xf32> -> vector<2x128xf32>
    %c0_158 = arith.constant 0 : index
    %c0_159 = arith.constant 0 : index
    %365 = vector.load %arg16[%c0_158, %c0_159] : memref<128x128xf32, #tpu.memory_space<vmem>>, vector<128x128xf32>
    %cst_160 = arith.constant dense<0.000000e+00> : vector<2x128xf32>
    %366 = tpu.matmul %364, %365, %cst_160 {dimension_numbers = #tpu.dot_dimension_numbers<[1], [0], [0], [1], [0, 0, 1, 1], [], []>} : vector<2x128xf32>, vector<128x128xf32>, vector<2x128xf32> -> vector<2x128xf32>
    %c0_161 = arith.constant 0 : index
    %c0_162 = arith.constant 0 : index
    %367 = vector.load %arg17[%c0_161, %c0_162] : memref<1x128xf32, #tpu.memory_space<vmem>>, vector<1x128xf32>
    %368 = vector.broadcast %367 : vector<1x128xf32> to vector<2x128xf32>
    %369 = arith.addf %366, %368 : vector<2x128xf32>
    %370 = math.tanh %369 : vector<2x128xf32>
    %c0_163 = arith.constant 0 : index
    %c0_164 = arith.constant 0 : index
    %371 = vector.load %arg18[%c0_163, %c0_164] : memref<128x128xf32, #tpu.memory_space<vmem>>, vector<128x128xf32>
    %cst_165 = arith.constant dense<0.000000e+00> : vector<2x128xf32>
    %372 = tpu.matmul %370, %371, %cst_165 {dimension_numbers = #tpu.dot_dimension_numbers<[1], [0], [0], [1], [0, 0, 1, 1], [], []>} : vector<2x128xf32>, vector<128x128xf32>, vector<2x128xf32> -> vector<2x128xf32>
    %c0_166 = arith.constant 0 : index
    %c0_167 = arith.constant 0 : index
    %373 = vector.load %arg19[%c0_166, %c0_167] : memref<1x128xf32, #tpu.memory_space<vmem>>, vector<1x128xf32>
    %374 = vector.broadcast %373 : vector<1x128xf32> to vector<2x128xf32>
    %375 = arith.addf %372, %374 : vector<2x128xf32>
    %c0_168 = arith.constant 0 : index
    %c0_169 = arith.constant 0 : index
    %376 = vector.load %arg20[%c0_168, %c0_169] : memref<2x128xf32, #tpu.memory_space<vmem>>, vector<2x128xf32>
    tpu.vector_store %arg20[%c0_168, %c0_169], %375 {strides = array<i32>} : memref<2x128xf32, #tpu.memory_space<vmem>>, vector<2x128xf32>,
    return
  }
}

</mosaic_0001>

<llo_original>
// kernel: forward.1
$region0: #{forward.1}
  #allocation0 [shape = 'u32[]', space=smem, size = 0x4, offset = 0x4, fixed_abs, tag = 'smem constant byte address 0x4 - core index']
  #allocation1 [shape = 'u32[144,128]{1,0:T(1,128)}', space=vmem, size = 0x12000, scoped, tag = 'internal scratch']
  %s0 = inlined_call_operand.vmem [shape: f32[16,128], index: 0, kind: input, shape index: {}]
  %s1 = inlined_call_operand.vmem [shape: f32[16,16], index: 1, kind: input, shape index: {}]
  %s2 = inlined_call_operand.vmem [shape: f32[1,128], index: 2, kind: input, shape index: {}]
  %s3 = inlined_call_operand.vmem [shape: f32[1,128], index: 3, kind: input, shape index: {}]
  %s4 = inlined_call_operand.hbm [shape: f32[2,128,384], index: 4, kind: input, shape index: {}]
  %s5 = inlined_call_operand.vmem [shape: f32[2,1,384], index: 5, kind: input, shape index: {}]
  %s6 = inlined_call_operand.vmem [shape: f32[2,128,128], index: 6, kind: input, shape index: {}]
  %s7 = inlined_call_operand.vmem [shape: f32[2,1,128], index: 7, kind: input, shape index: {}]
  %s8 = inlined_call_operand.vmem [shape: f32[2,1,128], index: 8, kind: input, shape index: {}]
  %s9 = inlined_call_operand.vmem [shape: f32[2,1,128], index: 9, kind: input, shape index: {}]
  %s10 = inlined_call_operand.hbm [shape: f32[2,128,512], index: 10, kind: input, shape index: {}]
  %s11 = inlined_call_operand.vmem [shape: f32[2,1,512], index: 11, kind: input, shape index: {}]
  %s12 = inlined_call_operand.hbm [shape: f32[2,512,128], index: 12, kind: input, shape index: {}]
  %s13 = inlined_call_operand.vmem [shape: f32[2,1,128], index: 13, kind: input, shape index: {}]
  %s14 = inlined_call_operand.vmem [shape: f32[2,1,128], index: 14, kind: input, shape index: {}]
  %s15 = inlined_call_operand.vmem [shape: f32[2,1,128], index: 15, kind: input, shape index: {}]
  %s16 = inlined_call_operand.vmem [shape: f32[128,128], index: 16, kind: input, shape index: {}]
  %s17 = inlined_call_operand.vmem [shape: f32[1,128], index: 17, kind: input, shape index: {}]
  %s18 = inlined_call_operand.hbm [shape: f32[128,128], index: 18, kind: input, shape index: {}]
  %s19 = inlined_call_operand.vmem [shape: f32[1,128], index: 19, kind: input, shape index: {}]
  %s20 = inlined_call_operand.hbm [shape: f32[2,128], index: 20, kind: output, shape index: {}]
  %s21 = sld [smem:[#allocation0]]
  $region106: #{forward.1} parent=0
    _
  %s23 = ssub.s32 1, %s21
  %s24 = scalar_select 0, %s23, %s21
  $region1: #{forward.1} parent=0
    #allocation2 [shape = 'u8[393216]{0}', space=vmem, size = 0x60000, scoped, tag = 'input window, operand 4, single buffered']
    #allocation3 [shape = 's32[1]{0}', space=sflag, size = 0x4, scoped, tag = 'scoped memory for forward.1']
    #allocation4 [shape = 's32[1]{0}', space=sflag, size = 0x4, scoped, tag = 'scoped memory for forward.1']
    #allocation5 [shape = 'u8[524288]{0}', space=vmem, size = 0x80000, scoped, tag = 'input window, operand 10, single buffered']
    #allocation6 [shape = 's32[1]{0}', space=sflag, size = 0x4, scoped, tag = 'scoped memory for forward.1']
    #allocation7 [shape = 'u8[524288]{0}', space=vmem, size = 0x80000, scoped, tag = 'input window, operand 12, single buffered']
    #allocation8 [shape = 'u8[65536]{0}', space=vmem, size = 0x10000, scoped, tag = 'input window, operand 18, single buffered']
    #allocation9 [shape = 's32[1]{0}', space=sflag, size = 0x4, scoped, tag = 'scoped memory for forward.1']
    #allocation10 [shape = 'u8[1024]{0}', space=vmem, size = 0x400, scoped, tag = 'output window, operand 0, single buffered']
    %25 = vsyncpa [#allocation3], 0
    %26 = vsyncpa [#allocation6], 0
    %27 = vsyncpa [#allocation9], 0
    %28 = vsyncpa [#allocation4], 0
    // Predicated region
    $region2: #{forward.1} parent=1 // pred_check
      _
    $region3: #{forward.1} parent=1 // pred_check_branch
      %30 = sbr.rel (0) target = $region5
    $region4: #{forward.1} parent=1 // pred_region
      _
    $region5: #{forward.1} parent=1 // pred_fallthru
      _
    // Predicated region
    $region6: #{forward.1} parent=1 // pred_check
      _
    $region7: #{forward.1} parent=1 // pred_check_branch
      %32 = sbr.rel (0) target = $region9
    $region8: #{forward.1} parent=1 // pred_region
      _
    $region9: #{forward.1} parent=1 // pred_fallthru
      _
    // Predicated region
    $region10: #{forward.1} parent=1 // pred_check
      _
    $region11: #{forward.1} parent=1 // pred_check_branch
      %34 = sbr.rel (0) target = $region13
    $region12: #{forward.1} parent=1 // pred_region
      _
    $region13: #{forward.1} parent=1 // pred_fallthru
      _
    // Predicated region
    $region14: #{forward.1} parent=1 // pred_check
      _
    $region15: #{forward.1} parent=1 // pred_check_branch
      %36 = sbr.rel (0) target = $region17
    $region16: #{forward.1} parent=1 // pred_region
      _
    $region17: #{forward.1} parent=1 // pred_fallthru
      _
    // Predicated region
    $region18: #{forward.1} parent=1 // pred_check
      _
    $region19: #{forward.1} parent=1 // pred_check_branch
      %38 = sbr.rel (0) target = $region21
    $region20: #{forward.1} parent=1 // pred_region
      %s40 = ssub.s32 12288, 12288
      %41 = vsyncadd [#allocation3], %s40
      %s42 = sshll.u32 [#allocation2], 4
      %s43 = int_to_ptr.vmem [resolvable:$true] %s42
      %48 = dma.hbm_to_vmem [thread:$0]  %s4, 12288, %s43, [#allocation3], 384, 384, 24
    $region21: #{forward.1} parent=1 // pred_fallthru
      _
    // Predicated region
    $region22: #{forward.1} parent=1 // pred_check
      _
    $region23: #{forward.1} parent=1 // pred_check_branch
      %50 = sbr.rel (0) target = $region25
    $region24: #{forward.1} parent=1 // pred_region
      _
    $region25: #{forward.1} parent=1 // pred_fallthru
      _
    // Predicated region
    $region26: #{forward.1} parent=1 // pred_check
      _
    $region27: #{forward.1} parent=1 // pred_check_branch
      %52 = sbr.rel (0) target = $region29
    $region28: #{forward.1} parent=1 // pred_region
      _
    $region29: #{forward.1} parent=1 // pred_fallthru
      _
    // Predicated region
    $region30: #{forward.1} parent=1 // pred_check
      _
    $region31: #{forward.1} parent=1 // pred_check_branch
      %54 = sbr.rel (0) target = $region33
    $region32: #{forward.1} parent=1 // pred_region
      _
    $region33: #{forward.1} parent=1 // pred_fallthru
      _
    // Predicated region
    $region34: #{forward.1} parent=1 // pred_check
      _
    $region35: #{forward.1} parent=1 // pred_check_branch
      %56 = sbr.rel (0) target = $region37
    $region36: #{forward.1} parent=1 // pred_region
      _
    $region37: #{forward.1} parent=1 // pred_fallthru
      _
    // Predicated region
    $region38: #{forward.1} parent=1 // pred_check
      _
    $region39: #{forward.1} parent=1 // pred_check_branch
      %58 = sbr.rel (0) target = $region41
    $region40: #{forward.1} parent=1 // pred_region
      _
    $region41: #{forward.1} parent=1 // pred_fallthru
      _
    // Predicated region
    $region42: #{forward.1} parent=1 // pred_check
      _
    $region43: #{forward.1} parent=1 // pred_check_branch
      %60 = sbr.rel (0) target = $region45
    $region44: #{forward.1} parent=1 // pred_region
      %s62 = ssub.s32 16384, 16384
      %63 = vsyncadd [#allocation6], %s62
      %s64 = sshll.u32 [#allocation5], 4
      %s65 = int_to_ptr.vmem [resolvable:$true] %s64
      %70 = dma.hbm_to_vmem [thread:$0]  %s10, 16384, %s65, [#allocation6], 512, 512, 32
    $region45: #{forward.1} parent=1 // pred_fallthru
      _
    // Predicated region
    $region46: #{forward.1} parent=1 // pred_check
      _
    $region47: #{forward.1} parent=1 // pred_check_branch
      %72 = sbr.rel (0) target = $region49
    $region48: #{forward.1} parent=1 // pred_region
      _
    $region49: #{forward.1} parent=1 // pred_fallthru
      _
    // Predicated region
    $region50: #{forward.1} parent=1 // pred_check
      _
    $region51: #{forward.1} parent=1 // pred_check_branch
      %74 = sbr.rel (0) target = $region53
    $region52: #{forward.1} parent=1 // pred_region
      %s76 = ssub.s32 16384, 16384
      %77 = vsyncadd [#allocation6], %s76
      %s78 = sshll.u32 [#allocation7], 4
      %s79 = int_to_ptr.vmem [resolvable:$true] %s78
      %84 = dma.hbm_to_vmem [thread:$0]  %s12, 16384, %s79, [#allocation6], 128, 128, 8
    $region53: #{forward.1} parent=1 // pred_fallthru
      _
    // Predicated region
    $region54: #{forward.1} parent=1 // pred_check
      _
    $region55: #{forward.1} parent=1 // pred_check_branch
      %86 = sbr.rel (0) target = $region57
    $region56: #{forward.1} parent=1 // pred_region
      _
    $region57: #{forward.1} parent=1 // pred_fallthru
      _
    // Predicated region
    $region58: #{forward.1} parent=1 // pred_check
      _
    $region59: #{forward.1} parent=1 // pred_check_branch
      %88 = sbr.rel (0) target = $region61
    $region60: #{forward.1} parent=1 // pred_region
      _
    $region61: #{forward.1} parent=1 // pred_fallthru
      _
    // Predicated region
    $region62: #{forward.1} parent=1 // pred_check
      _
    $region63: #{forward.1} parent=1 // pred_check_branch
      %90 = sbr.rel (0) target = $region65
    $region64: #{forward.1} parent=1 // pred_region
      _
    $region65: #{forward.1} parent=1 // pred_fallthru
      _
    // Predicated region
    $region66: #{forward.1} parent=1 // pred_check
      _
    $region67: #{forward.1} parent=1 // pred_check_branch
      %92 = sbr.rel (0) target = $region69
    $region68: #{forward.1} parent=1 // pred_region
      _
    $region69: #{forward.1} parent=1 // pred_fallthru
      _
    // Predicated region
    $region70: #{forward.1} parent=1 // pred_check
      _
    $region71: #{forward.1} parent=1 // pred_check_branch
      %94 = sbr.rel (0) target = $region73
    $region72: #{forward.1} parent=1 // pred_region
      _
    $region73: #{forward.1} parent=1 // pred_fallthru
      _
    // Predicated region
    $region74: #{forward.1} parent=1 // pred_check
      _
    $region75: #{forward.1} parent=1 // pred_check_branch
      %96 = sbr.rel (0) target = $region77
    $region76: #{forward.1} parent=1 // pred_region
      %s98 = ssub.s32 2048, 2048
      %99 = vsyncadd [#allocation9], %s98
      %s100 = sshll.u32 [#allocation8], 4
      %s101 = int_to_ptr.vmem [resolvable:$true] %s100
      %106 = dma.hbm_to_vmem [thread:$0]  %s18, 2048, %s101, [#allocation9], 128, 128, 8
    $region77: #{forward.1} parent=1 // pred_fallthru
      _
    // Predicated region
    $region78: #{forward.1} parent=1 // pred_check
      _
    $region79: #{forward.1} parent=1 // pred_check_branch
      %108 = sbr.rel (0) target = $region81
    $region80: #{forward.1} parent=1 // pred_region
      _
    $region81: #{forward.1} parent=1 // pred_fallthru
      _
    // Predicated region
    $region82: #{forward.1} parent=1 // pred_check
      _
    $region83: #{forward.1} parent=1 // pred_check_branch
      %110 = sbr.rel (0) target = $region85
    $region84: #{forward.1} parent=1 // pred_region
      %111 = dma.done [#allocation3], 12288
    $region85: #{forward.1} parent=1 // pred_fallthru
      _
    // Predicated region
    $region86: #{forward.1} parent=1 // pred_check
      _
    $region87: #{forward.1} parent=1 // pred_check_branch
      %113 = sbr.rel (0) target = $region89
    $region88: #{forward.1} parent=1 // pred_region
      %114 = dma.done [#allocation6], 16384
    $region89: #{forward.1} parent=1 // pred_fallthru
      _
    // Predicated region
    $region90: #{forward.1} parent=1 // pred_check
      _
    $region91: #{forward.1} parent=1 // pred_check_branch
      %116 = sbr.rel (0) target = $region93
    $region92: #{forward.1} parent=1 // pred_region
      %117 = dma.done [#allocation6], 16384
    $region93: #{forward.1} parent=1 // pred_fallthru
      _
    // Predicated region
    $region94: #{forward.1} parent=1 // pred_check
      _
    $region95: #{forward.1} parent=1 // pred_check_branch
      %119 = sbr.rel (0) target = $region97
    $region96: #{forward.1} parent=1 // pred_region
      %120 = dma.done [#allocation9], 2048
    $region97: #{forward.1} parent=1 // pred_fallthru
      _
    %v121 = vld [vmem:[%s1] sm:$0xff]
    %v122 = vld [vmem:[%s1 + $0x8] sm:$0xff]
    %v123 = vld [vmem:[%s0] sm:$0xff]
    %v124 = vld [vmem:[%s0 + $0x8] sm:$0xff]
    %v125 = vld [vmem:[%s2] sm:$0x1]
    %v126 = vld [vmem:[%s3] sm:$0x1]
    %127 = vadd.xlane.f32.xlu0 %v123
    %v128 = vpop.xlane.xlu0 %127
    %129 = vadd.xlane.f32.xlu0 %v124
    %v130 = vpop.xlane.xlu0 %129
    %v131 = vrcp.pop 128.0
    %v132 = vmul.f32 %v128, %v131
    %v133 = vmul.f32 %v130, %v131
    %v134 = vsub.f32 %v123, %v132
    %v135 = vsub.f32 %v124, %v133
    %v136 = vmul.f32 %v134, %v134
    %v137 = vmul.f32 %v135, %v135
    %138 = vadd.xlane.f32.xlu0 %v136
    %v139 = vpop.xlane.xlu0 %138
    %140 = vadd.xlane.f32.xlu0 %v137
    %v141 = vpop.xlane.xlu0 %140
    %v142 = vmul.f32 %v139, %v131
    %v143 = vmul.f32 %v141, %v131
    %v144 = vadd.f32 %v142, 1e-12
    %v145 = vadd.f32 %v143, 1e-12
    %v146 = vrsqrt.pop %v144
    %v147 = vrsqrt.pop %v145
    %v148 = vmul.f32 %v134, %v146
    %v149 = vmul.f32 %v135, %v147
    %v151 = vlaneseq
    %v152 = vshrl.u32 %v151, 7
    %v153 = vsub.s32 0, %v152
    %v154 = vrot.slane %v125, %v153
    %v156 = vmul.f32 %v148, %v154
    %v157 = vmul.f32 %v149, %v154
    %v159 = vlaneseq
    %v160 = vshrl.u32 %v159, 7
    %v161 = vsub.s32 0, %v160
    %v162 = vrot.slane %v126, %v161
    %v164 = vadd.f32 %v156, %v162
    %v165 = vadd.f32 %v157, %v162
    %v166 = vld [vmem:[#allocation2] sm:$0xff]
    %v167 = vld [vmem:[#allocation2 + $0x8] sm:$0xff]
    %v168 = vld [vmem:[#allocation2 + $0x10] sm:$0xff]
    %v169 = vld [vmem:[#allocation2 + $0x18] sm:$0xff]
    %v170 = vld [vmem:[#allocation2 + $0x20] sm:$0xff]
    %v171 = vld [vmem:[#allocation2 + $0x28] sm:$0xff]
    %v172 = vld [vmem:[#allocation2 + $0x30] sm:$0xff]
    %v173 = vld [vmem:[#allocation2 + $0x38] sm:$0xff]
    %v174 = vld [vmem:[#allocation2 + $0x40] sm:$0xff]
    %v175 = vld [vmem:[#allocation2 + $0x48] sm:$0xff]
    %v176 = vld [vmem:[#allocation2 + $0x50] sm:$0xff]
    %v177 = vld [vmem:[#allocation2 + $0x58] sm:$0xff]
    %v178 = vld [vmem:[#allocation2 + $0x60] sm:$0xff]
    %v179 = vld [vmem:[#allocation2 + $0x68] sm:$0xff]
    %v180 = vld [vmem:[#allocation2 + $0x70] sm:$0xff]
    %v181 = vld [vmem:[#allocation2 + $0x78] sm:$0xff]
    %v182 = vld [vmem:[#allocation2 + $0x80] sm:$0xff]
    %v183 = vld [vmem:[#allocation2 + $0x88] sm:$0xff]
    %v184 = vld [vmem:[#allocation2 + $0x90] sm:$0xff]
    %v185 = vld [vmem:[#allocation2 + $0x98] sm:$0xff]
    %v186 = vld [vmem:[#allocation2 + $0xa0] sm:$0xff]
    %v187 = vld [vmem:[#allocation2 + $0xa8] sm:$0xff]
    %v188 = vld [vmem:[#allocation2 + $0xb0] sm:$0xff]
    %v189 = vld [vmem:[#allocation2 + $0xb8] sm:$0xff]
    %v190 = vld [vmem:[#allocation2 + $0xc0] sm:$0xff]
    %v191 = vld [vmem:[#allocation2 + $0xc8] sm:$0xff]
    %v192 = vld [vmem:[#allocation2 + $0xd0] sm:$0xff]
    %v193 = vld [vmem:[#allocation2 + $0xd8] sm:$0xff]
    %v194 = vld [vmem:[#allocation2 + $0xe0] sm:$0xff]
    %v195 = vld [vmem:[#allocation2 + $0xe8] sm:$0xff]
    %v196 = vld [vmem:[#allocation2 + $0xf0] sm:$0xff]
    %v197 = vld [vmem:[#allocation2 + $0xf8] sm:$0xff]
    %v198 = vld [vmem:[#allocation2 + $0x100] sm:$0xff]
    %v199 = vld [vmem:[#allocation2 + $0x108] sm:$0xff]
    %v200 = vld [vmem:[#allocation2 + $0x110] sm:$0xff]
    %v201 = vld [vmem:[#allocation2 + $0x118] sm:$0xff]
    %v202 = vld [vmem:[#allocation2 + $0x120] sm:$0xff]
    %v203 = vld [vmem:[#allocation2 + $0x128] sm:$0xff]
    %v204 = vld [vmem:[#allocation2 + $0x130] sm:$0xff]
    %v205 = vld [vmem:[#allocation2 + $0x138] sm:$0xff]
    %v206 = vld [vmem:[#allocation2 + $0x140] sm:$0xff]
    %v207 = vld [vmem:[#allocation2 + $0x148] sm:$0xff]
    %v208 = vld [vmem:[#allocation2 + $0x150] sm:$0xff]
    %v209 = vld [vmem:[#allocation2 + $0x158] sm:$0xff]
    %v210 = vld [vmem:[#allocation2 + $0x160] sm:$0xff]
    %v211 = vld [vmem:[#allocation2 + $0x168] sm:$0xff]
    %v212 = vld [vmem:[#allocation2 + $0x170] sm:$0xff]
    %v213 = vld [vmem:[#allocation2 + $0x178] sm:$0xff]
    %v214 = vld [vmem:[%s5] sm:$0x7]
    %v216 = vlaneseq
    %v217 = vshrl.u32 %v216, 7
    %v218 = vsub.s32 0, %v217
    %v219 = vrot.slane %v214, %v218
    %v220 = vlaneseq
    %v221 = vshrl.u32 %v220, 7
    %v222 = vsub.s32 1, %v221
    %v223 = vrot.slane %v214, %v222
    %v224 = vlaneseq
    %v225 = vshrl.u32 %v224, 7
    %v226 = vsub.s32 2, %v225
    %v227 = vrot.slane %v214, %v226
    %231 = vmatprep.subr.mxu0 %v167
    %232 = vmatpush1.msra.mxu0 %v166
    %233 = vmatprep.subr.mxu0 %v170
    %234 = vmatpush1.msra.mxu0 %v169
    %235 = vmatprep.subr.mxu0 %v173
    %236 = vmatpush1.msra.mxu0 %v172
    %237 = vmatprep.subr.mxu0 %v176
    %238 = vmatpush1.msra.mxu0 %v175
    %239 = vmatprep.subr.mxu0 %v179
    %240 = vmatpush1.msra.mxu0 %v178
    %241 = vmatprep.subr.mxu0 %v182
    %242 = vmatpush1.msra.mxu0 %v181
    %243 = vmatprep.subr.mxu0 %v185
    %244 = vmatpush1.msra.mxu0 %v184
    %245 = vmatprep.subr.mxu0 %v188
    %246 = vmatpush1.msra.mxu0 %v187
    %247 = vmatprep.subr.mxu0 %v191
    %248 = vmatpush1.msra.mxu0 %v190
    %249 = vmatprep.subr.mxu0 %v194
    %250 = vmatpush1.msra.mxu0 %v193
    %251 = vmatprep.subr.mxu0 %v197
    %252 = vmatpush1.msra.mxu0 %v196
    %253 = vmatprep.subr.mxu0 %v200
    %254 = vmatpush1.msra.mxu0 %v199
    %255 = vmatprep.subr.mxu0 %v203
    %256 = vmatpush1.msra.mxu0 %v202
    %257 = vmatprep.subr.mxu0 %v206
    %258 = vmatpush1.msra.mxu0 %v205
    %259 = vmatprep.subr.mxu0 %v209
    %260 = vmatpush1.msra.mxu0 %v208
    %261 = vmatprep.subr.mxu0 %v212
    %262 = vmatpush1.msra.mxu0 %v211
    %263 = vmatprep.subr.mxu0 0.0
    %264 = vmatpush1.msra.mxu0 0.0
    %265 = vmatprep.subr.mxu0 0.0
    %266 = vmatpush1.msra.mxu0 0.0
    %267 = vmatprep.subr.mxu0 0.0
    %268 = vmatpush1.msra.mxu0 0.0
    %269 = vmatprep.subr.mxu0 0.0
    %270 = vmatpush1.msra.mxu0 0.0
    %271 = vmatprep.subr.mxu0 0.0
    %272 = vmatpush1.msra.mxu0 0.0
    %273 = vmatprep.subr.mxu0 0.0
    %274 = vmatpush1.msra.mxu0 0.0
    %275 = vmatprep.subr.mxu0 0.0
    %276 = vmatpush1.msra.mxu0 0.0
    %277 = vmatprep.subr.mxu0 0.0
    %278 = vmatpush1.msra.mxu0 0.0
    %279 = vmatprep.subr.mxu0 0.0
    %280 = vmatpush1.msra.mxu0 0.0
    %281 = vmatprep.subr.mxu0 0.0
    %282 = vmatpush1.msra.mxu0 0.0
    %283 = vmatprep.subr.mxu0 0.0
    %284 = vmatpush1.msra.mxu0 0.0
    %285 = vmatprep.subr.mxu0 0.0
    %286 = vmatpush1.msra.mxu0 0.0
    %287 = vmatprep.subr.mxu0 0.0
    %288 = vmatpush1.msra.mxu0 0.0
    %289 = vmatprep.subr.mxu0 0.0
    %290 = vmatpush1.msra.mxu0 0.0
    %291 = vmatprep.subr.mxu0 0.0
    %292 = vmatpush1.msra.mxu0 0.0
    %293 = vmatprep.subr.mxu0 0.0
    %294 = vmatpush1.msra.mxu0 0.0
    %295 = vmatprep.mubr.f32.mxu0 0.0
    %296 = vmatmul.mubr.f32.gmra.mrb[0].mxu0 %v164
    %v297 = vpop.f32.mrb[0].mxu0
    %v298 = vadd.f32 %v219, %v297
    %v299 = vpop.f32.mrb[0].mxu0
    %v300 = vadd.f32 %v223, %v299
    %301 = vmatprep.mubr.f32.mxu0 0.0
    %302 = vmatmul.mubr.f32.gmra.mrb[0].mxu0 %v165
    %v303 = vpop.f32.mrb[0].mxu0
    %v304 = vadd.f32 %v219, %v303
    %v305 = vpop.f32.mrb[0].mxu0
    %v306 = vadd.f32 %v223, %v305
    %307 = vdwg.mxu0
    %308 = vmatprep.subr.mxu0 0.0
    %309 = vmatpush1.msra.mxu0 %v168
    %310 = vmatprep.subr.mxu0 0.0
    %311 = vmatpush1.msra.mxu0 %v171
    %312 = vmatprep.subr.mxu0 0.0
    %313 = vmatpush1.msra.mxu0 %v174
    %314 = vmatprep.subr.mxu0 0.0
    %315 = vmatpush1.msra.mxu0 %v177
    %316 = vmatprep.subr.mxu0 0.0
    %317 = vmatpush1.msra.mxu0 %v180
    %318 = vmatprep.subr.mxu0 0.0
    %319 = vmatpush1.msra.mxu0 %v183
    %320 = vmatprep.subr.mxu0 0.0
    %321 = vmatpush1.msra.mxu0 %v186
    %322 = vmatprep.subr.mxu0 0.0
    %323 = vmatpush1.msra.mxu0 %v189
    %324 = vmatprep.subr.mxu0 0.0
    %325 = vmatpush1.msra.mxu0 %v192
    %326 = vmatprep.subr.mxu0 0.0
    %327 = vmatpush1.msra.mxu0 %v195
    %328 = vmatprep.subr.mxu0 0.0
    %329 = vmatpush1.msra.mxu0 %v198
    %330 = vmatprep.subr.mxu0 0.0
    %331 = vmatpush1.msra.mxu0 %v201
    %332 = vmatprep.subr.mxu0 0.0
    %333 = vmatpush1.msra.mxu0 %v204
    %334 = vmatprep.subr.mxu0 0.0
    %335 = vmatpush1.msra.mxu0 %v207
    %336 = vmatprep.subr.mxu0 0.0
    %337 = vmatpush1.msra.mxu0 %v210
    %338 = vmatprep.subr.mxu0 0.0
    %339 = vmatpush1.msra.mxu0 %v213
    %340 = vmatprep.subr.mxu0 0.0
    %341 = vmatpush1.msra.mxu0 0.0
    %342 = vmatprep.subr.mxu0 0.0
    %343 = vmatpush1.msra.mxu0 0.0
    %344 = vmatprep.subr.mxu0 0.0
    %345 = vmatpush1.msra.mxu0 0.0
    %346 = vmatprep.subr.mxu0 0.0
    %347 = vmatpush1.msra.mxu0 0.0
    %348 = vmatprep.subr.mxu0 0.0
    %349 = vmatpush1.msra.mxu0 0.0
    %350 = vmatprep.subr.mxu0 0.0
    %351 = vmatpush1.msra.mxu0 0.0
    %352 = vmatprep.subr.mxu0 0.0
    %353 = vmatpush1.msra.mxu0 0.0
    %354 = vmatprep.subr.mxu0 0.0
    %355 = vmatpush1.msra.mxu0 0.0
    %356 = vmatprep.subr.mxu0 0.0
    %357 = vmatpush1.msra.mxu0 0.0
    %358 = vmatprep.subr.mxu0 0.0
    %359 = vmatpush1.msra.mxu0 0.0
    %360 = vmatprep.subr.mxu0 0.0
    %361 = vmatpush1.msra.mxu0 0.0
    %362 = vmatprep.subr.mxu0 0.0
    %363 = vmatpush1.msra.mxu0 0.0
    %364 = vmatprep.subr.mxu0 0.0
    %365 = vmatpush1.msra.mxu0 0.0
    %366 = vmatprep.subr.mxu0 0.0
    %367 = vmatpush1.msra.mxu0 0.0
    %368 = vmatprep.subr.mxu0 0.0
    %369 = vmatpush1.msra.mxu0 0.0
    %370 = vmatprep.subr.mxu0 0.0
    %371 = vmatpush1.msra.mxu0 0.0
    %372 = vmatprep.mubr.f32.mxu0 0.0
    %373 = vmatmul.mubr.f32.gmra.mrb[0].mxu0 %v164
    %v374 = vpop.f32.mrb[0].mxu0
    %v375 = vadd.f32 %v227, %v374
    %v376 = vpop.f32.mrb[0].mxu0
    %377 = vmatprep.mubr.f32.mxu0 0.0
    %378 = vmatmul.mubr.f32.gmra.mrb[0].mxu0 %v165
    %v379 = vpop.f32.mrb[0].mxu0
    %v380 = vadd.f32 %v227, %v379
    %v381 = vpop.f32.mrb[0].mxu0
    %382 = vdwg.mxu0
    %vm383 = vcmask 261120
    %v385 = vsel %vm383, %v298, 0
    %v388 = vsel %vm383, %v304, 0
    %v391 = vsel %vm383, %v300, 0
    %v394 = vsel %vm383, %v306, 0
    %396 = vmatprep.subr.mxu0 0.0
    %397 = vmatpush1.xpose.msra.mxu0 %v391
    %398 = vmatprep.subr.mxu0 0.0
    %399 = vmatpush1.xpose.msra.mxu0 %v394
    %400 = vmatprep.subr.mxu0 0.0
    %401 = vmatpush1.xpose.msra.mxu0 0.0
    %402 = vmatprep.subr.mxu0 0.0
    %403 = vmatpush1.xpose.msra.mxu0 0.0
    %404 = vmatprep.subr.mxu0 0.0
    %405 = vmatpush1.xpose.msra.mxu0 0.0
    %406 = vmatprep.subr.mxu0 0.0
    %407 = vmatpush1.xpose.msra.mxu0 0.0
    %408 = vmatprep.subr.mxu0 0.0
    %409 = vmatpush1.xpose.msra.mxu0 0.0
    %410 = vmatprep.subr.mxu0 0.0
    %411 = vmatpush1.xpose.msra.mxu0 0.0
    %412 = vmatprep.subr.mxu0 0.0
    %413 = vmatpush1.xpose.msra.mxu0 0.0
    %414 = vmatprep.subr.mxu0 0.0
    %415 = vmatpush1.xpose.msra.mxu0 0.0
    %416 = vmatprep.subr.mxu0 0.0
    %417 = vmatpush1.xpose.msra.mxu0 0.0
    %418 = vmatprep.subr.mxu0 0.0
    %419 = vmatpush1.xpose.msra.mxu0 0.0
    %420 = vmatprep.subr.mxu0 0.0
    %421 = vmatpush1.xpose.msra.mxu0 0.0
    %422 = vmatprep.subr.mxu0 0.0
    %423 = vmatpush1.xpose.msra.mxu0 0.0
    %424 = vmatprep.subr.mxu0 0.0
    %425 = vmatpush1.xpose.msra.mxu0 0.0
    %426 = vmatprep.subr.mxu0 0.0
    %427 = vmatpush1.xpose.msra.mxu0 0.0
    %428 = vmatprep.subr.mxu0 0.0
    %429 = vmatpush1.xpose.msra.mxu0 0.0
    %430 = vmatprep.subr.mxu0 0.0
    %431 = vmatpush1.xpose.msra.mxu0 0.0
    %432 = vmatprep.subr.mxu0 0.0
    %433 = vmatpush1.xpose.msra.mxu0 0.0
    %434 = vmatprep.subr.mxu0 0.0
    %435 = vmatpush1.xpose.msra.mxu0 0.0
    %436 = vmatprep.subr.mxu0 0.0
    %437 = vmatpush1.xpose.msra.mxu0 0.0
    %438 = vmatprep.subr.mxu0 0.0
    %439 = vmatpush1.xpose.msra.mxu0 0.0
    %440 = vmatprep.subr.mxu0 0.0
    %441 = vmatpush1.xpose.msra.mxu0 0.0
    %442 = vmatprep.subr.mxu0 0.0
    %443 = vmatpush1.xpose.msra.mxu0 0.0
    %444 = vmatprep.subr.mxu0 0.0
    %445 = vmatpush1.xpose.msra.mxu0 0.0
    %446 = vmatprep.subr.mxu0 0.0
    %447 = vmatpush1.xpose.msra.mxu0 0.0
    %448 = vmatprep.subr.mxu0 0.0
    %449 = vmatpush1.xpose.msra.mxu0 0.0
    %450 = vmatprep.subr.mxu0 0.0
    %451 = vmatpush1.xpose.msra.mxu0 0.0
    %452 = vmatprep.subr.mxu0 0.0
    %453 = vmatpush1.xpose.msra.mxu0 0.0
    %454 = vmatprep.subr.mxu0 0.0
    %455 = vmatpush1.xpose.msra.mxu0 0.0
    %456 = vmatprep.subr.mxu0 0.0
    %457 = vmatpush1.xpose.msra.mxu0 0.0
    %458 = vmatprep.subr.mxu0 0.0
    %459 = vmatpush1.xpose.msra.mxu0 0.0
    %460 = vmatprep.mubr.f32.mxu0 0.0
    %461 = vmatmul.mubr.f32.gmra.mrb[0].mxu0 %v385
    %v462 = vpop.f32.mrb[0].mxu0
    %v463 = vadd.f32 0.0, %v462
    %v464 = vpop.f32.mrb[0].mxu0
    %465 = vmatprep.mubr.f32.mxu0 0.0
    %466 = vmatmul.mubr.f32.gmra.mrb[0].mxu0 %v388
    %v467 = vpop.f32.mrb[0].mxu0
    %v468 = vadd.f32 0.0, %v467
    %v469 = vpop.f32.mrb[0].mxu0
    %470 = vdwg.mxu0
    %v471 = vmul.f32 %v463, 0.17677669
    %v472 = vmul.f32 %v468, 0.17677669
    %v473 = vadd.f32 %v471, %v121
    %v474 = vadd.f32 %v472, %v122
    %vm475 = vcmask 130048
    %v476 = vsel %vm475, %v473, -inf
    %477 = vmax.xlane.f32.xlu0 %v476
    %v478 = vpop.xlane.xlu0 %477
    %v479 = vsel %vm475, %v474, -inf
    %480 = vmax.xlane.f32.xlu0 %v479
    %v481 = vpop.xlane.xlu0 %480
    %v482 = vsub.f32 %v473, %v478
    %v483 = vsub.f32 %v474, %v481
    %v484 = vmul.f32 %v482, 1.442695
    %v485 = vpow.pop %v484
    %v486 = vmul.f32 %v483, 1.442695
    %v487 = vpow.pop %v486
    %v488 = vsel %vm475, %v485, 0.0
    %489 = vadd.xlane.f32.xlu0 %v488
    %v490 = vpop.xlane.xlu0 %489
    %v491 = vsel %vm475, %v487, 0.0
    %492 = vadd.xlane.f32.xlu0 %v491
    %v493 = vpop.xlane.xlu0 %492
    %v494 = vrcp.pop %v490
    %v495 = vrcp.pop %v493
    %v496 = vmul.f32 %v485, %v494
    %v497 = vmul.f32 %v487, %v495
    %v499 = vsel %vm475, %v496, 0
    %v502 = vsel %vm475, %v497, 0
    %504 = vmatprep.subr.mxu0 0.0
    %505 = vmatpush1.msra.mxu0 %v375
    %506 = vmatprep.subr.mxu0 0.0
    %507 = vmatpush1.msra.mxu0 %v380
    %508 = vmatprep.subr.mxu0 0.0
    %509 = vmatpush1.msra.mxu0 0.0
    %510 = vmatprep.subr.mxu0 0.0
    %511 = vmatpush1.msra.mxu0 0.0
    %512 = vmatprep.subr.mxu0 0.0
    %513 = vmatpush1.msra.mxu0 0.0
    %514 = vmatprep.subr.mxu0 0.0
    %515 = vmatpush1.msra.mxu0 0.0
    %516 = vmatprep.subr.mxu0 0.0
    %517 = vmatpush1.msra.mxu0 0.0
    %518 = vmatprep.subr.mxu0 0.0
    %519 = vmatpush1.msra.mxu0 0.0
    %520 = vmatprep.subr.mxu0 0.0
    %521 = vmatpush1.msra.mxu0 0.0
    %522 = vmatprep.subr.mxu0 0.0
    %523 = vmatpush1.msra.mxu0 0.0
    %524 = vmatprep.subr.mxu0 0.0
    %525 = vmatpush1.msra.mxu0 0.0
    %526 = vmatprep.subr.mxu0 0.0
    %527 = vmatpush1.msra.mxu0 0.0
    %528 = vmatprep.subr.mxu0 0.0
    %529 = vmatpush1.msra.mxu0 0.0
    %530 = vmatprep.subr.mxu0 0.0
    %531 = vmatpush1.msra.mxu0 0.0
    %532 = vmatprep.subr.mxu0 0.0
    %533 = vmatpush1.msra.mxu0 0.0
    %534 = vmatprep.subr.mxu0 0.0
    %535 = vmatpush1.msra.mxu0 0.0
    %536 = vmatprep.subr.mxu0 0.0
    %537 = vmatpush1.msra.mxu0 0.0
    %538 = vmatprep.subr.mxu0 0.0
    %539 = vmatpush1.msra.mxu0 0.0
    %540 = vmatprep.subr.mxu0 0.0
    %541 = vmatpush1.msra.mxu0 0.0
    %542 = vmatprep.subr.mxu0 0.0
    %543 = vmatpush1.msra.mxu0 0.0
    %544 = vmatprep.subr.mxu0 0.0
    %545 = vmatpush1.msra.mxu0 0.0
    %546 = vmatprep.subr.mxu0 0.0
    %547 = vmatpush1.msra.mxu0 0.0
    %548 = vmatprep.subr.mxu0 0.0
    %549 = vmatpush1.msra.mxu0 0.0
    %550 = vmatprep.subr.mxu0 0.0
    %551 = vmatpush1.msra.mxu0 0.0
    %552 = vmatprep.subr.mxu0 0.0
    %553 = vmatpush1.msra.mxu0 0.0
    %554 = vmatprep.subr.mxu0 0.0
    %555 = vmatpush1.msra.mxu0 0.0
    %556 = vmatprep.subr.mxu0 0.0
    %557 = vmatpush1.msra.mxu0 0.0
    %558 = vmatprep.subr.mxu0 0.0
    %559 = vmatpush1.msra.mxu0 0.0
    %560 = vmatprep.subr.mxu0 0.0
    %561 = vmatpush1.msra.mxu0 0.0
    %562 = vmatprep.subr.mxu0 0.0
    %563 = vmatpush1.msra.mxu0 0.0
    %564 = vmatprep.subr.mxu0 0.0
    %565 = vmatpush1.msra.mxu0 0.0
    %566 = vmatprep.subr.mxu0 0.0
    %567 = vmatpush1.msra.mxu0 0.0
    %568 = vmatprep.mubr.f32.mxu0 0.0
    %569 = vmatmul.mubr.f32.gmra.mrb[0].mxu0 %v499
    %v570 = vpop.f32.mrb[0].mxu0
    %v571 = vadd.f32 0.0, %v570
    %v572 = vpop.f32.mrb[0].mxu0
    %573 = vmatprep.mubr.f32.mxu0 0.0
    %574 = vmatmul.mubr.f32.gmra.mrb[0].mxu0 %v502
    %v575 = vpop.f32.mrb[0].mxu0
    %v576 = vadd.f32 0.0, %v575
    %v577 = vpop.f32.mrb[0].mxu0
    %578 = vdwg.mxu0
    %579 = vrot.lane.b32.xlu0 %v298, 96
    %v580 = vpop.permute.xlu0 %579
    %581 = vrot.lane.b32.xlu0 %v304, 96
    %v582 = vpop.permute.xlu0 %581
    %583 = vrot.lane.b32.xlu0 %v300, 96
    %v584 = vpop.permute.xlu0 %583
    %585 = vrot.lane.b32.xlu0 %v306, 96
    %v586 = vpop.permute.xlu0 %585
    %v587 = vsel %vm383, %v580, 0
    %v589 = vsel %vm383, %v582, 0
    %v591 = vsel %vm383, %v584, 0
    %v593 = vsel %vm383, %v586, 0
    %595 = vmatprep.subr.mxu0 0.0
    %596 = vmatpush1.xpose.msra.mxu0 %v591
    %597 = vmatprep.subr.mxu0 0.0
    %598 = vmatpush1.xpose.msra.mxu0 %v593
    %599 = vmatprep.subr.mxu0 0.0
    %600 = vmatpush1.xpose.msra.mxu0 0.0
    %601 = vmatprep.subr.mxu0 0.0
    %602 = vmatpush1.xpose.msra.mxu0 0.0
    %603 = vmatprep.subr.mxu0 0.0
    %604 = vmatpush1.xpose.msra.mxu0 0.0
    %605 = vmatprep.subr.mxu0 0.0
    %606 = vmatpush1.xpose.msra.mxu0 0.0
    %607 = vmatprep.subr.mxu0 0.0
    %608 = vmatpush1.xpose.msra.mxu0 0.0
    %609 = vmatprep.subr.mxu0 0.0
    %610 = vmatpush1.xpose.msra.mxu0 0.0
    %611 = vmatprep.subr.mxu0 0.0
    %612 = vmatpush1.xpose.msra.mxu0 0.0
    %613 = vmatprep.subr.mxu0 0.0
    %614 = vmatpush1.xpose.msra.mxu0 0.0
    %615 = vmatprep.subr.mxu0 0.0
    %616 = vmatpush1.xpose.msra.mxu0 0.0
    %617 = vmatprep.subr.mxu0 0.0
    %618 = vmatpush1.xpose.msra.mxu0 0.0
    %619 = vmatprep.subr.mxu0 0.0
    %620 = vmatpush1.xpose.msra.mxu0 0.0
    %621 = vmatprep.subr.mxu0 0.0
    %622 = vmatpush1.xpose.msra.mxu0 0.0
    %623 = vmatprep.subr.mxu0 0.0
    %624 = vmatpush1.xpose.msra.mxu0 0.0
    %625 = vmatprep.subr.mxu0 0.0
    %626 = vmatpush1.xpose.msra.mxu0 0.0
    %627 = vmatprep.subr.mxu0 0.0
    %628 = vmatpush1.xpose.msra.mxu0 0.0
    %629 = vmatprep.subr.mxu0 0.0
    %630 = vmatpush1.xpose.msra.mxu0 0.0
    %631 = vmatprep.subr.mxu0 0.0
    %632 = vmatpush1.xpose.msra.mxu0 0.0
    %633 = vmatprep.subr.mxu0 0.0
    %634 = vmatpush1.xpose.msra.mxu0 0.0
    %635 = vmatprep.subr.mxu0 0.0
    %636 = vmatpush1.xpose.msra.mxu0 0.0
    %637 = vmatprep.subr.mxu0 0.0
    %638 = vmatpush1.xpose.msra.mxu0 0.0
    %639 = vmatprep.subr.mxu0 0.0
    %640 = vmatpush1.xpose.msra.mxu0 0.0
    %641 = vmatprep.subr.mxu0 0.0
    %642 = vmatpush1.xpose.msra.mxu0 0.0
    %643 = vmatprep.subr.mxu0 0.0
    %644 = vmatpush1.xpose.msra.mxu0 0.0
    %645 = vmatprep.subr.mxu0 0.0
    %646 = vmatpush1.xpose.msra.mxu0 0.0
    %647 = vmatprep.subr.mxu0 0.0
    %648 = vmatpush1.xpose.msra.mxu0 0.0
    %649 = vmatprep.subr.mxu0 0.0
    %650 = vmatpush1.xpose.msra.mxu0 0.0
    %651 = vmatprep.subr.mxu0 0.0
    %652 = vmatpush1.xpose.msra.mxu0 0.0
    %653 = vmatprep.subr.mxu0 0.0
    %654 = vmatpush1.xpose.msra.mxu0 0.0
    %655 = vmatprep.subr.mxu0 0.0
    %656 = vmatpush1.xpose.msra.mxu0 0.0
    %657 = vmatprep.subr.mxu0 0.0
    %658 = vmatpush1.xpose.msra.mxu0 0.0
    %659 = vmatprep.mubr.f32.mxu0 0.0
    %660 = vmatmul.mubr.f32.gmra.mrb[0].mxu0 %v587
    %v661 = vpop.f32.mrb[0].mxu0
    %v662 = vadd.f32 0.0, %v661
    %v663 = vpop.f32.mrb[0].mxu0
    %664 = vmatprep.mubr.f32.mxu0 0.0
    %665 = vmatmul.mubr.f32.gmra.mrb[0].mxu0 %v589
    %v666 = vpop.f32.mrb[0].mxu0
    %v667 = vadd.f32 0.0, %v666
    %v668 = vpop.f32.mrb[0].mxu0
    %669 = vdwg.mxu0
    %v670 = vmul.f32 %v662, 0.17677669
    %v671 = vmul.f32 %v667, 0.17677669
    %v672 = vadd.f32 %v670, %v121
    %v673 = vadd.f32 %v671, %v122
    %v674 = vsel %vm475, %v672, -inf
    %675 = vmax.xlane.f32.xlu0 %v674
    %v676 = vpop.xlane.xlu0 %675
    %v677 = vsel %vm475, %v673, -inf
    %678 = vmax.xlane.f32.xlu0 %v677
    %v679 = vpop.xlane.xlu0 %678
    %v680 = vsub.f32 %v672, %v676
    %v681 = vsub.f32 %v673, %v679
    %v682 = vmul.f32 %v680, 1.442695
    %v683 = vpow.pop %v682
    %v684 = vmul.f32 %v681, 1.442695
    %v685 = vpow.pop %v684
    %v686 = vsel %vm475, %v683, 0.0
    %687 = vadd.xlane.f32.xlu0 %v686
    %v688 = vpop.xlane.xlu0 %687
    %v689 = vsel %vm475, %v685, 0.0
    %690 = vadd.xlane.f32.xlu0 %v689
    %v691 = vpop.xlane.xlu0 %690
    %v692 = vrcp.pop %v688
    %v693 = vrcp.pop %v691
    %v694 = vmul.f32 %v683, %v692
    %v695 = vmul.f32 %v685, %v693
    %698 = vrot.lane.b32.xlu0 %v375, 96
    %v699 = vpop.permute.xlu0 %698
    %700 = vrot.lane.b32.xlu0 %v380, 96
    %v701 = vpop.permute.xlu0 %700
    %v705 = vsel %vm475, %v694, 0
    %v708 = vsel %vm475, %v695, 0
    %710 = vmatprep.subr.mxu0 0.0
    %711 = vmatpush1.msra.mxu0 %v699
    %712 = vmatprep.subr.mxu0 0.0
    %713 = vmatpush1.msra.mxu0 %v701
    %714 = vmatprep.subr.mxu0 0.0
    %715 = vmatpush1.msra.mxu0 0.0
    %716 = vmatprep.subr.mxu0 0.0
    %717 = vmatpush1.msra.mxu0 0.0
    %718 = vmatprep.subr.mxu0 0.0
    %719 = vmatpush1.msra.mxu0 0.0
    %720 = vmatprep.subr.mxu0 0.0
    %721 = vmatpush1.msra.mxu0 0.0
    %722 = vmatprep.subr.mxu0 0.0
    %723 = vmatpush1.msra.mxu0 0.0
    %724 = vmatprep.subr.mxu0 0.0
    %725 = vmatpush1.msra.mxu0 0.0
    %726 = vmatprep.subr.mxu0 0.0
    %727 = vmatpush1.msra.mxu0 0.0
    %728 = vmatprep.subr.mxu0 0.0
    %729 = vmatpush1.msra.mxu0 0.0
    %730 = vmatprep.subr.mxu0 0.0
    %731 = vmatpush1.msra.mxu0 0.0
    %732 = vmatprep.subr.mxu0 0.0
    %733 = vmatpush1.msra.mxu0 0.0
    %734 = vmatprep.subr.mxu0 0.0
    %735 = vmatpush1.msra.mxu0 0.0
    %736 = vmatprep.subr.mxu0 0.0
    %737 = vmatpush1.msra.mxu0 0.0
    %738 = vmatprep.subr.mxu0 0.0
    %739 = vmatpush1.msra.mxu0 0.0
    %740 = vmatprep.subr.mxu0 0.0
    %741 = vmatpush1.msra.mxu0 0.0
    %742 = vmatprep.subr.mxu0 0.0
    %743 = vmatpush1.msra.mxu0 0.0
    %744 = vmatprep.subr.mxu0 0.0
    %745 = vmatpush1.msra.mxu0 0.0
    %746 = vmatprep.subr.mxu0 0.0
    %747 = vmatpush1.msra.mxu0 0.0
    %748 = vmatprep.subr.mxu0 0.0
    %749 = vmatpush1.msra.mxu0 0.0
    %750 = vmatprep.subr.mxu0 0.0
    %751 = vmatpush1.msra.mxu0 0.0
    %752 = vmatprep.subr.mxu0 0.0
    %753 = vmatpush1.msra.mxu0 0.0
    %754 = vmatprep.subr.mxu0 0.0
    %755 = vmatpush1.msra.mxu0 0.0
    %756 = vmatprep.subr.mxu0 0.0
    %757 = vmatpush1.msra.mxu0 0.0
    %758 = vmatprep.subr.mxu0 0.0
    %759 = vmatpush1.msra.mxu0 0.0
    %760 = vmatprep.subr.mxu0 0.0
    %761 = vmatpush1.msra.mxu0 0.0
    %762 = vmatprep.subr.mxu0 0.0
    %763 = vmatpush1.msra.mxu0 0.0
    %764 = vmatprep.subr.mxu0 0.0
    %765 = vmatpush1.msra.mxu0 0.0
    %766 = vmatprep.subr.mxu0 0.0
    %767 = vmatpush1.msra.mxu0 0.0
    %768 = vmatprep.subr.mxu0 0.0
    %769 = vmatpush1.msra.mxu0 0.0
    %770 = vmatprep.subr.mxu0 0.0
    %771 = vmatpush1.msra.mxu0 0.0
    %772 = vmatprep.subr.mxu0 0.0
    %773 = vmatpush1.msra.mxu0 0.0
    %774 = vmatprep.mubr.f32.mxu0 0.0
    %775 = vmatmul.mubr.f32.gmra.mrb[0].mxu0 %v705
    %v776 = vpop.f32.mrb[0].mxu0
    %v777 = vadd.f32 0.0, %v776
    %v778 = vpop.f32.mrb[0].mxu0
    %779 = vmatprep.mubr.f32.mxu0 0.0
    %780 = vmatmul.mubr.f32.gmra.mrb[0].mxu0 %v708
    %v781 = vpop.f32.mrb[0].mxu0
    %v782 = vadd.f32 0.0, %v781
    %v783 = vpop.f32.mrb[0].mxu0
    %784 = vdwg.mxu0
    %785 = vrot.lane.b32.xlu0 %v298, 64
    %v786 = vpop.permute.xlu0 %785
    %787 = vrot.lane.b32.xlu0 %v304, 64
    %v788 = vpop.permute.xlu0 %787
    %789 = vrot.lane.b32.xlu0 %v300, 64
    %v790 = vpop.permute.xlu0 %789
    %791 = vrot.lane.b32.xlu0 %v306, 64
    %v792 = vpop.permute.xlu0 %791
    %v793 = vsel %vm383, %v786, 0
    %v795 = vsel %vm383, %v788, 0
    %v797 = vsel %vm383, %v790, 0
    %v799 = vsel %vm383, %v792, 0
    %801 = vmatprep.subr.mxu0 0.0
    %802 = vmatpush1.xpose.msra.mxu0 %v797
    %803 = vmatprep.subr.mxu0 0.0
    %804 = vmatpush1.xpose.msra.mxu0 %v799
    %805 = vmatprep.subr.mxu0 0.0
    %806 = vmatpush1.xpose.msra.mxu0 0.0
    %807 = vmatprep.subr.mxu0 0.0
    %808 = vmatpush1.xpose.msra.mxu0 0.0
    %809 = vmatprep.subr.mxu0 0.0
    %810 = vmatpush1.xpose.msra.mxu0 0.0
    %811 = vmatprep.subr.mxu0 0.0
    %812 = vmatpush1.xpose.msra.mxu0 0.0
    %813 = vmatprep.subr.mxu0 0.0
    %814 = vmatpush1.xpose.msra.mxu0 0.0
    %815 = vmatprep.subr.mxu0 0.0
    %816 = vmatpush1.xpose.msra.mxu0 0.0
    %817 = vmatprep.subr.mxu0 0.0
    %818 = vmatpush1.xpose.msra.mxu0 0.0
    %819 = vmatprep.subr.mxu0 0.0
    %820 = vmatpush1.xpose.msra.mxu0 0.0
    %821 = vmatprep.subr.mxu0 0.0
    %822 = vmatpush1.xpose.msra.mxu0 0.0
    %823 = vmatprep.subr.mxu0 0.0
    %824 = vmatpush1.xpose.msra.mxu0 0.0
    %825 = vmatprep.subr.mxu0 0.0
    %826 = vmatpush1.xpose.msra.mxu0 0.0
    %827 = vmatprep.subr.mxu0 0.0
    %828 = vmatpush1.xpose.msra.mxu0 0.0
    %829 = vmatprep.subr.mxu0 0.0
    %830 = vmatpush1.xpose.msra.mxu0 0.0
    %831 = vmatprep.subr.mxu0 0.0
    %832 = vmatpush1.xpose.msra.mxu0 0.0
    %833 = vmatprep.subr.mxu0 0.0
    %834 = vmatpush1.xpose.msra.mxu0 0.0
    %835 = vmatprep.subr.mxu0 0.0
    %836 = vmatpush1.xpose.msra.mxu0 0.0
    %837 = vmatprep.subr.mxu0 0.0
    %838 = vmatpush1.xpose.msra.mxu0 0.0
    %839 = vmatprep.subr.mxu0 0.0
    %840 = vmatpush1.xpose.msra.mxu0 0.0
    %841 = vmatprep.subr.mxu0 0.0
    %842 = vmatpush1.xpose.msra.mxu0 0.0
    %843 = vmatprep.subr.mxu0 0.0
    %844 = vmatpush1.xpose.msra.mxu0 0.0
    %845 = vmatprep.subr.mxu0 0.0
    %846 = vmatpush1.xpose.msra.mxu0 0.0
    %847 = vmatprep.subr.mxu0 0.0
    %848 = vmatpush1.xpose.msra.mxu0 0.0
    %849 = vmatprep.subr.mxu0 0.0
    %850 = vmatpush1.xpose.msra.mxu0 0.0
    %851 = vmatprep.subr.mxu0 0.0
    %852 = vmatpush1.xpose.msra.mxu0 0.0
    %853 = vmatprep.subr.mxu0 0.0
    %854 = vmatpush1.xpose.msra.mxu0 0.0
    %855 = vmatprep.subr.mxu0 0.0
    %856 = vmatpush1.xpose.msra.mxu0 0.0
    %857 = vmatprep.subr.mxu0 0.0
    %858 = vmatpush1.xpose.msra.mxu0 0.0
    %859 = vmatprep.subr.mxu0 0.0
    %860 = vmatpush1.xpose.msra.mxu0 0.0
    %861 = vmatprep.subr.mxu0 0.0
    %862 = vmatpush1.xpose.msra.mxu0 0.0
    %863 = vmatprep.subr.mxu0 0.0
    %864 = vmatpush1.xpose.msra.mxu0 0.0
    %865 = vmatprep.mubr.f32.mxu0 0.0
    %866 = vmatmul.mubr.f32.gmra.mrb[0].mxu0 %v793
    %v867 = vpop.f32.mrb[0].mxu0
    %v868 = vadd.f32 0.0, %v867
    %v869 = vpop.f32.mrb[0].mxu0
    %870 = vmatprep.mubr.f32.mxu0 0.0
    %871 = vmatmul.mubr.f32.gmra.mrb[0].mxu0 %v795
    %v872 = vpop.f32.mrb[0].mxu0
    %v873 = vadd.f32 0.0, %v872
    %v874 = vpop.f32.mrb[0].mxu0
    %875 = vdwg.mxu0
    %v876 = vmul.f32 %v868, 0.17677669
    %v877 = vmul.f32 %v873, 0.17677669
    %v878 = vadd.f32 %v876, %v121
    %v879 = vadd.f32 %v877, %v122
    %v880 = vsel %vm475, %v878, -inf
    %881 = vmax.xlane.f32.xlu0 %v880
    %v882 = vpop.xlane.xlu0 %881
    %v883 = vsel %vm475, %v879, -inf
    %884 = vmax.xlane.f32.xlu0 %v883
    %v885 = vpop.xlane.xlu0 %884
    %v886 = vsub.f32 %v878, %v882
    %v887 = vsub.f32 %v879, %v885
    %v888 = vmul.f32 %v886, 1.442695
    %v889 = vpow.pop %v888
    %v890 = vmul.f32 %v887, 1.442695
    %v891 = vpow.pop %v890
    %v892 = vsel %vm475, %v889, 0.0
    %893 = vadd.xlane.f32.xlu0 %v892
    %v894 = vpop.xlane.xlu0 %893
    %v895 = vsel %vm475, %v891, 0.0
    %896 = vadd.xlane.f32.xlu0 %v895
    %v897 = vpop.xlane.xlu0 %896
    %v898 = vrcp.pop %v894
    %v899 = vrcp.pop %v897
    %v900 = vmul.f32 %v889, %v898
    %v901 = vmul.f32 %v891, %v899
    %902 = vrot.lane.b32.xlu0 %v375, 64
    %v903 = vpop.permute.xlu0 %902
    %904 = vrot.lane.b32.xlu0 %v380, 64
    %v905 = vpop.permute.xlu0 %904
    %v909 = vsel %vm475, %v900, 0
    %v912 = vsel %vm475, %v901, 0
    %914 = vmatprep.subr.mxu0 0.0
    %915 = vmatpush1.msra.mxu0 %v903
    %916 = vmatprep.subr.mxu0 0.0
    %917 = vmatpush1.msra.mxu0 %v905
    %918 = vmatprep.subr.mxu0 0.0
    %919 = vmatpush1.msra.mxu0 0.0
    %920 = vmatprep.subr.mxu0 0.0
    %921 = vmatpush1.msra.mxu0 0.0
    %922 = vmatprep.subr.mxu0 0.0
    %923 = vmatpush1.msra.mxu0 0.0
    %924 = vmatprep.subr.mxu0 0.0
    %925 = vmatpush1.msra.mxu0 0.0
    %926 = vmatprep.subr.mxu0 0.0
    %927 = vmatpush1.msra.mxu0 0.0
    %928 = vmatprep.subr.mxu0 0.0
    %929 = vmatpush1.msra.mxu0 0.0
    %930 = vmatprep.subr.mxu0 0.0
    %931 = vmatpush1.msra.mxu0 0.0
    %932 = vmatprep.subr.mxu0 0.0
    %933 = vmatpush1.msra.mxu0 0.0
    %934 = vmatprep.subr.mxu0 0.0
    %935 = vmatpush1.msra.mxu0 0.0
    %936 = vmatprep.subr.mxu0 0.0
    %937 = vmatpush1.msra.mxu0 0.0
    %938 = vmatprep.subr.mxu0 0.0
    %939 = vmatpush1.msra.mxu0 0.0
    %940 = vmatprep.subr.mxu0 0.0
    %941 = vmatpush1.msra.mxu0 0.0
    %942 = vmatprep.subr.mxu0 0.0
    %943 = vmatpush1.msra.mxu0 0.0
    %944 = vmatprep.subr.mxu0 0.0
    %945 = vmatpush1.msra.mxu0 0.0
    %946 = vmatprep.subr.mxu0 0.0
    %947 = vmatpush1.msra.mxu0 0.0
    %948 = vmatprep.subr.mxu0 0.0
    %949 = vmatpush1.msra.mxu0 0.0
    %950 = vmatprep.subr.mxu0 0.0
    %951 = vmatpush1.msra.mxu0 0.0
    %952 = vmatprep.subr.mxu0 0.0
    %953 = vmatpush1.msra.mxu0 0.0
    %954 = vmatprep.subr.mxu0 0.0
    %955 = vmatpush1.msra.mxu0 0.0
    %956 = vmatprep.subr.mxu0 0.0
    %957 = vmatpush1.msra.mxu0 0.0
    %958 = vmatprep.subr.mxu0 0.0
    %959 = vmatpush1.msra.mxu0 0.0
    %960 = vmatprep.subr.mxu0 0.0
    %961 = vmatpush1.msra.mxu0 0.0
    %962 = vmatprep.subr.mxu0 0.0
    %963 = vmatpush1.msra.mxu0 0.0
    %964 = vmatprep.subr.mxu0 0.0
    %965 = vmatpush1.msra.mxu0 0.0
    %966 = vmatprep.subr.mxu0 0.0
    %967 = vmatpush1.msra.mxu0 0.0
    %968 = vmatprep.subr.mxu0 0.0
    %969 = vmatpush1.msra.mxu0 0.0
    %970 = vmatprep.subr.mxu0 0.0
    %971 = vmatpush1.msra.mxu0 0.0
    %972 = vmatprep.subr.mxu0 0.0
    %973 = vmatpush1.msra.mxu0 0.0
    %974 = vmatprep.subr.mxu0 0.0
    %975 = vmatpush1.msra.mxu0 0.0
    %976 = vmatprep.subr.mxu0 0.0
    %977 = vmatpush1.msra.mxu0 0.0
    %978 = vmatprep.mubr.f32.mxu0 0.0
    %979 = vmatmul.mubr.f32.gmra.mrb[0].mxu0 %v909
    %v980 = vpop.f32.mrb[0].mxu0
    %v981 = vadd.f32 0.0, %v980
    %v982 = vpop.f32.mrb[0].mxu0
    %983 = vmatprep.mubr.f32.mxu0 0.0
    %984 = vmatmul.mubr.f32.gmra.mrb[0].mxu0 %v912
    %v985 = vpop.f32.mrb[0].mxu0
    %v986 = vadd.f32 0.0, %v985
    %v987 = vpop.f32.mrb[0].mxu0
    %988 = vdwg.mxu0
    %989 = vrot.lane.b32.xlu0 %v298, 32
    %v990 = vpop.permute.xlu0 %989
    %991 = vrot.lane.b32.xlu0 %v304, 32
    %v992 = vpop.permute.xlu0 %991
    %993 = vrot.lane.b32.xlu0 %v300, 32
    %v994 = vpop.permute.xlu0 %993
    %995 = vrot.lane.b32.xlu0 %v306, 32
    %v996 = vpop.permute.xlu0 %995
    %v997 = vsel %vm383, %v990, 0
    %v999 = vsel %vm383, %v992, 0
    %v1001 = vsel %vm383, %v994, 0
    %v1003 = vsel %vm383, %v996, 0
    %1005 = vmatprep.subr.mxu0 0.0
    %1006 = vmatpush1.xpose.msra.mxu0 %v1001
    %1007 = vmatprep.subr.mxu0 0.0
    %1008 = vmatpush1.xpose.msra.mxu0 %v1003
    %1009 = vmatprep.subr.mxu0 0.0
    %1010 = vmatpush1.xpose.msra.mxu0 0.0
    %1011 = vmatprep.subr.mxu0 0.0
    %1012 = vmatpush1.xpose.msra.mxu0 0.0
    %1013 = vmatprep.subr.mxu0 0.0
    %1014 = vmatpush1.xpose.msra.mxu0 0.0
    %1015 = vmatprep.subr.mxu0 0.0
    %1016 = vmatpush1.xpose.msra.mxu0 0.0
    %1017 = vmatprep.subr.mxu0 0.0
    %1018 = vmatpush1.xpose.msra.mxu0 0.0
    %1019 = vmatprep.subr.mxu0 0.0
    %1020 = vmatpush1.xpose.msra.mxu0 0.0
    %1021 = vmatprep.subr.mxu0 0.0
    %1022 = vmatpush1.xpose.msra.mxu0 0.0
    %1023 = vmatprep.subr.mxu0 0.0
    %1024 = vmatpush1.xpose.msra.mxu0 0.0
    %1025 = vmatprep.subr.mxu0 0.0
    %1026 = vmatpush1.xpose.msra.mxu0 0.0
    %1027 = vmatprep.subr.mxu0 0.0
    %1028 = vmatpush1.xpose.msra.mxu0 0.0
    %1029 = vmatprep.subr.mxu0 0.0
    %1030 = vmatpush1.xpose.msra.mxu0 0.0
    %1031 = vmatprep.subr.mxu0 0.0
    %1032 = vmatpush1.xpose.msra.mxu0 0.0
    %1033 = vmatprep.subr.mxu0 0.0
    %1034 = vmatpush1.xpose.msra.mxu0 0.0
    %1035 = vmatprep.subr.mxu0 0.0
    %1036 = vmatpush1.xpose.msra.mxu0 0.0
    %1037 = vmatprep.subr.mxu0 0.0
    %1038 = vmatpush1.xpose.msra.mxu0 0.0
    %1039 = vmatprep.subr.mxu0 0.0
    %1040 = vmatpush1.xpose.msra.mxu0 0.0
    %1041 = vmatprep.subr.mxu0 0.0
    %1042 = vmatpush1.xpose.msra.mxu0 0.0
    %1043 = vmatprep.subr.mxu0 0.0
    %1044 = vmatpush1.xpose.msra.mxu0 0.0
    %1045 = vmatprep.subr.mxu0 0.0
    %1046 = vmatpush1.xpose.msra.mxu0 0.0
    %1047 = vmatprep.subr.mxu0 0.0
    %1048 = vmatpush1.xpose.msra.mxu0 0.0
    %1049 = vmatprep.subr.mxu0 0.0
    %1050 = vmatpush1.xpose.msra.mxu0 0.0
    %1051 = vmatprep.subr.mxu0 0.0
    %1052 = vmatpush1.xpose.msra.mxu0 0.0
    %1053 = vmatprep.subr.mxu0 0.0
    %1054 = vmatpush1.xpose.msra.mxu0 0.0
    %1055 = vmatprep.subr.mxu0 0.0
    %1056 = vmatpush1.xpose.msra.mxu0 0.0
    %1057 = vmatprep.subr.mxu0 0.0
    %1058 = vmatpush1.xpose.msra.mxu0 0.0
    %1059 = vmatprep.subr.mxu0 0.0
    %1060 = vmatpush1.xpose.msra.mxu0 0.0
    %1061 = vmatprep.subr.mxu0 0.0
    %1062 = vmatpush1.xpose.msra.mxu0 0.0
    %1063 = vmatprep.subr.mxu0 0.0
    %1064 = vmatpush1.xpose.msra.mxu0 0.0
    %1065 = vmatprep.subr.mxu0 0.0
    %1066 = vmatpush1.xpose.msra.mxu0 0.0
    %1067 = vmatprep.subr.mxu0 0.0
    %1068 = vmatpush1.xpose.msra.mxu0 0.0
    %1069 = vmatprep.mubr.f32.mxu0 0.0
    %1070 = vmatmul.mubr.f32.gmra.mrb[0].mxu0 %v997
    %v1071 = vpop.f32.mrb[0].mxu0
    %v1072 = vadd.f32 0.0, %v1071
    %v1073 = vpop.f32.mrb[0].mxu0
    %1074 = vmatprep.mubr.f32.mxu0 0.0
    %1075 = vmatmul.mubr.f32.gmra.mrb[0].mxu0 %v999
    %v1076 = vpop.f32.mrb[0].mxu0
    %v1077 = vadd.f32 0.0, %v1076
    %v1078 = vpop.f32.mrb[0].mxu0
    %1079 = vdwg.mxu0
    %v1080 = vmul.f32 %v1072, 0.17677669
    %v1081 = vmul.f32 %v1077, 0.17677669
    %v1082 = vadd.f32 %v1080, %v121
    %v1083 = vadd.f32 %v1081, %v122
    %v1084 = vsel %vm475, %v1082, -inf
    %1085 = vmax.xlane.f32.xlu0 %v1084
    %v1086 = vpop.xlane.xlu0 %1085
    %v1087 = vsel %vm475, %v1083, -inf
    %1088 = vmax.xlane.f32.xlu0 %v1087
    %v1089 = vpop.xlane.xlu0 %1088
    %v1090 = vsub.f32 %v1082, %v1086
    %v1091 = vsub.f32 %v1083, %v1089
    %v1092 = vmul.f32 %v1090, 1.442695
    %v1093 = vpow.pop %v1092
    %v1094 = vmul.f32 %v1091, 1.442695
    %v1095 = vpow.pop %v1094
    %v1096 = vsel %vm475, %v1093, 0.0
    %1097 = vadd.xlane.f32.xlu0 %v1096
    %v1098 = vpop.xlane.xlu0 %1097
    %v1099 = vsel %vm475, %v1095, 0.0
    %1100 = vadd.xlane.f32.xlu0 %v1099
    %v1101 = vpop.xlane.xlu0 %1100
    %v1102 = vrcp.pop %v1098
    %v1103 = vrcp.pop %v1101
    %v1104 = vmul.f32 %v1093, %v1102
    %v1105 = vmul.f32 %v1095, %v1103
    %1106 = vrot.lane.b32.xlu0 %v375, 32
    %v1107 = vpop.permute.xlu0 %1106
    %1108 = vrot.lane.b32.xlu0 %v380, 32
    %v1109 = vpop.permute.xlu0 %1108
    %v1113 = vsel %vm475, %v1104, 0
    %v1116 = vsel %vm475, %v1105, 0
    %1118 = vmatprep.subr.mxu0 0.0
    %1119 = vmatpush1.msra.mxu0 %v1107
    %1120 = vmatprep.subr.mxu0 0.0
    %1121 = vmatpush1.msra.mxu0 %v1109
    %1122 = vmatprep.subr.mxu0 0.0
    %1123 = vmatpush1.msra.mxu0 0.0
    %1124 = vmatprep.subr.mxu0 0.0
    %1125 = vmatpush1.msra.mxu0 0.0
    %1126 = vmatprep.subr.mxu0 0.0
    %1127 = vmatpush1.msra.mxu0 0.0
    %1128 = vmatprep.subr.mxu0 0.0
    %1129 = vmatpush1.msra.mxu0 0.0
    %1130 = vmatprep.subr.mxu0 0.0
    %1131 = vmatpush1.msra.mxu0 0.0
    %1132 = vmatprep.subr.mxu0 0.0
    %1133 = vmatpush1.msra.mxu0 0.0
    %1134 = vmatprep.subr.mxu0 0.0
    %1135 = vmatpush1.msra.mxu0 0.0
    %1136 = vmatprep.subr.mxu0 0.0
    %1137 = vmatpush1.msra.mxu0 0.0
    %1138 = vmatprep.subr.mxu0 0.0
    %1139 = vmatpush1.msra.mxu0 0.0
    %1140 = vmatprep.subr.mxu0 0.0
    %1141 = vmatpush1.msra.mxu0 0.0
    %1142 = vmatprep.subr.mxu0 0.0
    %1143 = vmatpush1.msra.mxu0 0.0
    %1144 = vmatprep.subr.mxu0 0.0
    %1145 = vmatpush1.msra.mxu0 0.0
    %1146 = vmatprep.subr.mxu0 0.0
    %1147 = vmatpush1.msra.mxu0 0.0
    %1148 = vmatprep.subr.mxu0 0.0
    %1149 = vmatpush1.msra.mxu0 0.0
    %1150 = vmatprep.subr.mxu0 0.0
    %1151 = vmatpush1.msra.mxu0 0.0
    %1152 = vmatprep.subr.mxu0 0.0
    %1153 = vmatpush1.msra.mxu0 0.0
    %1154 = vmatprep.subr.mxu0 0.0
    %1155 = vmatpush1.msra.mxu0 0.0
    %1156 = vmatprep.subr.mxu0 0.0
    %1157 = vmatpush1.msra.mxu0 0.0
    %1158 = vmatprep.subr.mxu0 0.0
    %1159 = vmatpush1.msra.mxu0 0.0
    %1160 = vmatprep.subr.mxu0 0.0
    %1161 = vmatpush1.msra.mxu0 0.0
    %1162 = vmatprep.subr.mxu0 0.0
    %1163 = vmatpush1.msra.mxu0 0.0
    %1164 = vmatprep.subr.mxu0 0.0
    %1165 = vmatpush1.msra.mxu0 0.0
    %1166 = vmatprep.subr.mxu0 0.0
    %1167 = vmatpush1.msra.mxu0 0.0
    %1168 = vmatprep.subr.mxu0 0.0
    %1169 = vmatpush1.msra.mxu0 0.0
    %1170 = vmatprep.subr.mxu0 0.0
    %1171 = vmatpush1.msra.mxu0 0.0
    %1172 = vmatprep.subr.mxu0 0.0
    %1173 = vmatpush1.msra.mxu0 0.0
    %1174 = vmatprep.subr.mxu0 0.0
    %1175 = vmatpush1.msra.mxu0 0.0
    %1176 = vmatprep.subr.mxu0 0.0
    %1177 = vmatpush1.msra.mxu0 0.0
    %1178 = vmatprep.subr.mxu0 0.0
    %1179 = vmatpush1.msra.mxu0 0.0
    %1180 = vmatprep.subr.mxu0 0.0
    %1181 = vmatpush1.msra.mxu0 0.0
    %1182 = vmatprep.mubr.f32.mxu0 0.0
    %1183 = vmatmul.mubr.f32.gmra.mrb[0].mxu0 %v1113
    %v1184 = vpop.f32.mrb[0].mxu0
    %v1185 = vadd.f32 0.0, %v1184
    %v1186 = vpop.f32.mrb[0].mxu0
    %1187 = vmatprep.mubr.f32.mxu0 0.0
    %1188 = vmatmul.mubr.f32.gmra.mrb[0].mxu0 %v1116
    %v1189 = vpop.f32.mrb[0].mxu0
    %v1190 = vadd.f32 0.0, %v1189
    %v1191 = vpop.f32.mrb[0].mxu0
    %1192 = vdwg.mxu0
    %1195 = vrot.lane.b32.xlu0 %v777, 32
    %v1196 = vpop.permute.xlu0 %1195
    %1197 = vrot.lane.b32.xlu0 %v782, 32
    %v1198 = vpop.permute.xlu0 %1197
    %1203 = vrot.lane.b32.xlu0 %v981, 64
    %v1204 = vpop.permute.xlu0 %1203
    %1205 = vrot.lane.b32.xlu0 %v986, 64
    %v1206 = vpop.permute.xlu0 %1205
    %1211 = vrot.lane.b32.xlu0 %v1185, 96
    %v1212 = vpop.permute.xlu0 %1211
    %1213 = vrot.lane.b32.xlu0 %v1190, 96
    %v1214 = vpop.permute.xlu0 %1213
    %v1217 = vsel %vm383, %v571, %v1196
    %v1218 = vsel %vm383, %v576, %v1198
    %vm1219 = vcmask 523264
    %v1220 = vsel %vm1219, %v1217, %v1204
    %v1221 = vsel %vm1219, %v1218, %v1206
    %vm1222 = vcmask 785408
    %v1223 = vsel %vm1222, %v1220, %v1212
    %v1224 = vsel %vm1222, %v1221, %v1214
    %v1225 = vld [vmem:[%s6] sm:$0xff]
    %v1226 = vld [vmem:[%s6 + $0x8] sm:$0xff]
    %v1227 = vld [vmem:[%s6 + $0x10] sm:$0xff]
    %v1228 = vld [vmem:[%s6 + $0x18] sm:$0xff]
    %v1229 = vld [vmem:[%s6 + $0x20] sm:$0xff]
    %v1230 = vld [vmem:[%s6 + $0x28] sm:$0xff]
    %v1231 = vld [vmem:[%s6 + $0x30] sm:$0xff]
    %v1232 = vld [vmem:[%s6 + $0x38] sm:$0xff]
    %v1233 = vld [vmem:[%s6 + $0x40] sm:$0xff]
    %v1234 = vld [vmem:[%s6 + $0x48] sm:$0xff]
    %v1235 = vld [vmem:[%s6 + $0x50] sm:$0xff]
    %v1236 = vld [vmem:[%s6 + $0x58] sm:$0xff]
    %v1237 = vld [vmem:[%s6 + $0x60] sm:$0xff]
    %v1238 = vld [vmem:[%s6 + $0x68] sm:$0xff]
    %v1239 = vld [vmem:[%s6 + $0x70] sm:$0xff]
    %v1240 = vld [vmem:[%s6 + $0x78] sm:$0xff]
    %v1241 = vld [vmem:[%s7] sm:$0x1]
    %v1243 = vlaneseq
    %v1244 = vshrl.u32 %v1243, 7
    %v1245 = vsub.s32 0, %v1244
    %v1246 = vrot.slane %v1241, %v1245
    %1248 = vmatprep.subr.mxu0 0.0
    %1249 = vmatpush1.msra.mxu0 %v1225
    %1250 = vmatprep.subr.mxu0 0.0
    %1251 = vmatpush1.msra.mxu0 %v1226
    %1252 = vmatprep.subr.mxu0 0.0
    %1253 = vmatpush1.msra.mxu0 %v1227
    %1254 = vmatprep.subr.mxu0 0.0
    %1255 = vmatpush1.msra.mxu0 %v1228
    %1256 = vmatprep.subr.mxu0 0.0
    %1257 = vmatpush1.msra.mxu0 %v1229
    %1258 = vmatprep.subr.mxu0 0.0
    %1259 = vmatpush1.msra.mxu0 %v1230
    %1260 = vmatprep.subr.mxu0 0.0
    %1261 = vmatpush1.msra.mxu0 %v1231
    %1262 = vmatprep.subr.mxu0 0.0
    %1263 = vmatpush1.msra.mxu0 %v1232
    %1264 = vmatprep.subr.mxu0 0.0
    %1265 = vmatpush1.msra.mxu0 %v1233
    %1266 = vmatprep.subr.mxu0 0.0
    %1267 = vmatpush1.msra.mxu0 %v1234
    %1268 = vmatprep.subr.mxu0 0.0
    %1269 = vmatpush1.msra.mxu0 %v1235
    %1270 = vmatprep.subr.mxu0 0.0
    %1271 = vmatpush1.msra.mxu0 %v1236
    %1272 = vmatprep.subr.mxu0 0.0
    %1273 = vmatpush1.msra.mxu0 %v1237
    %1274 = vmatprep.subr.mxu0 0.0
    %1275 = vmatpush1.msra.mxu0 %v1238
    %1276 = vmatprep.subr.mxu0 0.0
    %1277 = vmatpush1.msra.mxu0 %v1239
    %1278 = vmatprep.subr.mxu0 0.0
    %1279 = vmatpush1.msra.mxu0 %v1240
    %1280 = vmatprep.subr.mxu0 0.0
    %1281 = vmatpush1.msra.mxu0 0.0
    %1282 = vmatprep.subr.mxu0 0.0
    %1283 = vmatpush1.msra.mxu0 0.0
    %1284 = vmatprep.subr.mxu0 0.0
    %1285 = vmatpush1.msra.mxu0 0.0
    %1286 = vmatprep.subr.mxu0 0.0
    %1287 = vmatpush1.msra.mxu0 0.0
    %1288 = vmatprep.subr.mxu0 0.0
    %1289 = vmatpush1.msra.mxu0 0.0
    %1290 = vmatprep.subr.mxu0 0.0
    %1291 = vmatpush1.msra.mxu0 0.0
    %1292 = vmatprep.subr.mxu0 0.0
    %1293 = vmatpush1.msra.mxu0 0.0
    %1294 = vmatprep.subr.mxu0 0.0
    %1295 = vmatpush1.msra.mxu0 0.0
    %1296 = vmatprep.subr.mxu0 0.0
    %1297 = vmatpush1.msra.mxu0 0.0
    %1298 = vmatprep.subr.mxu0 0.0
    %1299 = vmatpush1.msra.mxu0 0.0
    %1300 = vmatprep.subr.mxu0 0.0
    %1301 = vmatpush1.msra.mxu0 0.0
    %1302 = vmatprep.subr.mxu0 0.0
    %1303 = vmatpush1.msra.mxu0 0.0
    %1304 = vmatprep.subr.mxu0 0.0
    %1305 = vmatpush1.msra.mxu0 0.0
    %1306 = vmatprep.subr.mxu0 0.0
    %1307 = vmatpush1.msra.mxu0 0.0
    %1308 = vmatprep.subr.mxu0 0.0
    %1309 = vmatpush1.msra.mxu0 0.0
    %1310 = vmatprep.subr.mxu0 0.0
    %1311 = vmatpush1.msra.mxu0 0.0
    %1312 = vmatprep.mubr.f32.mxu0 0.0
    %1313 = vmatmul.mubr.f32.gmra.mrb[0].mxu0 %v1223
    %v1314 = vpop.f32.mrb[0].mxu0
    %v1315 = vadd.f32 %v1246, %v1314
    %v1316 = vpop.f32.mrb[0].mxu0
    %1317 = vmatprep.mubr.f32.mxu0 0.0
    %1318 = vmatmul.mubr.f32.gmra.mrb[0].mxu0 %v1224
    %v1319 = vpop.f32.mrb[0].mxu0
    %v1320 = vadd.f32 %v1246, %v1319
    %v1321 = vpop.f32.mrb[0].mxu0
    %1322 = vdwg.mxu0
    %v1323 = vadd.f32 %v1315, %v164
    %v1324 = vadd.f32 %v1320, %v165
    %v1325 = vld [vmem:[%s8] sm:$0x1]
    %v1326 = vld [vmem:[%s9] sm:$0x1]
    %1327 = vadd.xlane.f32.xlu0 %v1323
    %v1328 = vpop.xlane.xlu0 %1327
    %1329 = vadd.xlane.f32.xlu0 %v1324
    %v1330 = vpop.xlane.xlu0 %1329
    %v1331 = vmul.f32 %v1328, %v131
    %v1332 = vmul.f32 %v1330, %v131
    %v1333 = vsub.f32 %v1323, %v1331
    %v1334 = vsub.f32 %v1324, %v1332
    %v1335 = vmul.f32 %v1333, %v1333
    %v1336 = vmul.f32 %v1334, %v1334
    %1337 = vadd.xlane.f32.xlu0 %v1335
    %v1338 = vpop.xlane.xlu0 %1337
    %1339 = vadd.xlane.f32.xlu0 %v1336
    %v1340 = vpop.xlane.xlu0 %1339
    %v1341 = vmul.f32 %v1338, %v131
    %v1342 = vmul.f32 %v1340, %v131
    %v1343 = vadd.f32 %v1341, 1e-12
    %v1344 = vadd.f32 %v1342, 1e-12
    %v1345 = vrsqrt.pop %v1343
    %v1346 = vrsqrt.pop %v1344
    %v1347 = vmul.f32 %v1333, %v1345
    %v1348 = vmul.f32 %v1334, %v1346
    %v1350 = vlaneseq
    %v1351 = vshrl.u32 %v1350, 7
    %v1352 = vsub.s32 0, %v1351
    %v1353 = vrot.slane %v1325, %v1352
    %v1355 = vmul.f32 %v1347, %v1353
    %v1356 = vmul.f32 %v1348, %v1353
    %v1358 = vlaneseq
    %v1359 = vshrl.u32 %v1358, 7
    %v1360 = vsub.s32 0, %v1359
    %v1361 = vrot.slane %v1326, %v1360
    %v1363 = vadd.f32 %v1355, %v1361
    %v1364 = vadd.f32 %v1356, %v1361
    %v1365 = vld [vmem:[#allocation5] sm:$0xff]
    %v1366 = vld [vmem:[#allocation5 + $0x8] sm:$0xff]
    %v1367 = vld [vmem:[#allocation5 + $0x10] sm:$0xff]
    %v1368 = vld [vmem:[#allocation5 + $0x18] sm:$0xff]
    %v1369 = vld [vmem:[#allocation5 + $0x20] sm:$0xff]
    %v1370 = vld [vmem:[#allocation5 + $0x28] sm:$0xff]
    %v1371 = vld [vmem:[#allocation5 + $0x30] sm:$0xff]
    %v1372 = vld [vmem:[#allocation5 + $0x38] sm:$0xff]
    %v1373 = vld [vmem:[#allocation5 + $0x40] sm:$0xff]
    %v1374 = vld [vmem:[#allocation5 + $0x48] sm:$0xff]
    %v1375 = vld [vmem:[#allocation5 + $0x50] sm:$0xff]
    %v1376 = vld [vmem:[#allocation5 + $0x58] sm:$0xff]
    %v1377 = vld [vmem:[#allocation5 + $0x60] sm:$0xff]
    %v1378 = vld [vmem:[#allocation5 + $0x68] sm:$0xff]
    %v1379 = vld [vmem:[#allocation5 + $0x70] sm:$0xff]
    %v1380 = vld [vmem:[#allocation5 + $0x78] sm:$0xff]
    %v1381 = vld [vmem:[#allocation5 + $0x80] sm:$0xff]
    %v1382 = vld [vmem:[#allocation5 + $0x88] sm:$0xff]
    %v1383 = vld [vmem:[#allocation5 + $0x90] sm:$0xff]
    %v1384 = vld [vmem:[#allocation5 + $0x98] sm:$0xff]
    %v1385 = vld [vmem:[#allocation5 + $0xa0] sm:$0xff]
    %v1386 = vld [vmem:[#allocation5 + $0xa8] sm:$0xff]
    %v1387 = vld [vmem:[#allocation5 + $0xb0] sm:$0xff]
    %v1388 = vld [vmem:[#allocation5 + $0xb8] sm:$0xff]
    %v1389 = vld [vmem:[#allocation5 + $0xc0] sm:$0xff]
    %v1390 = vld [vmem:[#allocation5 + $0xc8] sm:$0xff]
    %v1391 = vld [vmem:[#allocation5 + $0xd0] sm:$0xff]
    %v1392 = vld [vmem:[#allocation5 + $0xd8] sm:$0xff]
    %v1393 = vld [vmem:[#allocation5 + $0xe0] sm:$0xff]
    %v1394 = vld [vmem:[#allocation5 + $0xe8] sm:$0xff]
    %v1395 = vld [vmem:[#allocation5 + $0xf0] sm:$0xff]
    %v1396 = vld [vmem:[#allocation5 + $0xf8] sm:$0xff]
    %v1397 = vld [vmem:[#allocation5 + $0x100] sm:$0xff]
    %v1398 = vld [vmem:[#allocation5 + $0x108] sm:$0xff]
    %v1399 = vld [vmem:[#allocation5 + $0x110] sm:$0xff]
    %v1400 = vld [vmem:[#allocation5 + $0x118] sm:$0xff]
    %v1401 = vld [vmem:[#allocation5 + $0x120] sm:$0xff]
    %v1402 = vld [vmem:[#allocation5 + $0x128] sm:$0xff]
    %v1403 = vld [vmem:[#allocation5 + $0x130] sm:$0xff]
    %v1404 = vld [vmem:[#allocation5 + $0x138] sm:$0xff]
    %v1405 = vld [vmem:[#allocation5 + $0x140] sm:$0xff]
    %v1406 = vld [vmem:[#allocation5 + $0x148] sm:$0xff]
    %v1407 = vld [vmem:[#allocation5 + $0x150] sm:$0xff]
    %v1408 = vld [vmem:[#allocation5 + $0x158] sm:$0xff]
    %v1409 = vld [vmem:[#allocation5 + $0x160] sm:$0xff]
    %v1410 = vld [vmem:[#allocation5 + $0x168] sm:$0xff]
    %v1411 = vld [vmem:[#allocation5 + $0x170] sm:$0xff]
    %v1412 = vld [vmem:[#allocation5 + $0x178] sm:$0xff]
    %v1413 = vld [vmem:[#allocation5 + $0x180] sm:$0xff]
    %v1414 = vld [vmem:[#allocation5 + $0x188] sm:$0xff]
    %v1415 = vld [vmem:[#allocation5 + $0x190] sm:$0xff]
    %v1416 = vld [vmem:[#allocation5 + $0x198] sm:$0xff]
    %v1417 = vld [vmem:[#allocation5 + $0x1a0] sm:$0xff]
    %v1418 = vld [vmem:[#allocation5 + $0x1a8] sm:$0xff]
    %v1419 = vld [vmem:[#allocation5 + $0x1b0] sm:$0xff]
    %v1420 = vld [vmem:[#allocation5 + $0x1b8] sm:$0xff]
    %v1421 = vld [vmem:[#allocation5 + $0x1c0] sm:$0xff]
    %v1422 = vld [vmem:[#allocation5 + $0x1c8] sm:$0xff]
    %v1423 = vld [vmem:[#allocation5 + $0x1d0] sm:$0xff]
    %v1424 = vld [vmem:[#allocation5 + $0x1d8] sm:$0xff]
    %v1425 = vld [vmem:[#allocation5 + $0x1e0] sm:$0xff]
    %v1426 = vld [vmem:[#allocation5 + $0x1e8] sm:$0xff]
    %v1427 = vld [vmem:[#allocation5 + $0x1f0] sm:$0xff]
    %v1428 = vld [vmem:[#allocation5 + $0x1f8] sm:$0xff]
    %v1429 = vld [vmem:[%s11] sm:$0xf]
    %v1431 = vlaneseq
    %v1432 = vshrl.u32 %v1431, 7
    %v1433 = vsub.s32 0, %v1432
    %v1434 = vrot.slane %v1429, %v1433
    %v1435 = vlaneseq
    %v1436 = vshrl.u32 %v1435, 7
    %v1437 = vsub.s32 1, %v1436
    %v1438 = vrot.slane %v1429, %v1437
    %v1439 = vlaneseq
    %v1440 = vshrl.u32 %v1439, 7
    %v1441 = vsub.s32 2, %v1440
    %v1442 = vrot.slane %v1429, %v1441
    %v1443 = vlaneseq
    %v1444 = vshrl.u32 %v1443, 7
    %v1445 = vsub.s32 3, %v1444
    %v1446 = vrot.slane %v1429, %v1445
    %1451 = vmatprep.subr.mxu0 %v1366
    %1452 = vmatpush1.msra.mxu0 %v1365
    %1453 = vmatprep.subr.mxu0 %v1370
    %1454 = vmatpush1.msra.mxu0 %v1369
    %1455 = vmatprep.subr.mxu0 %v1374
    %1456 = vmatpush1.msra.mxu0 %v1373
    %1457 = vmatprep.subr.mxu0 %v1378
    %1458 = vmatpush1.msra.mxu0 %v1377
    %1459 = vmatprep.subr.mxu0 %v1382
    %1460 = vmatpush1.msra.mxu0 %v1381
    %1461 = vmatprep.subr.mxu0 %v1386
    %1462 = vmatpush1.msra.mxu0 %v1385
    %1463 = vmatprep.subr.mxu0 %v1390
    %1464 = vmatpush1.msra.mxu0 %v1389
    %1465 = vmatprep.subr.mxu0 %v1394
    %1466 = vmatpush1.msra.mxu0 %v1393
    %1467 = vmatprep.subr.mxu0 %v1398
    %1468 = vmatpush1.msra.mxu0 %v1397
    %1469 = vmatprep.subr.mxu0 %v1402
    %1470 = vmatpush1.msra.mxu0 %v1401
    %1471 = vmatprep.subr.mxu0 %v1406
    %1472 = vmatpush1.msra.mxu0 %v1405
    %1473 = vmatprep.subr.mxu0 %v1410
    %1474 = vmatpush1.msra.mxu0 %v1409
    %1475 = vmatprep.subr.mxu0 %v1414
    %1476 = vmatpush1.msra.mxu0 %v1413
    %1477 = vmatprep.subr.mxu0 %v1418
    %1478 = vmatpush1.msra.mxu0 %v1417
    %1479 = vmatprep.subr.mxu0 %v1422
    %1480 = vmatpush1.msra.mxu0 %v1421
    %1481 = vmatprep.subr.mxu0 %v1426
    %1482 = vmatpush1.msra.mxu0 %v1425
    %1483 = vmatprep.subr.mxu0 0.0
    %1484 = vmatpush1.msra.mxu0 0.0
    %1485 = vmatprep.subr.mxu0 0.0
    %1486 = vmatpush1.msra.mxu0 0.0
    %1487 = vmatprep.subr.mxu0 0.0
    %1488 = vmatpush1.msra.mxu0 0.0
    %1489 = vmatprep.subr.mxu0 0.0
    %1490 = vmatpush1.msra.mxu0 0.0
    %1491 = vmatprep.subr.mxu0 0.0
    %1492 = vmatpush1.msra.mxu0 0.0
    %1493 = vmatprep.subr.mxu0 0.0
    %1494 = vmatpush1.msra.mxu0 0.0
    %1495 = vmatprep.subr.mxu0 0.0
    %1496 = vmatpush1.msra.mxu0 0.0
    %1497 = vmatprep.subr.mxu0 0.0
    %1498 = vmatpush1.msra.mxu0 0.0
    %1499 = vmatprep.subr.mxu0 0.0
    %1500 = vmatpush1.msra.mxu0 0.0
    %1501 = vmatprep.subr.mxu0 0.0
    %1502 = vmatpush1.msra.mxu0 0.0
    %1503 = vmatprep.subr.mxu0 0.0
    %1504 = vmatpush1.msra.mxu0 0.0
    %1505 = vmatprep.subr.mxu0 0.0
    %1506 = vmatpush1.msra.mxu0 0.0
    %1507 = vmatprep.subr.mxu0 0.0
    %1508 = vmatpush1.msra.mxu0 0.0
    %1509 = vmatprep.subr.mxu0 0.0
    %1510 = vmatpush1.msra.mxu0 0.0
    %1511 = vmatprep.subr.mxu0 0.0
    %1512 = vmatpush1.msra.mxu0 0.0
    %1513 = vmatprep.subr.mxu0 0.0
    %1514 = vmatpush1.msra.mxu0 0.0
    %1515 = vmatprep.mubr.f32.mxu0 0.0
    %1516 = vmatmul.mubr.f32.gmra.mrb[0].mxu0 %v1363
    %v1517 = vpop.f32.mrb[0].mxu0
    %v1518 = vadd.f32 %v1434, %v1517
    %v1519 = vpop.f32.mrb[0].mxu0
    %v1520 = vadd.f32 %v1438, %v1519
    %1521 = vmatprep.mubr.f32.mxu0 0.0
    %1522 = vmatmul.mubr.f32.gmra.mrb[0].mxu0 %v1364
    %v1523 = vpop.f32.mrb[0].mxu0
    %v1524 = vadd.f32 %v1434, %v1523
    %v1525 = vpop.f32.mrb[0].mxu0
    %v1526 = vadd.f32 %v1438, %v1525
    %1527 = vdwg.mxu0
    %1528 = vmatprep.subr.mxu0 %v1368
    %1529 = vmatpush1.msra.mxu0 %v1367
    %1530 = vmatprep.subr.mxu0 %v1372
    %1531 = vmatpush1.msra.mxu0 %v1371
    %1532 = vmatprep.subr.mxu0 %v1376
    %1533 = vmatpush1.msra.mxu0 %v1375
    %1534 = vmatprep.subr.mxu0 %v1380
    %1535 = vmatpush1.msra.mxu0 %v1379
    %1536 = vmatprep.subr.mxu0 %v1384
    %1537 = vmatpush1.msra.mxu0 %v1383
    %1538 = vmatprep.subr.mxu0 %v1388
    %1539 = vmatpush1.msra.mxu0 %v1387
    %1540 = vmatprep.subr.mxu0 %v1392
    %1541 = vmatpush1.msra.mxu0 %v1391
    %1542 = vmatprep.subr.mxu0 %v1396
    %1543 = vmatpush1.msra.mxu0 %v1395
    %1544 = vmatprep.subr.mxu0 %v1400
    %1545 = vmatpush1.msra.mxu0 %v1399
    %1546 = vmatprep.subr.mxu0 %v1404
    %1547 = vmatpush1.msra.mxu0 %v1403
    %1548 = vmatprep.subr.mxu0 %v1408
    %1549 = vmatpush1.msra.mxu0 %v1407
    %1550 = vmatprep.subr.mxu0 %v1412
    %1551 = vmatpush1.msra.mxu0 %v1411
    %1552 = vmatprep.subr.mxu0 %v1416
    %1553 = vmatpush1.msra.mxu0 %v1415
    %1554 = vmatprep.subr.mxu0 %v1420
    %1555 = vmatpush1.msra.mxu0 %v1419
    %1556 = vmatprep.subr.mxu0 %v1424
    %1557 = vmatpush1.msra.mxu0 %v1423
    %1558 = vmatprep.subr.mxu0 %v1428
    %1559 = vmatpush1.msra.mxu0 %v1427
    %1560 = vmatprep.subr.mxu0 0.0
    %1561 = vmatpush1.msra.mxu0 0.0
    %1562 = vmatprep.subr.mxu0 0.0
    %1563 = vmatpush1.msra.mxu0 0.0
    %1564 = vmatprep.subr.mxu0 0.0
    %1565 = vmatpush1.msra.mxu0 0.0
    %1566 = vmatprep.subr.mxu0 0.0
    %1567 = vmatpush1.msra.mxu0 0.0
    %1568 = vmatprep.subr.mxu0 0.0
    %1569 = vmatpush1.msra.mxu0 0.0
    %1570 = vmatprep.subr.mxu0 0.0
    %1571 = vmatpush1.msra.mxu0 0.0
    %1572 = vmatprep.subr.mxu0 0.0
    %1573 = vmatpush1.msra.mxu0 0.0
    %1574 = vmatprep.subr.mxu0 0.0
    %1575 = vmatpush1.msra.mxu0 0.0
    %1576 = vmatprep.subr.mxu0 0.0
    %1577 = vmatpush1.msra.mxu0 0.0
    %1578 = vmatprep.subr.mxu0 0.0
    %1579 = vmatpush1.msra.mxu0 0.0
    %1580 = vmatprep.subr.mxu0 0.0
    %1581 = vmatpush1.msra.mxu0 0.0
    %1582 = vmatprep.subr.mxu0 0.0
    %1583 = vmatpush1.msra.mxu0 0.0
    %1584 = vmatprep.subr.mxu0 0.0
    %1585 = vmatpush1.msra.mxu0 0.0
    %1586 = vmatprep.subr.mxu0 0.0
    %1587 = vmatpush1.msra.mxu0 0.0
    %1588 = vmatprep.subr.mxu0 0.0
    %1589 = vmatpush1.msra.mxu0 0.0
    %1590 = vmatprep.subr.mxu0 0.0
    %1591 = vmatpush1.msra.mxu0 0.0
    %1592 = vmatprep.mubr.f32.mxu0 0.0
    %1593 = vmatmul.mubr.f32.gmra.mrb[0].mxu0 %v1363
    %v1594 = vpop.f32.mrb[0].mxu0
    %v1595 = vadd.f32 %v1442, %v1594
    %v1596 = vpop.f32.mrb[0].mxu0
    %v1597 = vadd.f32 %v1446, %v1596
    %1598 = vmatprep.mubr.f32.mxu0 0.0
    %1599 = vmatmul.mubr.f32.gmra.mrb[0].mxu0 %v1364
    %v1600 = vpop.f32.mrb[0].mxu0
    %v1601 = vadd.f32 %v1442, %v1600
    %v1602 = vpop.f32.mrb[0].mxu0
    %v1603 = vadd.f32 %v1446, %v1602
    %1604 = vdwg.mxu0
    %v1605 = vmul.f32 %v1518, 0.5
    %v1606 = vmul.f32 %v1520, 0.5
    %v1607 = vmul.f32 %v1595, 0.5
    %v1608 = vmul.f32 %v1597, 0.5
    %v1609 = vmul.f32 %v1524, 0.5
    %v1610 = vmul.f32 %v1526, 0.5
    %v1611 = vmul.f32 %v1601, 0.5
    %v1612 = vmul.f32 %v1603, 0.5
    %v1613 = vmul.f32 %v1518, 0.044715
    %v1614 = vmul.f32 %v1520, 0.044715
    %v1615 = vmul.f32 %v1595, 0.044715
    %v1616 = vmul.f32 %v1597, 0.044715
    %v1617 = vmul.f32 %v1524, 0.044715
    %v1618 = vmul.f32 %v1526, 0.044715
    %v1619 = vmul.f32 %v1601, 0.044715
    %v1620 = vmul.f32 %v1603, 0.044715
    %v1621 = vmul.f32 %v1613, %v1518
    %v1622 = vmul.f32 %v1614, %v1520
    %v1623 = vmul.f32 %v1615, %v1595
    %v1624 = vmul.f32 %v1616, %v1597
    %v1625 = vmul.f32 %v1617, %v1524
    %v1626 = vmul.f32 %v1618, %v1526
    %v1627 = vmul.f32 %v1619, %v1601
    %v1628 = vmul.f32 %v1620, %v1603
    %v1629 = vmul.f32 %v1621, %v1518
    %v1630 = vmul.f32 %v1622, %v1520
    %v1631 = vmul.f32 %v1623, %v1595
    %v1632 = vmul.f32 %v1624, %v1597
    %v1633 = vmul.f32 %v1625, %v1524
    %v1634 = vmul.f32 %v1626, %v1526
    %v1635 = vmul.f32 %v1627, %v1601
    %v1636 = vmul.f32 %v1628, %v1603
    %v1637 = vadd.f32 %v1518, %v1629
    %v1638 = vadd.f32 %v1520, %v1630
    %v1639 = vadd.f32 %v1595, %v1631
    %v1640 = vadd.f32 %v1597, %v1632
    %v1641 = vadd.f32 %v1524, %v1633
    %v1642 = vadd.f32 %v1526, %v1634
    %v1643 = vadd.f32 %v1601, %v1635
    %v1644 = vadd.f32 %v1603, %v1636
    %v1645 = vmul.f32 %v1637, 0.7978846
    %v1646 = vmul.f32 %v1638, 0.7978846
    %v1647 = vmul.f32 %v1639, 0.7978846
    %v1648 = vmul.f32 %v1640, 0.7978846
    %v1649 = vmul.f32 %v1641, 0.7978846
    %v1650 = vmul.f32 %v1642, 0.7978846
    %v1651 = vmul.f32 %v1643, 0.7978846
    %v1652 = vmul.f32 %v1644, 0.7978846
    %v1653 = vtanh.pop %v1645
    %v1654 = vtanh.pop %v1646
    %v1655 = vtanh.pop %v1647
    %v1656 = vtanh.pop %v1648
    %v1657 = vtanh.pop %v1649
    %v1658 = vtanh.pop %v1650
    %v1659 = vtanh.pop %v1651
    %v1660 = vtanh.pop %v1652
    %v1661 = vadd.f32 %v1653, 1.0
    %v1662 = vadd.f32 %v1654, 1.0
    %v1663 = vadd.f32 %v1655, 1.0
    %v1664 = vadd.f32 %v1656, 1.0
    %v1665 = vadd.f32 %v1657, 1.0
    %v1666 = vadd.f32 %v1658, 1.0
    %v1667 = vadd.f32 %v1659, 1.0
    %v1668 = vadd.f32 %v1660, 1.0
    %v1669 = vmul.f32 %v1605, %v1661
    %v1670 = vmul.f32 %v1606, %v1662
    %v1671 = vmul.f32 %v1607, %v1663
    %v1672 = vmul.f32 %v1608, %v1664
    %v1673 = vmul.f32 %v1609, %v1665
    %v1674 = vmul.f32 %v1610, %v1666
    %v1675 = vmul.f32 %v1611, %v1667
    %v1676 = vmul.f32 %v1612, %v1668
    %v1677 = vld [vmem:[#allocation7] sm:$0xff]
    %v1678 = vld [vmem:[#allocation7 + $0x8] sm:$0xff]
    %v1679 = vld [vmem:[#allocation7 + $0x10] sm:$0xff]
    %v1680 = vld [vmem:[#allocation7 + $0x18] sm:$0xff]
    %v1681 = vld [vmem:[#allocation7 + $0x20] sm:$0xff]
    %v1682 = vld [vmem:[#allocation7 + $0x28] sm:$0xff]
    %v1683 = vld [vmem:[#allocation7 + $0x30] sm:$0xff]
    %v1684 = vld [vmem:[#allocation7 + $0x38] sm:$0xff]
    %v1685 = vld [vmem:[#allocation7 + $0x40] sm:$0xff]
    %v1686 = vld [vmem:[#allocation7 + $0x48] sm:$0xff]
    %v1687 = vld [vmem:[#allocation7 + $0x50] sm:$0xff]
    %v1688 = vld [vmem:[#allocation7 + $0x58] sm:$0xff]
    %v1689 = vld [vmem:[#allocation7 + $0x60] sm:$0xff]
    %v1690 = vld [vmem:[#allocation7 + $0x68] sm:$0xff]
    %v1691 = vld [vmem:[#allocation7 + $0x70] sm:$0xff]
    %v1692 = vld [vmem:[#allocation7 + $0x78] sm:$0xff]
    %v1693 = vld [vmem:[#allocation7 + $0x80] sm:$0xff]
    %v1694 = vld [vmem:[#allocation7 + $0x88] sm:$0xff]
    %v1695 = vld [vmem:[#allocation7 + $0x90] sm:$0xff]
    %v1696 = vld [vmem:[#allocation7 + $0x98] sm:$0xff]
    %v1697 = vld [vmem:[#allocation7 + $0xa0] sm:$0xff]
    %v1698 = vld [vmem:[#allocation7 + $0xa8] sm:$0xff]
    %v1699 = vld [vmem:[#allocation7 + $0xb0] sm:$0xff]
    %v1700 = vld [vmem:[#allocation7 + $0xb8] sm:$0xff]
    %v1701 = vld [vmem:[#allocation7 + $0xc0] sm:$0xff]
    %v1702 = vld [vmem:[#allocation7 + $0xc8] sm:$0xff]
    %v1703 = vld [vmem:[#allocation7 + $0xd0] sm:$0xff]
    %v1704 = vld [vmem:[#allocation7 + $0xd8] sm:$0xff]
    %v1705 = vld [vmem:[#allocation7 + $0xe0] sm:$0xff]
    %v1706 = vld [vmem:[#allocation7 + $0xe8] sm:$0xff]
    %v1707 = vld [vmem:[#allocation7 + $0xf0] sm:$0xff]
    %v1708 = vld [vmem:[#allocation7 + $0xf8] sm:$0xff]
    %v1709 = vld [vmem:[#allocation7 + $0x100] sm:$0xff]
    %v1710 = vld [vmem:[#allocation7 + $0x108] sm:$0xff]
    %v1711 = vld [vmem:[#allocation7 + $0x110] sm:$0xff]
    %v1712 = vld [vmem:[#allocation7 + $0x118] sm:$0xff]
    %v1713 = vld [vmem:[#allocation7 + $0x120] sm:$0xff]
    %v1714 = vld [vmem:[#allocation7 + $0x128] sm:$0xff]
    %v1715 = vld [vmem:[#allocation7 + $0x130] sm:$0xff]
    %v1716 = vld [vmem:[#allocation7 + $0x138] sm:$0xff]
    %v1717 = vld [vmem:[#allocation7 + $0x140] sm:$0xff]
    %v1718 = vld [vmem:[#allocation7 + $0x148] sm:$0xff]
    %v1719 = vld [vmem:[#allocation7 + $0x150] sm:$0xff]
    %v1720 = vld [vmem:[#allocation7 + $0x158] sm:$0xff]
    %v1721 = vld [vmem:[#allocation7 + $0x160] sm:$0xff]
    %v1722 = vld [vmem:[#allocation7 + $0x168] sm:$0xff]
    %v1723 = vld [vmem:[#allocation7 + $0x170] sm:$0xff]
    %v1724 = vld [vmem:[#allocation7 + $0x178] sm:$0xff]
    %v1725 = vld [vmem:[#allocation7 + $0x180] sm:$0xff]
    %v1726 = vld [vmem:[#allocation7 + $0x188] sm:$0xff]
    %v1727 = vld [vmem:[#allocation7 + $0x190] sm:$0xff]
    %v1728 = vld [vmem:[#allocation7 + $0x198] sm:$0xff]
    %v1729 = vld [vmem:[#allocation7 + $0x1a0] sm:$0xff]
    %v1730 = vld [vmem:[#allocation7 + $0x1a8] sm:$0xff]
    %v1731 = vld [vmem:[#allocation7 + $0x1b0] sm:$0xff]
    %v1732 = vld [vmem:[#allocation7 + $0x1b8] sm:$0xff]
    %v1733 = vld [vmem:[#allocation7 + $0x1c0] sm:$0xff]
    %v1734 = vld [vmem:[#allocation7 + $0x1c8] sm:$0xff]
    %v1735 = vld [vmem:[#allocation7 + $0x1d0] sm:$0xff]
    %v1736 = vld [vmem:[#allocation7 + $0x1d8] sm:$0xff]
    %v1737 = vld [vmem:[#allocation7 + $0x1e0] sm:$0xff]
    %v1738 = vld [vmem:[#allocation7 + $0x1e8] sm:$0xff]
    %v1739 = vld [vmem:[#allocation7 + $0x1f0] sm:$0xff]
    %v1740 = vld [vmem:[#allocation7 + $0x1f8] sm:$0xff]
    %v1741 = vld [vmem:[%s13] sm:$0x1]
    %v1743 = vlaneseq
    %v1744 = vshrl.u32 %v1743, 7
    %v1745 = vsub.s32 0, %v1744
    %v1746 = vrot.slane %v1741, %v1745
    %1748 = vmatprep.subr.mxu0 0.0
    %1749 = vmatpush1.msra.mxu0 %v1677
    %1750 = vmatprep.subr.mxu0 0.0
    %1751 = vmatpush1.msra.mxu0 %v1678
    %1752 = vmatprep.subr.mxu0 0.0
    %1753 = vmatpush1.msra.mxu0 %v1679
    %1754 = vmatprep.subr.mxu0 0.0
    %1755 = vmatpush1.msra.mxu0 %v1680
    %1756 = vmatprep.subr.mxu0 0.0
    %1757 = vmatpush1.msra.mxu0 %v1681
    %1758 = vmatprep.subr.mxu0 0.0
    %1759 = vmatpush1.msra.mxu0 %v1682
    %1760 = vmatprep.subr.mxu0 0.0
    %1761 = vmatpush1.msra.mxu0 %v1683
    %1762 = vmatprep.subr.mxu0 0.0
    %1763 = vmatpush1.msra.mxu0 %v1684
    %1764 = vmatprep.subr.mxu0 0.0
    %1765 = vmatpush1.msra.mxu0 %v1685
    %1766 = vmatprep.subr.mxu0 0.0
    %1767 = vmatpush1.msra.mxu0 %v1686
    %1768 = vmatprep.subr.mxu0 0.0
    %1769 = vmatpush1.msra.mxu0 %v1687
    %1770 = vmatprep.subr.mxu0 0.0
    %1771 = vmatpush1.msra.mxu0 %v1688
    %1772 = vmatprep.subr.mxu0 0.0
    %1773 = vmatpush1.msra.mxu0 %v1689
    %1774 = vmatprep.subr.mxu0 0.0
    %1775 = vmatpush1.msra.mxu0 %v1690
    %1776 = vmatprep.subr.mxu0 0.0
    %1777 = vmatpush1.msra.mxu0 %v1691
    %1778 = vmatprep.subr.mxu0 0.0
    %1779 = vmatpush1.msra.mxu0 %v1692
    %1780 = vmatprep.subr.mxu0 0.0
    %1781 = vmatpush1.msra.mxu0 %v1693
    %1782 = vmatprep.subr.mxu0 0.0
    %1783 = vmatpush1.msra.mxu0 %v1694
    %1784 = vmatprep.subr.mxu0 0.0
    %1785 = vmatpush1.msra.mxu0 %v1695
    %1786 = vmatprep.subr.mxu0 0.0
    %1787 = vmatpush1.msra.mxu0 %v1696
    %1788 = vmatprep.subr.mxu0 0.0
    %1789 = vmatpush1.msra.mxu0 %v1697
    %1790 = vmatprep.subr.mxu0 0.0
    %1791 = vmatpush1.msra.mxu0 %v1698
    %1792 = vmatprep.subr.mxu0 0.0
    %1793 = vmatpush1.msra.mxu0 %v1699
    %1794 = vmatprep.subr.mxu0 0.0
    %1795 = vmatpush1.msra.mxu0 %v1700
    %1796 = vmatprep.subr.mxu0 0.0
    %1797 = vmatpush1.msra.mxu0 %v1701
    %1798 = vmatprep.subr.mxu0 0.0
    %1799 = vmatpush1.msra.mxu0 %v1702
    %1800 = vmatprep.subr.mxu0 0.0
    %1801 = vmatpush1.msra.mxu0 %v1703
    %1802 = vmatprep.subr.mxu0 0.0
    %1803 = vmatpush1.msra.mxu0 %v1704
    %1804 = vmatprep.subr.mxu0 0.0
    %1805 = vmatpush1.msra.mxu0 %v1705
    %1806 = vmatprep.subr.mxu0 0.0
    %1807 = vmatpush1.msra.mxu0 %v1706
    %1808 = vmatprep.subr.mxu0 0.0
    %1809 = vmatpush1.msra.mxu0 %v1707
    %1810 = vmatprep.subr.mxu0 0.0
    %1811 = vmatpush1.msra.mxu0 %v1708
    %1812 = vmatprep.mubr.f32.mxu0 %v1670
    %1813 = vmatmul.mubr.f32.gmra.mrb[0].mxu0 %v1669
    %v1814 = vpop.f32.mrb[0].mxu0
    %v1815 = vadd.f32 %v1746, %v1814
    %v1816 = vpop.f32.mrb[0].mxu0
    %1817 = vmatprep.mubr.f32.mxu0 %v1674
    %1818 = vmatmul.mubr.f32.gmra.mrb[0].mxu0 %v1673
    %v1819 = vpop.f32.mrb[0].mxu0
    %v1820 = vadd.f32 %v1746, %v1819
    %v1821 = vpop.f32.mrb[0].mxu0
    %1822 = vdwg.mxu0
    %1823 = vmatprep.subr.mxu0 0.0
    %1824 = vmatpush1.msra.mxu0 %v1709
    %1825 = vmatprep.subr.mxu0 0.0
    %1826 = vmatpush1.msra.mxu0 %v1710
    %1827 = vmatprep.subr.mxu0 0.0
    %1828 = vmatpush1.msra.mxu0 %v1711
    %1829 = vmatprep.subr.mxu0 0.0
    %1830 = vmatpush1.msra.mxu0 %v1712
    %1831 = vmatprep.subr.mxu0 0.0
    %1832 = vmatpush1.msra.mxu0 %v1713
    %1833 = vmatprep.subr.mxu0 0.0
    %1834 = vmatpush1.msra.mxu0 %v1714
    %1835 = vmatprep.subr.mxu0 0.0
    %1836 = vmatpush1.msra.mxu0 %v1715
    %1837 = vmatprep.subr.mxu0 0.0
    %1838 = vmatpush1.msra.mxu0 %v1716
    %1839 = vmatprep.subr.mxu0 0.0
    %1840 = vmatpush1.msra.mxu0 %v1717
    %1841 = vmatprep.subr.mxu0 0.0
    %1842 = vmatpush1.msra.mxu0 %v1718
    %1843 = vmatprep.subr.mxu0 0.0
    %1844 = vmatpush1.msra.mxu0 %v1719
    %1845 = vmatprep.subr.mxu0 0.0
    %1846 = vmatpush1.msra.mxu0 %v1720
    %1847 = vmatprep.subr.mxu0 0.0
    %1848 = vmatpush1.msra.mxu0 %v1721
    %1849 = vmatprep.subr.mxu0 0.0
    %1850 = vmatpush1.msra.mxu0 %v1722
    %1851 = vmatprep.subr.mxu0 0.0
    %1852 = vmatpush1.msra.mxu0 %v1723
    %1853 = vmatprep.subr.mxu0 0.0
    %1854 = vmatpush1.msra.mxu0 %v1724
    %1855 = vmatprep.subr.mxu0 0.0
    %1856 = vmatpush1.msra.mxu0 %v1725
    %1857 = vmatprep.subr.mxu0 0.0
    %1858 = vmatpush1.msra.mxu0 %v1726
    %1859 = vmatprep.subr.mxu0 0.0
    %1860 = vmatpush1.msra.mxu0 %v1727
    %1861 = vmatprep.subr.mxu0 0.0
    %1862 = vmatpush1.msra.mxu0 %v1728
    %1863 = vmatprep.subr.mxu0 0.0
    %1864 = vmatpush1.msra.mxu0 %v1729
    %1865 = vmatprep.subr.mxu0 0.0
    %1866 = vmatpush1.msra.mxu0 %v1730
    %1867 = vmatprep.subr.mxu0 0.0
    %1868 = vmatpush1.msra.mxu0 %v1731
    %1869 = vmatprep.subr.mxu0 0.0
    %1870 = vmatpush1.msra.mxu0 %v1732
    %1871 = vmatprep.subr.mxu0 0.0
    %1872 = vmatpush1.msra.mxu0 %v1733
    %1873 = vmatprep.subr.mxu0 0.0
    %1874 = vmatpush1.msra.mxu0 %v1734
    %1875 = vmatprep.subr.mxu0 0.0
    %1876 = vmatpush1.msra.mxu0 %v1735
    %1877 = vmatprep.subr.mxu0 0.0
    %1878 = vmatpush1.msra.mxu0 %v1736
    %1879 = vmatprep.subr.mxu0 0.0
    %1880 = vmatpush1.msra.mxu0 %v1737
    %1881 = vmatprep.subr.mxu0 0.0
    %1882 = vmatpush1.msra.mxu0 %v1738
    %1883 = vmatprep.subr.mxu0 0.0
    %1884 = vmatpush1.msra.mxu0 %v1739
    %1885 = vmatprep.subr.mxu0 0.0
    %1886 = vmatpush1.msra.mxu0 %v1740
    %1887 = vmatprep.mubr.f32.mxu0 %v1672
    %1888 = vmatmul.mubr.f32.gmra.mrb[0].mxu0 %v1671
    %v1889 = vpop.f32.mrb[0].mxu0
    %v1890 = vadd.f32 %v1815, %v1889
    %v1891 = vpop.f32.mrb[0].mxu0
    %1892 = vmatprep.mubr.f32.mxu0 %v1676
    %1893 = vmatmul.mubr.f32.gmra.mrb[0].mxu0 %v1675
    %v1894 = vpop.f32.mrb[0].mxu0
    %v1895 = vadd.f32 %v1820, %v1894
    %v1896 = vpop.f32.mrb[0].mxu0
    %1897 = vdwg.mxu0
    %v1898 = vadd.f32 %v1890, %v1363
    %v1899 = vadd.f32 %v1895, %v1364
    %v1900 = vld [vmem:[%s14] sm:$0x1]
    %v1901 = vld [vmem:[%s15] sm:$0x1]
    %1902 = vadd.xlane.f32.xlu0 %v1898
    %v1903 = vpop.xlane.xlu0 %1902
    %1904 = vadd.xlane.f32.xlu0 %v1899
    %v1905 = vpop.xlane.xlu0 %1904
    %v1906 = vmul.f32 %v1903, %v131
    %v1907 = vmul.f32 %v1905, %v131
    %v1908 = vsub.f32 %v1898, %v1906
    %v1909 = vsub.f32 %v1899, %v1907
    %v1910 = vmul.f32 %v1908, %v1908
    %v1911 = vmul.f32 %v1909, %v1909
    %1912 = vadd.xlane.f32.xlu0 %v1910
    %v1913 = vpop.xlane.xlu0 %1912
    %1914 = vadd.xlane.f32.xlu0 %v1911
    %v1915 = vpop.xlane.xlu0 %1914
    %v1916 = vmul.f32 %v1913, %v131
    %v1917 = vmul.f32 %v1915, %v131
    %v1918 = vadd.f32 %v1916, 1e-12
    %v1919 = vadd.f32 %v1917, 1e-12
    %v1920 = vrsqrt.pop %v1918
    %v1921 = vrsqrt.pop %v1919
    %v1922 = vmul.f32 %v1908, %v1920
    %v1923 = vmul.f32 %v1909, %v1921
    %v1925 = vlaneseq
    %v1926 = vshrl.u32 %v1925, 7
    %v1927 = vsub.s32 0, %v1926
    %v1928 = vrot.slane %v1900, %v1927
    %v1930 = vmul.f32 %v1922, %v1928
    %v1931 = vmul.f32 %v1923, %v1928
    %v1933 = vlaneseq
    %v1934 = vshrl.u32 %v1933, 7
    %v1935 = vsub.s32 0, %v1934
    %v1936 = vrot.slane %v1901, %v1935
    %v1938 = vadd.f32 %v1930, %v1936
    %v1939 = vadd.f32 %v1931, %v1936
    %s1940 = scalar_lea.vmem [#allocation2], 384
    %v1941 = vld [vmem:[%s1940] sm:$0xff]
    %v1942 = vld [vmem:[%s1940 + $0x8] sm:$0xff]
    %v1943 = vld [vmem:[%s1940 + $0x10] sm:$0xff]
    %v1944 = vld [vmem:[%s1940 + $0x18] sm:$0xff]
    %v1945 = vld [vmem:[%s1940 + $0x20] sm:$0xff]
    %v1946 = vld [vmem:[%s1940 + $0x28] sm:$0xff]
    %v1947 = vld [vmem:[%s1940 + $0x30] sm:$0xff]
    %v1948 = vld [vmem:[%s1940 + $0x38] sm:$0xff]
    %v1949 = vld [vmem:[%s1940 + $0x40] sm:$0xff]
    %v1950 = vld [vmem:[%s1940 + $0x48] sm:$0xff]
    %v1951 = vld [vmem:[%s1940 + $0x50] sm:$0xff]
    %v1952 = vld [vmem:[%s1940 + $0x58] sm:$0xff]
    %v1953 = vld [vmem:[%s1940 + $0x60] sm:$0xff]
    %v1954 = vld [vmem:[%s1940 + $0x68] sm:$0xff]
    %v1955 = vld [vmem:[%s1940 + $0x70] sm:$0xff]
    %v1956 = vld [vmem:[%s1940 + $0x78] sm:$0xff]
    %v1957 = vld [vmem:[%s1940 + $0x80] sm:$0xff]
    %v1958 = vld [vmem:[%s1940 + $0x88] sm:$0xff]
    %v1959 = vld [vmem:[%s1940 + $0x90] sm:$0xff]
    %v1960 = vld [vmem:[%s1940 + $0x98] sm:$0xff]
    %v1961 = vld [vmem:[%s1940 + $0xa0] sm:$0xff]
    %v1962 = vld [vmem:[%s1940 + $0xa8] sm:$0xff]
    %v1963 = vld [vmem:[%s1940 + $0xb0] sm:$0xff]
    %v1964 = vld [vmem:[%s1940 + $0xb8] sm:$0xff]
    %v1965 = vld [vmem:[%s1940 + $0xc0] sm:$0xff]
    %v1966 = vld [vmem:[%s1940 + $0xc8] sm:$0xff]
    %v1967 = vld [vmem:[%s1940 + $0xd0] sm:$0xff]
    %v1968 = vld [vmem:[%s1940 + $0xd8] sm:$0xff]
    %v1969 = vld [vmem:[%s1940 + $0xe0] sm:$0xff]
    %v1970 = vld [vmem:[%s1940 + $0xe8] sm:$0xff]
    %v1971 = vld [vmem:[%s1940 + $0xf0] sm:$0xff]
    %v1972 = vld [vmem:[%s1940 + $0xf8] sm:$0xff]
    %v1973 = vld [vmem:[%s1940 + $0x100] sm:$0xff]
    %v1974 = vld [vmem:[%s1940 + $0x108] sm:$0xff]
    %v1975 = vld [vmem:[%s1940 + $0x110] sm:$0xff]
    %v1976 = vld [vmem:[%s1940 + $0x118] sm:$0xff]
    %v1977 = vld [vmem:[%s1940 + $0x120] sm:$0xff]
    %v1978 = vld [vmem:[%s1940 + $0x128] sm:$0xff]
    %v1979 = vld [vmem:[%s1940 + $0x130] sm:$0xff]
    %v1980 = vld [vmem:[%s1940 + $0x138] sm:$0xff]
    %v1981 = vld [vmem:[%s1940 + $0x140] sm:$0xff]
    %v1982 = vld [vmem:[%s1940 + $0x148] sm:$0xff]
    %v1983 = vld [vmem:[%s1940 + $0x150] sm:$0xff]
    %v1984 = vld [vmem:[%s1940 + $0x158] sm:$0xff]
    %v1985 = vld [vmem:[%s1940 + $0x160] sm:$0xff]
    %v1986 = vld [vmem:[%s1940 + $0x168] sm:$0xff]
    %v1987 = vld [vmem:[%s1940 + $0x170] sm:$0xff]
    %v1988 = vld [vmem:[%s1940 + $0x178] sm:$0xff]
    %s1989 = scalar_lea.vmem %s5, 3
    %v1990 = vld [vmem:[%s1989] sm:$0x7]
    %v1992 = vlaneseq
    %v1993 = vshrl.u32 %v1992, 7
    %v1994 = vsub.s32 0, %v1993
    %v1995 = vrot.slane %v1990, %v1994
    %v1996 = vlaneseq
    %v1997 = vshrl.u32 %v1996, 7
    %v1998 = vsub.s32 1, %v1997
    %v1999 = vrot.slane %v1990, %v1998
    %v2000 = vlaneseq
    %v2001 = vshrl.u32 %v2000, 7
    %v2002 = vsub.s32 2, %v2001
    %v2003 = vrot.slane %v1990, %v2002
    %2007 = vmatprep.subr.mxu0 %v1942
    %2008 = vmatpush1.msra.mxu0 %v1941
    %2009 = vmatprep.subr.mxu0 %v1945
    %2010 = vmatpush1.msra.mxu0 %v1944
    %2011 = vmatprep.subr.mxu0 %v1948
    %2012 = vmatpush1.msra.mxu0 %v1947
    %2013 = vmatprep.subr.mxu0 %v1951
    %2014 = vmatpush1.msra.mxu0 %v1950
    %2015 = vmatprep.subr.mxu0 %v1954
    %2016 = vmatpush1.msra.mxu0 %v1953
    %2017 = vmatprep.subr.mxu0 %v1957
    %2018 = vmatpush1.msra.mxu0 %v1956
    %2019 = vmatprep.subr.mxu0 %v1960
    %2020 = vmatpush1.msra.mxu0 %v1959
    %2021 = vmatprep.subr.mxu0 %v1963
    %2022 = vmatpush1.msra.mxu0 %v1962
    %2023 = vmatprep.subr.mxu0 %v1966
    %2024 = vmatpush1.msra.mxu0 %v1965
    %2025 = vmatprep.subr.mxu0 %v1969
    %2026 = vmatpush1.msra.mxu0 %v1968
    %2027 = vmatprep.subr.mxu0 %v1972
    %2028 = vmatpush1.msra.mxu0 %v1971
    %2029 = vmatprep.subr.mxu0 %v1975
    %2030 = vmatpush1.msra.mxu0 %v1974
    %2031 = vmatprep.subr.mxu0 %v1978
    %2032 = vmatpush1.msra.mxu0 %v1977
    %2033 = vmatprep.subr.mxu0 %v1981
    %2034 = vmatpush1.msra.mxu0 %v1980
    %2035 = vmatprep.subr.mxu0 %v1984
    %2036 = vmatpush1.msra.mxu0 %v1983
    %2037 = vmatprep.subr.mxu0 %v1987
    %2038 = vmatpush1.msra.mxu0 %v1986
    %2039 = vmatprep.subr.mxu0 0.0
    %2040 = vmatpush1.msra.mxu0 0.0
    %2041 = vmatprep.subr.mxu0 0.0
    %2042 = vmatpush1.msra.mxu0 0.0
    %2043 = vmatprep.subr.mxu0 0.0
    %2044 = vmatpush1.msra.mxu0 0.0
    %2045 = vmatprep.subr.mxu0 0.0
    %2046 = vmatpush1.msra.mxu0 0.0
    %2047 = vmatprep.subr.mxu0 0.0
    %2048 = vmatpush1.msra.mxu0 0.0
    %2049 = vmatprep.subr.mxu0 0.0
    %2050 = vmatpush1.msra.mxu0 0.0
    %2051 = vmatprep.subr.mxu0 0.0
    %2052 = vmatpush1.msra.mxu0 0.0
    %2053 = vmatprep.subr.mxu0 0.0
    %2054 = vmatpush1.msra.mxu0 0.0
    %2055 = vmatprep.subr.mxu0 0.0
    %2056 = vmatpush1.msra.mxu0 0.0
    %2057 = vmatprep.subr.mxu0 0.0
    %2058 = vmatpush1.msra.mxu0 0.0
    %2059 = vmatprep.subr.mxu0 0.0
    %2060 = vmatpush1.msra.mxu0 0.0
    %2061 = vmatprep.subr.mxu0 0.0
    %2062 = vmatpush1.msra.mxu0 0.0
    %2063 = vmatprep.subr.mxu0 0.0
    %2064 = vmatpush1.msra.mxu0 0.0
    %2065 = vmatprep.subr.mxu0 0.0
    %2066 = vmatpush1.msra.mxu0 0.0
    %2067 = vmatprep.subr.mxu0 0.0
    %2068 = vmatpush1.msra.mxu0 0.0
    %2069 = vmatprep.subr.mxu0 0.0
    %2070 = vmatpush1.msra.mxu0 0.0
    %2071 = vmatprep.mubr.f32.mxu0 0.0
    %2072 = vmatmul.mubr.f32.gmra.mrb[0].mxu0 %v1938
    %v2073 = vpop.f32.mrb[0].mxu0
    %v2074 = vadd.f32 %v1995, %v2073
    %v2075 = vpop.f32.mrb[0].mxu0
    %v2076 = vadd.f32 %v1999, %v2075
    %2077 = vmatprep.mubr.f32.mxu0 0.0
    %2078 = vmatmul.mubr.f32.gmra.mrb[0].mxu0 %v1939
    %v2079 = vpop.f32.mrb[0].mxu0
    %v2080 = vadd.f32 %v1995, %v2079
    %v2081 = vpop.f32.mrb[0].mxu0
    %v2082 = vadd.f32 %v1999, %v2081
    %2083 = vdwg.mxu0
    %2084 = vmatprep.subr.mxu0 0.0
    %2085 = vmatpush1.msra.mxu0 %v1943
    %2086 = vmatprep.subr.mxu0 0.0
    %2087 = vmatpush1.msra.mxu0 %v1946
    %2088 = vmatprep.subr.mxu0 0.0
    %2089 = vmatpush1.msra.mxu0 %v1949
    %2090 = vmatprep.subr.mxu0 0.0
    %2091 = vmatpush1.msra.mxu0 %v1952
    %2092 = vmatprep.subr.mxu0 0.0
    %2093 = vmatpush1.msra.mxu0 %v1955
    %2094 = vmatprep.subr.mxu0 0.0
    %2095 = vmatpush1.msra.mxu0 %v1958
    %2096 = vmatprep.subr.mxu0 0.0
    %2097 = vmatpush1.msra.mxu0 %v1961
    %2098 = vmatprep.subr.mxu0 0.0
    %2099 = vmatpush1.msra.mxu0 %v1964
    %2100 = vmatprep.subr.mxu0 0.0
    %2101 = vmatpush1.msra.mxu0 %v1967
    %2102 = vmatprep.subr.mxu0 0.0
    %2103 = vmatpush1.msra.mxu0 %v1970
    %2104 = vmatprep.subr.mxu0 0.0
    %2105 = vmatpush1.msra.mxu0 %v1973
    %2106 = vmatprep.subr.mxu0 0.0
    %2107 = vmatpush1.msra.mxu0 %v1976
    %2108 = vmatprep.subr.mxu0 0.0
    %2109 = vmatpush1.msra.mxu0 %v1979
    %2110 = vmatprep.subr.mxu0 0.0
    %2111 = vmatpush1.msra.mxu0 %v1982
    %2112 = vmatprep.subr.mxu0 0.0
    %2113 = vmatpush1.msra.mxu0 %v1985
    %2114 = vmatprep.subr.mxu0 0.0
    %2115 = vmatpush1.msra.mxu0 %v1988
    %2116 = vmatprep.subr.mxu0 0.0
    %2117 = vmatpush1.msra.mxu0 0.0
    %2118 = vmatprep.subr.mxu0 0.0
    %2119 = vmatpush1.msra.mxu0 0.0
    %2120 = vmatprep.subr.mxu0 0.0
    %2121 = vmatpush1.msra.mxu0 0.0
    %2122 = vmatprep.subr.mxu0 0.0
    %2123 = vmatpush1.msra.mxu0 0.0
    %2124 = vmatprep.subr.mxu0 0.0
    %2125 = vmatpush1.msra.mxu0 0.0
    %2126 = vmatprep.subr.mxu0 0.0
    %2127 = vmatpush1.msra.mxu0 0.0
    %2128 = vmatprep.subr.mxu0 0.0
    %2129 = vmatpush1.msra.mxu0 0.0
    %2130 = vmatprep.subr.mxu0 0.0
    %2131 = vmatpush1.msra.mxu0 0.0
    %2132 = vmatprep.subr.mxu0 0.0
    %2133 = vmatpush1.msra.mxu0 0.0
    %2134 = vmatprep.subr.mxu0 0.0
    %2135 = vmatpush1.msra.mxu0 0.0
    %2136 = vmatprep.subr.mxu0 0.0
    %2137 = vmatpush1.msra.mxu0 0.0
    %2138 = vmatprep.subr.mxu0 0.0
    %2139 = vmatpush1.msra.mxu0 0.0
    %2140 = vmatprep.subr.mxu0 0.0
    %2141 = vmatpush1.msra.mxu0 0.0
    %2142 = vmatprep.subr.mxu0 0.0
    %2143 = vmatpush1.msra.mxu0 0.0
    %2144 = vmatprep.subr.mxu0 0.0
    %2145 = vmatpush1.msra.mxu0 0.0
    %2146 = vmatprep.subr.mxu0 0.0
    %2147 = vmatpush1.msra.mxu0 0.0
    %2148 = vmatprep.mubr.f32.mxu0 0.0
    %2149 = vmatmul.mubr.f32.gmra.mrb[0].mxu0 %v1938
    %v2150 = vpop.f32.mrb[0].mxu0
    %v2151 = vadd.f32 %v2003, %v2150
    %v2152 = vpop.f32.mrb[0].mxu0
    %2153 = vmatprep.mubr.f32.mxu0 0.0
    %2154 = vmatmul.mubr.f32.gmra.mrb[0].mxu0 %v1939
    %v2155 = vpop.f32.mrb[0].mxu0
    %v2156 = vadd.f32 %v2003, %v2155
    %v2157 = vpop.f32.mrb[0].mxu0
    %2158 = vdwg.mxu0
    %v2160 = vsel %vm383, %v2074, 0
    %v2163 = vsel %vm383, %v2080, 0
    %v2166 = vsel %vm383, %v2076, 0
    %v2169 = vsel %vm383, %v2082, 0
    %2171 = vmatprep.subr.mxu0 0.0
    %2172 = vmatpush1.xpose.msra.mxu0 %v2166
    %2173 = vmatprep.subr.mxu0 0.0
    %2174 = vmatpush1.xpose.msra.mxu0 %v2169
    %2175 = vmatprep.subr.mxu0 0.0
    %2176 = vmatpush1.xpose.msra.mxu0 0.0
    %2177 = vmatprep.subr.mxu0 0.0
    %2178 = vmatpush1.xpose.msra.mxu0 0.0
    %2179 = vmatprep.subr.mxu0 0.0
    %2180 = vmatpush1.xpose.msra.mxu0 0.0
    %2181 = vmatprep.subr.mxu0 0.0
    %2182 = vmatpush1.xpose.msra.mxu0 0.0
    %2183 = vmatprep.subr.mxu0 0.0
    %2184 = vmatpush1.xpose.msra.mxu0 0.0
    %2185 = vmatprep.subr.mxu0 0.0
    %2186 = vmatpush1.xpose.msra.mxu0 0.0
    %2187 = vmatprep.subr.mxu0 0.0
    %2188 = vmatpush1.xpose.msra.mxu0 0.0
    %2189 = vmatprep.subr.mxu0 0.0
    %2190 = vmatpush1.xpose.msra.mxu0 0.0
    %2191 = vmatprep.subr.mxu0 0.0
    %2192 = vmatpush1.xpose.msra.mxu0 0.0
    %2193 = vmatprep.subr.mxu0 0.0
    %2194 = vmatpush1.xpose.msra.mxu0 0.0
    %2195 = vmatprep.subr.mxu0 0.0
    %2196 = vmatpush1.xpose.msra.mxu0 0.0
    %2197 = vmatprep.subr.mxu0 0.0
    %2198 = vmatpush1.xpose.msra.mxu0 0.0
    %2199 = vmatprep.subr.mxu0 0.0
    %2200 = vmatpush1.xpose.msra.mxu0 0.0
    %2201 = vmatprep.subr.mxu0 0.0
    %2202 = vmatpush1.xpose.msra.mxu0 0.0
    %2203 = vmatprep.subr.mxu0 0.0
    %2204 = vmatpush1.xpose.msra.mxu0 0.0
    %2205 = vmatprep.subr.mxu0 0.0
    %2206 = vmatpush1.xpose.msra.mxu0 0.0
    %2207 = vmatprep.subr.mxu0 0.0
    %2208 = vmatpush1.xpose.msra.mxu0 0.0
    %2209 = vmatprep.subr.mxu0 0.0
    %2210 = vmatpush1.xpose.msra.mxu0 0.0
    %2211 = vmatprep.subr.mxu0 0.0
    %2212 = vmatpush1.xpose.msra.mxu0 0.0
    %2213 = vmatprep.subr.mxu0 0.0
    %2214 = vmatpush1.xpose.msra.mxu0 0.0
    %2215 = vmatprep.subr.mxu0 0.0
    %2216 = vmatpush1.xpose.msra.mxu0 0.0
    %2217 = vmatprep.subr.mxu0 0.0
    %2218 = vmatpush1.xpose.msra.mxu0 0.0
    %2219 = vmatprep.subr.mxu0 0.0
    %2220 = vmatpush1.xpose.msra.mxu0 0.0
    %2221 = vmatprep.subr.mxu0 0.0
    %2222 = vmatpush1.xpose.msra.mxu0 0.0
    %2223 = vmatprep.subr.mxu0 0.0
    %2224 = vmatpush1.xpose.msra.mxu0 0.0
    %2225 = vmatprep.subr.mxu0 0.0
    %2226 = vmatpush1.xpose.msra.mxu0 0.0
    %2227 = vmatprep.subr.mxu0 0.0
    %2228 = vmatpush1.xpose.msra.mxu0 0.0
    %2229 = vmatprep.subr.mxu0 0.0
    %2230 = vmatpush1.xpose.msra.mxu0 0.0
    %2231 = vmatprep.subr.mxu0 0.0
    %2232 = vmatpush1.xpose.msra.mxu0 0.0
    %2233 = vmatprep.subr.mxu0 0.0
    %2234 = vmatpush1.xpose.msra.mxu0 0.0
    %2235 = vmatprep.mubr.f32.mxu0 0.0
    %2236 = vmatmul.mubr.f32.gmra.mrb[0].mxu0 %v2160
    %v2237 = vpop.f32.mrb[0].mxu0
    %v2238 = vadd.f32 0.0, %v2237
    %v2239 = vpop.f32.mrb[0].mxu0
    %2240 = vmatprep.mubr.f32.mxu0 0.0
    %2241 = vmatmul.mubr.f32.gmra.mrb[0].mxu0 %v2163
    %v2242 = vpop.f32.mrb[0].mxu0
    %v2243 = vadd.f32 0.0, %v2242
    %v2244 = vpop.f32.mrb[0].mxu0
    %2245 = vdwg.mxu0
    %v2246 = vmul.f32 %v2238, 0.17677669
    %v2247 = vmul.f32 %v2243, 0.17677669
    %v2248 = vadd.f32 %v2246, %v121
    %v2249 = vadd.f32 %v2247, %v122
    %v2250 = vsel %vm475, %v2248, -inf
    %2251 = vmax.xlane.f32.xlu0 %v2250
    %v2252 = vpop.xlane.xlu0 %2251
    %v2253 = vsel %vm475, %v2249, -inf
    %2254 = vmax.xlane.f32.xlu0 %v2253
    %v2255 = vpop.xlane.xlu0 %2254
    %v2256 = vsub.f32 %v2248, %v2252
    %v2257 = vsub.f32 %v2249, %v2255
    %v2258 = vmul.f32 %v2256, 1.442695
    %v2259 = vpow.pop %v2258
    %v2260 = vmul.f32 %v2257, 1.442695
    %v2261 = vpow.pop %v2260
    %v2262 = vsel %vm475, %v2259, 0.0
    %2263 = vadd.xlane.f32.xlu0 %v2262
    %v2264 = vpop.xlane.xlu0 %2263
    %v2265 = vsel %vm475, %v2261, 0.0
    %2266 = vadd.xlane.f32.xlu0 %v2265
    %v2267 = vpop.xlane.xlu0 %2266
    %v2268 = vrcp.pop %v2264
    %v2269 = vrcp.pop %v2267
    %v2270 = vmul.f32 %v2259, %v2268
    %v2271 = vmul.f32 %v2261, %v2269
    %v2273 = vsel %vm475, %v2270, 0
    %v2276 = vsel %vm475, %v2271, 0
    %2278 = vmatprep.subr.mxu0 0.0
    %2279 = vmatpush1.msra.mxu0 %v2151
    %2280 = vmatprep.subr.mxu0 0.0
    %2281 = vmatpush1.msra.mxu0 %v2156
    %2282 = vmatprep.subr.mxu0 0.0
    %2283 = vmatpush1.msra.mxu0 0.0
    %2284 = vmatprep.subr.mxu0 0.0
    %2285 = vmatpush1.msra.mxu0 0.0
    %2286 = vmatprep.subr.mxu0 0.0
    %2287 = vmatpush1.msra.mxu0 0.0
    %2288 = vmatprep.subr.mxu0 0.0
    %2289 = vmatpush1.msra.mxu0 0.0
    %2290 = vmatprep.subr.mxu0 0.0
    %2291 = vmatpush1.msra.mxu0 0.0
    %2292 = vmatprep.subr.mxu0 0.0
    %2293 = vmatpush1.msra.mxu0 0.0
    %2294 = vmatprep.subr.mxu0 0.0
    %2295 = vmatpush1.msra.mxu0 0.0
    %2296 = vmatprep.subr.mxu0 0.0
    %2297 = vmatpush1.msra.mxu0 0.0
    %2298 = vmatprep.subr.mxu0 0.0
    %2299 = vmatpush1.msra.mxu0 0.0
    %2300 = vmatprep.subr.mxu0 0.0
    %2301 = vmatpush1.msra.mxu0 0.0
    %2302 = vmatprep.subr.mxu0 0.0
    %2303 = vmatpush1.msra.mxu0 0.0
    %2304 = vmatprep.subr.mxu0 0.0
    %2305 = vmatpush1.msra.mxu0 0.0
    %2306 = vmatprep.subr.mxu0 0.0
    %2307 = vmatpush1.msra.mxu0 0.0
    %2308 = vmatprep.subr.mxu0 0.0
    %2309 = vmatpush1.msra.mxu0 0.0
    %2310 = vmatprep.subr.mxu0 0.0
    %2311 = vmatpush1.msra.mxu0 0.0
    %2312 = vmatprep.subr.mxu0 0.0
    %2313 = vmatpush1.msra.mxu0 0.0
    %2314 = vmatprep.subr.mxu0 0.0
    %2315 = vmatpush1.msra.mxu0 0.0
    %2316 = vmatprep.subr.mxu0 0.0
    %2317 = vmatpush1.msra.mxu0 0.0
    %2318 = vmatprep.subr.mxu0 0.0
    %2319 = vmatpush1.msra.mxu0 0.0
    %2320 = vmatprep.subr.mxu0 0.0
    %2321 = vmatpush1.msra.mxu0 0.0
    %2322 = vmatprep.subr.mxu0 0.0
    %2323 = vmatpush1.msra.mxu0 0.0
    %2324 = vmatprep.subr.mxu0 0.0
    %2325 = vmatpush1.msra.mxu0 0.0
    %2326 = vmatprep.subr.mxu0 0.0
    %2327 = vmatpush1.msra.mxu0 0.0
    %2328 = vmatprep.subr.mxu0 0.0
    %2329 = vmatpush1.msra.mxu0 0.0
    %2330 = vmatprep.subr.mxu0 0.0
    %2331 = vmatpush1.msra.mxu0 0.0
    %2332 = vmatprep.subr.mxu0 0.0
    %2333 = vmatpush1.msra.mxu0 0.0
    %2334 = vmatprep.subr.mxu0 0.0
    %2335 = vmatpush1.msra.mxu0 0.0
    %2336 = vmatprep.subr.mxu0 0.0
    %2337 = vmatpush1.msra.mxu0 0.0
    %2338 = vmatprep.subr.mxu0 0.0
    %2339 = vmatpush1.msra.mxu0 0.0
    %2340 = vmatprep.subr.mxu0 0.0
    %2341 = vmatpush1.msra.mxu0 0.0
    %2342 = vmatprep.mubr.f32.mxu0 0.0
    %2343 = vmatmul.mubr.f32.gmra.mrb[0].mxu0 %v2273
    %v2344 = vpop.f32.mrb[0].mxu0
    %v2345 = vadd.f32 0.0, %v2344
    %v2346 = vpop.f32.mrb[0].mxu0
    %2347 = vmatprep.mubr.f32.mxu0 0.0
    %2348 = vmatmul.mubr.f32.gmra.mrb[0].mxu0 %v2276
    %v2349 = vpop.f32.mrb[0].mxu0
    %v2350 = vadd.f32 0.0, %v2349
    %v2351 = vpop.f32.mrb[0].mxu0
    %2352 = vdwg.mxu0
    %2353 = vrot.lane.b32.xlu0 %v2074, 96
    %v2354 = vpop.permute.xlu0 %2353
    %2355 = vrot.lane.b32.xlu0 %v2080, 96
    %v2356 = vpop.permute.xlu0 %2355
    %2357 = vrot.lane.b32.xlu0 %v2076, 96
    %v2358 = vpop.permute.xlu0 %2357
    %2359 = vrot.lane.b32.xlu0 %v2082, 96
    %v2360 = vpop.permute.xlu0 %2359
    %v2361 = vsel %vm383, %v2354, 0
    %v2363 = vsel %vm383, %v2356, 0
    %v2365 = vsel %vm383, %v2358, 0
    %v2367 = vsel %vm383, %v2360, 0
    %2369 = vmatprep.subr.mxu0 0.0
    %2370 = vmatpush1.xpose.msra.mxu0 %v2365
    %2371 = vmatprep.subr.mxu0 0.0
    %2372 = vmatpush1.xpose.msra.mxu0 %v2367
    %2373 = vmatprep.subr.mxu0 0.0
    %2374 = vmatpush1.xpose.msra.mxu0 0.0
    %2375 = vmatprep.subr.mxu0 0.0
    %2376 = vmatpush1.xpose.msra.mxu0 0.0
    %2377 = vmatprep.subr.mxu0 0.0
    %2378 = vmatpush1.xpose.msra.mxu0 0.0
    %2379 = vmatprep.subr.mxu0 0.0
    %2380 = vmatpush1.xpose.msra.mxu0 0.0
    %2381 = vmatprep.subr.mxu0 0.0
    %2382 = vmatpush1.xpose.msra.mxu0 0.0
    %2383 = vmatprep.subr.mxu0 0.0
    %2384 = vmatpush1.xpose.msra.mxu0 0.0
    %2385 = vmatprep.subr.mxu0 0.0
    %2386 = vmatpush1.xpose.msra.mxu0 0.0
    %2387 = vmatprep.subr.mxu0 0.0
    %2388 = vmatpush1.xpose.msra.mxu0 0.0
    %2389 = vmatprep.subr.mxu0 0.0
    %2390 = vmatpush1.xpose.msra.mxu0 0.0
    %2391 = vmatprep.subr.mxu0 0.0
    %2392 = vmatpush1.xpose.msra.mxu0 0.0
    %2393 = vmatprep.subr.mxu0 0.0
    %2394 = vmatpush1.xpose.msra.mxu0 0.0
    %2395 = vmatprep.subr.mxu0 0.0
    %2396 = vmatpush1.xpose.msra.mxu0 0.0
    %2397 = vmatprep.subr.mxu0 0.0
    %2398 = vmatpush1.xpose.msra.mxu0 0.0
    %2399 = vmatprep.subr.mxu0 0.0
    %2400 = vmatpush1.xpose.msra.mxu0 0.0
    %2401 = vmatprep.subr.mxu0 0.0
    %2402 = vmatpush1.xpose.msra.mxu0 0.0
    %2403 = vmatprep.subr.mxu0 0.0
    %2404 = vmatpush1.xpose.msra.mxu0 0.0
    %2405 = vmatprep.subr.mxu0 0.0
    %2406 = vmatpush1.xpose.msra.mxu0 0.0
    %2407 = vmatprep.subr.mxu0 0.0
    %2408 = vmatpush1.xpose.msra.mxu0 0.0
    %2409 = vmatprep.subr.mxu0 0.0
    %2410 = vmatpush1.xpose.msra.mxu0 0.0
    %2411 = vmatprep.subr.mxu0 0.0
    %2412 = vmatpush1.xpose.msra.mxu0 0.0
    %2413 = vmatprep.subr.mxu0 0.0
    %2414 = vmatpush1.xpose.msra.mxu0 0.0
    %2415 = vmatprep.subr.mxu0 0.0
    %2416 = vmatpush1.xpose.msra.mxu0 0.0
    %2417 = vmatprep.subr.mxu0 0.0
    %2418 = vmatpush1.xpose.msra.mxu0 0.0
    %2419 = vmatprep.subr.mxu0 0.0
    %2420 = vmatpush1.xpose.msra.mxu0 0.0
    %2421 = vmatprep.subr.mxu0 0.0
    %2422 = vmatpush1.xpose.msra.mxu0 0.0
    %2423 = vmatprep.subr.mxu0 0.0
    %2424 = vmatpush1.xpose.msra.mxu0 0.0
    %2425 = vmatprep.subr.mxu0 0.0
    %2426 = vmatpush1.xpose.msra.mxu0 0.0
    %2427 = vmatprep.subr.mxu0 0.0
    %2428 = vmatpush1.xpose.msra.mxu0 0.0
    %2429 = vmatprep.subr.mxu0 0.0
    %2430 = vmatpush1.xpose.msra.mxu0 0.0
    %2431 = vmatprep.subr.mxu0 0.0
    %2432 = vmatpush1.xpose.msra.mxu0 0.0
    %2433 = vmatprep.mubr.f32.mxu0 0.0
    %2434 = vmatmul.mubr.f32.gmra.mrb[0].mxu0 %v2361
    %v2435 = vpop.f32.mrb[0].mxu0
    %v2436 = vadd.f32 0.0, %v2435
    %v2437 = vpop.f32.mrb[0].mxu0
    %2438 = vmatprep.mubr.f32.mxu0 0.0
    %2439 = vmatmul.mubr.f32.gmra.mrb[0].mxu0 %v2363
    %v2440 = vpop.f32.mrb[0].mxu0
    %v2441 = vadd.f32 0.0, %v2440
    %v2442 = vpop.f32.mrb[0].mxu0
    %2443 = vdwg.mxu0
    %v2444 = vmul.f32 %v2436, 0.17677669
    %v2445 = vmul.f32 %v2441, 0.17677669
    %v2446 = vadd.f32 %v2444, %v121
    %v2447 = vadd.f32 %v2445, %v122
    %v2448 = vsel %vm475, %v2446, -inf
    %2449 = vmax.xlane.f32.xlu0 %v2448
    %v2450 = vpop.xlane.xlu0 %2449
    %v2451 = vsel %vm475, %v2447, -inf
    %2452 = vmax.xlane.f32.xlu0 %v2451
    %v2453 = vpop.xlane.xlu0 %2452
    %v2454 = vsub.f32 %v2446, %v2450
    %v2455 = vsub.f32 %v2447, %v2453
    %v2456 = vmul.f32 %v2454, 1.442695
    %v2457 = vpow.pop %v2456
    %v2458 = vmul.f32 %v2455, 1.442695
    %v2459 = vpow.pop %v2458
    %v2460 = vsel %vm475, %v2457, 0.0
    %2461 = vadd.xlane.f32.xlu0 %v2460
    %v2462 = vpop.xlane.xlu0 %2461
    %v2463 = vsel %vm475, %v2459, 0.0
    %2464 = vadd.xlane.f32.xlu0 %v2463
    %v2465 = vpop.xlane.xlu0 %2464
    %v2466 = vrcp.pop %v2462
    %v2467 = vrcp.pop %v2465
    %v2468 = vmul.f32 %v2457, %v2466
    %v2469 = vmul.f32 %v2459, %v2467
    %2472 = vrot.lane.b32.xlu0 %v2151, 96
    %v2473 = vpop.permute.xlu0 %2472
    %2474 = vrot.lane.b32.xlu0 %v2156, 96
    %v2475 = vpop.permute.xlu0 %2474
    %v2479 = vsel %vm475, %v2468, 0
    %v2482 = vsel %vm475, %v2469, 0
    %2484 = vmatprep.subr.mxu0 0.0
    %2485 = vmatpush1.msra.mxu0 %v2473
    %2486 = vmatprep.subr.mxu0 0.0
    %2487 = vmatpush1.msra.mxu0 %v2475
    %2488 = vmatprep.subr.mxu0 0.0
    %2489 = vmatpush1.msra.mxu0 0.0
    %2490 = vmatprep.subr.mxu0 0.0
    %2491 = vmatpush1.msra.mxu0 0.0
    %2492 = vmatprep.subr.mxu0 0.0
    %2493 = vmatpush1.msra.mxu0 0.0
    %2494 = vmatprep.subr.mxu0 0.0
    %2495 = vmatpush1.msra.mxu0 0.0
    %2496 = vmatprep.subr.mxu0 0.0
    %2497 = vmatpush1.msra.mxu0 0.0
    %2498 = vmatprep.subr.mxu0 0.0
    %2499 = vmatpush1.msra.mxu0 0.0
    %2500 = vmatprep.subr.mxu0 0.0
    %2501 = vmatpush1.msra.mxu0 0.0
    %2502 = vmatprep.subr.mxu0 0.0
    %2503 = vmatpush1.msra.mxu0 0.0
    %2504 = vmatprep.subr.mxu0 0.0
    %2505 = vmatpush1.msra.mxu0 0.0
    %2506 = vmatprep.subr.mxu0 0.0
    %2507 = vmatpush1.msra.mxu0 0.0
    %2508 = vmatprep.subr.mxu0 0.0
    %2509 = vmatpush1.msra.mxu0 0.0
    %2510 = vmatprep.subr.mxu0 0.0
    %2511 = vmatpush1.msra.mxu0 0.0
    %2512 = vmatprep.subr.mxu0 0.0
    %2513 = vmatpush1.msra.mxu0 0.0
    %2514 = vmatprep.subr.mxu0 0.0
    %2515 = vmatpush1.msra.mxu0 0.0
    %2516 = vmatprep.subr.mxu0 0.0
    %2517 = vmatpush1.msra.mxu0 0.0
    %2518 = vmatprep.subr.mxu0 0.0
    %2519 = vmatpush1.msra.mxu0 0.0
    %2520 = vmatprep.subr.mxu0 0.0
    %2521 = vmatpush1.msra.mxu0 0.0
    %2522 = vmatprep.subr.mxu0 0.0
    %2523 = vmatpush1.msra.mxu0 0.0
    %2524 = vmatprep.subr.mxu0 0.0
    %2525 = vmatpush1.msra.mxu0 0.0
    %2526 = vmatprep.subr.mxu0 0.0
    %2527 = vmatpush1.msra.mxu0 0.0
    %2528 = vmatprep.subr.mxu0 0.0
    %2529 = vmatpush1.msra.mxu0 0.0
    %2530 = vmatprep.subr.mxu0 0.0
    %2531 = vmatpush1.msra.mxu0 0.0
    %2532 = vmatprep.subr.mxu0 0.0
    %2533 = vmatpush1.msra.mxu0 0.0
    %2534 = vmatprep.subr.mxu0 0.0
    %2535 = vmatpush1.msra.mxu0 0.0
    %2536 = vmatprep.subr.mxu0 0.0
    %2537 = vmatpush1.msra.mxu0 0.0
    %2538 = vmatprep.subr.mxu0 0.0
    %2539 = vmatpush1.msra.mxu0 0.0
    %2540 = vmatprep.subr.mxu0 0.0
    %2541 = vmatpush1.msra.mxu0 0.0
    %2542 = vmatprep.subr.mxu0 0.0
    %2543 = vmatpush1.msra.mxu0 0.0
    %2544 = vmatprep.subr.mxu0 0.0
    %2545 = vmatpush1.msra.mxu0 0.0
    %2546 = vmatprep.subr.mxu0 0.0
    %2547 = vmatpush1.msra.mxu0 0.0
    %2548 = vmatprep.mubr.f32.mxu0 0.0
    %2549 = vmatmul.mubr.f32.gmra.mrb[0].mxu0 %v2479
    %v2550 = vpop.f32.mrb[0].mxu0
    %v2551 = vadd.f32 0.0, %v2550
    %v2552 = vpop.f32.mrb[0].mxu0
    %2553 = vmatprep.mubr.f32.mxu0 0.0
    %2554 = vmatmul.mubr.f32.gmra.mrb[0].mxu0 %v2482
    %v2555 = vpop.f32.mrb[0].mxu0
    %v2556 = vadd.f32 0.0, %v2555
    %v2557 = vpop.f32.mrb[0].mxu0
    %2558 = vdwg.mxu0
    %2559 = vrot.lane.b32.xlu0 %v2074, 64
    %v2560 = vpop.permute.xlu0 %2559
    %2561 = vrot.lane.b32.xlu0 %v2080, 64
    %v2562 = vpop.permute.xlu0 %2561
    %2563 = vrot.lane.b32.xlu0 %v2076, 64
    %v2564 = vpop.permute.xlu0 %2563
    %2565 = vrot.lane.b32.xlu0 %v2082, 64
    %v2566 = vpop.permute.xlu0 %2565
    %v2567 = vsel %vm383, %v2560, 0
    %v2569 = vsel %vm383, %v2562, 0
    %v2571 = vsel %vm383, %v2564, 0
    %v2573 = vsel %vm383, %v2566, 0
    %2575 = vmatprep.subr.mxu0 0.0
    %2576 = vmatpush1.xpose.msra.mxu0 %v2571
    %2577 = vmatprep.subr.mxu0 0.0
    %2578 = vmatpush1.xpose.msra.mxu0 %v2573
    %2579 = vmatprep.subr.mxu0 0.0
    %2580 = vmatpush1.xpose.msra.mxu0 0.0
    %2581 = vmatprep.subr.mxu0 0.0
    %2582 = vmatpush1.xpose.msra.mxu0 0.0
    %2583 = vmatprep.subr.mxu0 0.0
    %2584 = vmatpush1.xpose.msra.mxu0 0.0
    %2585 = vmatprep.subr.mxu0 0.0
    %2586 = vmatpush1.xpose.msra.mxu0 0.0
    %2587 = vmatprep.subr.mxu0 0.0
    %2588 = vmatpush1.xpose.msra.mxu0 0.0
    %2589 = vmatprep.subr.mxu0 0.0
    %2590 = vmatpush1.xpose.msra.mxu0 0.0
    %2591 = vmatprep.subr.mxu0 0.0
    %2592 = vmatpush1.xpose.msra.mxu0 0.0
    %2593 = vmatprep.subr.mxu0 0.0
    %2594 = vmatpush1.xpose.msra.mxu0 0.0
    %2595 = vmatprep.subr.mxu0 0.0
    %2596 = vmatpush1.xpose.msra.mxu0 0.0
    %2597 = vmatprep.subr.mxu0 0.0
    %2598 = vmatpush1.xpose.msra.mxu0 0.0
    %2599 = vmatprep.subr.mxu0 0.0
    %2600 = vmatpush1.xpose.msra.mxu0 0.0
    %2601 = vmatprep.subr.mxu0 0.0
    %2602 = vmatpush1.xpose.msra.mxu0 0.0
    %2603 = vmatprep.subr.mxu0 0.0
    %2604 = vmatpush1.xpose.msra.mxu0 0.0
    %2605 = vmatprep.subr.mxu0 0.0
    %2606 = vmatpush1.xpose.msra.mxu0 0.0
    %2607 = vmatprep.subr.mxu0 0.0
    %2608 = vmatpush1.xpose.msra.mxu0 0.0
    %2609 = vmatprep.subr.mxu0 0.0
    %2610 = vmatpush1.xpose.msra.mxu0 0.0
    %2611 = vmatprep.subr.mxu0 0.0
    %2612 = vmatpush1.xpose.msra.mxu0 0.0
    %2613 = vmatprep.subr.mxu0 0.0
    %2614 = vmatpush1.xpose.msra.mxu0 0.0
    %2615 = vmatprep.subr.mxu0 0.0
    %2616 = vmatpush1.xpose.msra.mxu0 0.0
    %2617 = vmatprep.subr.mxu0 0.0
    %2618 = vmatpush1.xpose.msra.mxu0 0.0
    %2619 = vmatprep.subr.mxu0 0.0
    %2620 = vmatpush1.xpose.msra.mxu0 0.0
    %2621 = vmatprep.subr.mxu0 0.0
    %2622 = vmatpush1.xpose.msra.mxu0 0.0
    %2623 = vmatprep.subr.mxu0 0.0
    %2624 = vmatpush1.xpose.msra.mxu0 0.0
    %2625 = vmatprep.subr.mxu0 0.0
    %2626 = vmatpush1.xpose.msra.mxu0 0.0
    %2627 = vmatprep.subr.mxu0 0.0
    %2628 = vmatpush1.xpose.msra.mxu0 0.0
    %2629 = vmatprep.subr.mxu0 0.0
    %2630 = vmatpush1.xpose.msra.mxu0 0.0
    %2631 = vmatprep.subr.mxu0 0.0
    %2632 = vmatpush1.xpose.msra.mxu0 0.0
    %2633 = vmatprep.subr.mxu0 0.0
    %2634 = vmatpush1.xpose.msra.mxu0 0.0
    %2635 = vmatprep.subr.mxu0 0.0
    %2636 = vmatpush1.xpose.msra.mxu0 0.0
    %2637 = vmatprep.subr.mxu0 0.0
    %2638 = vmatpush1.xpose.msra.mxu0 0.0
    %2639 = vmatprep.mubr.f32.mxu0 0.0
    %2640 = vmatmul.mubr.f32.gmra.mrb[0].mxu0 %v2567
    %v2641 = vpop.f32.mrb[0].mxu0
    %v2642 = vadd.f32 0.0, %v2641
    %v2643 = vpop.f32.mrb[0].mxu0
    %2644 = vmatprep.mubr.f32.mxu0 0.0
    %2645 = vmatmul.mubr.f32.gmra.mrb[0].mxu0 %v2569
    %v2646 = vpop.f32.mrb[0].mxu0
    %v2647 = vadd.f32 0.0, %v2646
    %v2648 = vpop.f32.mrb[0].mxu0
    %2649 = vdwg.mxu0
    %v2650 = vmul.f32 %v2642, 0.17677669
    %v2651 = vmul.f32 %v2647, 0.17677669
    %v2652 = vadd.f32 %v2650, %v121
    %v2653 = vadd.f32 %v2651, %v122
    %v2654 = vsel %vm475, %v2652, -inf
    %2655 = vmax.xlane.f32.xlu0 %v2654
    %v2656 = vpop.xlane.xlu0 %2655
    %v2657 = vsel %vm475, %v2653, -inf
    %2658 = vmax.xlane.f32.xlu0 %v2657
    %v2659 = vpop.xlane.xlu0 %2658
    %v2660 = vsub.f32 %v2652, %v2656
    %v2661 = vsub.f32 %v2653, %v2659
    %v2662 = vmul.f32 %v2660, 1.442695
    %v2663 = vpow.pop %v2662
    %v2664 = vmul.f32 %v2661, 1.442695
    %v2665 = vpow.pop %v2664
    %v2666 = vsel %vm475, %v2663, 0.0
    %2667 = vadd.xlane.f32.xlu0 %v2666
    %v2668 = vpop.xlane.xlu0 %2667
    %v2669 = vsel %vm475, %v2665, 0.0
    %2670 = vadd.xlane.f32.xlu0 %v2669
    %v2671 = vpop.xlane.xlu0 %2670
    %v2672 = vrcp.pop %v2668
    %v2673 = vrcp.pop %v2671
    %v2674 = vmul.f32 %v2663, %v2672
    %v2675 = vmul.f32 %v2665, %v2673
    %2676 = vrot.lane.b32.xlu0 %v2151, 64
    %v2677 = vpop.permute.xlu0 %2676
    %2678 = vrot.lane.b32.xlu0 %v2156, 64
    %v2679 = vpop.permute.xlu0 %2678
    %v2683 = vsel %vm475, %v2674, 0
    %v2686 = vsel %vm475, %v2675, 0
    %2688 = vmatprep.subr.mxu0 0.0
    %2689 = vmatpush1.msra.mxu0 %v2677
    %2690 = vmatprep.subr.mxu0 0.0
    %2691 = vmatpush1.msra.mxu0 %v2679
    %2692 = vmatprep.subr.mxu0 0.0
    %2693 = vmatpush1.msra.mxu0 0.0
    %2694 = vmatprep.subr.mxu0 0.0
    %2695 = vmatpush1.msra.mxu0 0.0
    %2696 = vmatprep.subr.mxu0 0.0
    %2697 = vmatpush1.msra.mxu0 0.0
    %2698 = vmatprep.subr.mxu0 0.0
    %2699 = vmatpush1.msra.mxu0 0.0
    %2700 = vmatprep.subr.mxu0 0.0
    %2701 = vmatpush1.msra.mxu0 0.0
    %2702 = vmatprep.subr.mxu0 0.0
    %2703 = vmatpush1.msra.mxu0 0.0
    %2704 = vmatprep.subr.mxu0 0.0
    %2705 = vmatpush1.msra.mxu0 0.0
    %2706 = vmatprep.subr.mxu0 0.0
    %2707 = vmatpush1.msra.mxu0 0.0
    %2708 = vmatprep.subr.mxu0 0.0
    %2709 = vmatpush1.msra.mxu0 0.0
    %2710 = vmatprep.subr.mxu0 0.0
    %2711 = vmatpush1.msra.mxu0 0.0
    %2712 = vmatprep.subr.mxu0 0.0
    %2713 = vmatpush1.msra.mxu0 0.0
    %2714 = vmatprep.subr.mxu0 0.0
    %2715 = vmatpush1.msra.mxu0 0.0
    %2716 = vmatprep.subr.mxu0 0.0
    %2717 = vmatpush1.msra.mxu0 0.0
    %2718 = vmatprep.subr.mxu0 0.0
    %2719 = vmatpush1.msra.mxu0 0.0
    %2720 = vmatprep.subr.mxu0 0.0
    %2721 = vmatpush1.msra.mxu0 0.0
    %2722 = vmatprep.subr.mxu0 0.0
    %2723 = vmatpush1.msra.mxu0 0.0
    %2724 = vmatprep.subr.mxu0 0.0
    %2725 = vmatpush1.msra.mxu0 0.0
    %2726 = vmatprep.subr.mxu0 0.0
    %2727 = vmatpush1.msra.mxu0 0.0
    %2728 = vmatprep.subr.mxu0 0.0
    %2729 = vmatpush1.msra.mxu0 0.0
    %2730 = vmatprep.subr.mxu0 0.0
    %2731 = vmatpush1.msra.mxu0 0.0
    %2732 = vmatprep.subr.mxu0 0.0
    %2733 = vmatpush1.msra.mxu0 0.0
    %2734 = vmatprep.subr.mxu0 0.0
    %2735 = vmatpush1.msra.mxu0 0.0
    %2736 = vmatprep.subr.mxu0 0.0
    %2737 = vmatpush1.msra.mxu0 0.0
    %2738 = vmatprep.subr.mxu0 0.0
    %2739 = vmatpush1.msra.mxu0 0.0
    %2740 = vmatprep.subr.mxu0 0.0
    %2741 = vmatpush1.msra.mxu0 0.0
    %2742 = vmatprep.subr.mxu0 0.0
    %2743 = vmatpush1.msra.mxu0 0.0
    %2744 = vmatprep.subr.mxu0 0.0
    %2745 = vmatpush1.msra.mxu0 0.0
    %2746 = vmatprep.subr.mxu0 0.0
    %2747 = vmatpush1.msra.mxu0 0.0
    %2748 = vmatprep.subr.mxu0 0.0
    %2749 = vmatpush1.msra.mxu0 0.0
    %2750 = vmatprep.subr.mxu0 0.0
    %2751 = vmatpush1.msra.mxu0 0.0
    %2752 = vmatprep.mubr.f32.mxu0 0.0
    %2753 = vmatmul.mubr.f32.gmra.mrb[0].mxu0 %v2683
    %v2754 = vpop.f32.mrb[0].mxu0
    %v2755 = vadd.f32 0.0, %v2754
    %v2756 = vpop.f32.mrb[0].mxu0
    %2757 = vmatprep.mubr.f32.mxu0 0.0
    %2758 = vmatmul.mubr.f32.gmra.mrb[0].mxu0 %v2686
    %v2759 = vpop.f32.mrb[0].mxu0
    %v2760 = vadd.f32 0.0, %v2759
    %v2761 = vpop.f32.mrb[0].mxu0
    %2762 = vdwg.mxu0
    %2763 = vrot.lane.b32.xlu0 %v2074, 32
    %v2764 = vpop.permute.xlu0 %2763
    %2765 = vrot.lane.b32.xlu0 %v2080, 32
    %v2766 = vpop.permute.xlu0 %2765
    %2767 = vrot.lane.b32.xlu0 %v2076, 32
    %v2768 = vpop.permute.xlu0 %2767
    %2769 = vrot.lane.b32.xlu0 %v2082, 32
    %v2770 = vpop.permute.xlu0 %2769
    %v2771 = vsel %vm383, %v2764, 0
    %v2773 = vsel %vm383, %v2766, 0
    %v2775 = vsel %vm383, %v2768, 0
    %v2777 = vsel %vm383, %v2770, 0
    %2779 = vmatprep.subr.mxu0 0.0
    %2780 = vmatpush1.xpose.msra.mxu0 %v2775
    %2781 = vmatprep.subr.mxu0 0.0
    %2782 = vmatpush1.xpose.msra.mxu0 %v2777
    %2783 = vmatprep.subr.mxu0 0.0
    %2784 = vmatpush1.xpose.msra.mxu0 0.0
    %2785 = vmatprep.subr.mxu0 0.0
    %2786 = vmatpush1.xpose.msra.mxu0 0.0
    %2787 = vmatprep.subr.mxu0 0.0
    %2788 = vmatpush1.xpose.msra.mxu0 0.0
    %2789 = vmatprep.subr.mxu0 0.0
    %2790 = vmatpush1.xpose.msra.mxu0 0.0
    %2791 = vmatprep.subr.mxu0 0.0
    %2792 = vmatpush1.xpose.msra.mxu0 0.0
    %2793 = vmatprep.subr.mxu0 0.0
    %2794 = vmatpush1.xpose.msra.mxu0 0.0
    %2795 = vmatprep.subr.mxu0 0.0
    %2796 = vmatpush1.xpose.msra.mxu0 0.0
    %2797 = vmatprep.subr.mxu0 0.0
    %2798 = vmatpush1.xpose.msra.mxu0 0.0
    %2799 = vmatprep.subr.mxu0 0.0
    %2800 = vmatpush1.xpose.msra.mxu0 0.0
    %2801 = vmatprep.subr.mxu0 0.0
    %2802 = vmatpush1.xpose.msra.mxu0 0.0
    %2803 = vmatprep.subr.mxu0 0.0
    %2804 = vmatpush1.xpose.msra.mxu0 0.0
    %2805 = vmatprep.subr.mxu0 0.0
    %2806 = vmatpush1.xpose.msra.mxu0 0.0
    %2807 = vmatprep.subr.mxu0 0.0
    %2808 = vmatpush1.xpose.msra.mxu0 0.0
    %2809 = vmatprep.subr.mxu0 0.0
    %2810 = vmatpush1.xpose.msra.mxu0 0.0
    %2811 = vmatprep.subr.mxu0 0.0
    %2812 = vmatpush1.xpose.msra.mxu0 0.0
    %2813 = vmatprep.subr.mxu0 0.0
    %2814 = vmatpush1.xpose.msra.mxu0 0.0
    %2815 = vmatprep.subr.mxu0 0.0
    %2816 = vmatpush1.xpose.msra.mxu0 0.0
    %2817 = vmatprep.subr.mxu0 0.0
    %2818 = vmatpush1.xpose.msra.mxu0 0.0
    %2819 = vmatprep.subr.mxu0 0.0
    %2820 = vmatpush1.xpose.msra.mxu0 0.0
    %2821 = vmatprep.subr.mxu0 0.0
    %2822 = vmatpush1.xpose.msra.mxu0 0.0
    %2823 = vmatprep.subr.mxu0 0.0
    %2824 = vmatpush1.xpose.msra.mxu0 0.0
    %2825 = vmatprep.subr.mxu0 0.0
    %2826 = vmatpush1.xpose.msra.mxu0 0.0
    %2827 = vmatprep.subr.mxu0 0.0
    %2828 = vmatpush1.xpose.msra.mxu0 0.0
    %2829 = vmatprep.subr.mxu0 0.0
    %2830 = vmatpush1.xpose.msra.mxu0 0.0
    %2831 = vmatprep.subr.mxu0 0.0
    %2832 = vmatpush1.xpose.msra.mxu0 0.0
    %2833 = vmatprep.subr.mxu0 0.0
    %2834 = vmatpush1.xpose.msra.mxu0 0.0
    %2835 = vmatprep.subr.mxu0 0.0
    %2836 = vmatpush1.xpose.msra.mxu0 0.0
    %2837 = vmatprep.subr.mxu0 0.0
    %2838 = vmatpush1.xpose.msra.mxu0 0.0
    %2839 = vmatprep.subr.mxu0 0.0
    %2840 = vmatpush1.xpose.msra.mxu0 0.0
    %2841 = vmatprep.subr.mxu0 0.0
    %2842 = vmatpush1.xpose.msra.mxu0 0.0
    %2843 = vmatprep.mubr.f32.mxu0 0.0
    %2844 = vmatmul.mubr.f32.gmra.mrb[0].mxu0 %v2771
    %v2845 = vpop.f32.mrb[0].mxu0
    %v2846 = vadd.f32 0.0, %v2845
    %v2847 = vpop.f32.mrb[0].mxu0
    %2848 = vmatprep.mubr.f32.mxu0 0.0
    %2849 = vmatmul.mubr.f32.gmra.mrb[0].mxu0 %v2773
    %v2850 = vpop.f32.mrb[0].mxu0
    %v2851 = vadd.f32 0.0, %v2850
    %v2852 = vpop.f32.mrb[0].mxu0
    %2853 = vdwg.mxu0
    %v2854 = vmul.f32 %v2846, 0.17677669
    %v2855 = vmul.f32 %v2851, 0.17677669
    %v2856 = vadd.f32 %v2854, %v121
    %v2857 = vadd.f32 %v2855, %v122
    %v2858 = vsel %vm475, %v2856, -inf
    %2859 = vmax.xlane.f32.xlu0 %v2858
    %v2860 = vpop.xlane.xlu0 %2859
    %v2861 = vsel %vm475, %v2857, -inf
    %2862 = vmax.xlane.f32.xlu0 %v2861
    %v2863 = vpop.xlane.xlu0 %2862
    %v2864 = vsub.f32 %v2856, %v2860
    %v2865 = vsub.f32 %v2857, %v2863
    %v2866 = vmul.f32 %v2864, 1.442695
    %v2867 = vpow.pop %v2866
    %v2868 = vmul.f32 %v2865, 1.442695
    %v2869 = vpow.pop %v2868
    %v2870 = vsel %vm475, %v2867, 0.0
    %2871 = vadd.xlane.f32.xlu0 %v2870
    %v2872 = vpop.xlane.xlu0 %2871
    %v2873 = vsel %vm475, %v2869, 0.0
    %2874 = vadd.xlane.f32.xlu0 %v2873
    %v2875 = vpop.xlane.xlu0 %2874
    %v2876 = vrcp.pop %v2872
    %v2877 = vrcp.pop %v2875
    %v2878 = vmul.f32 %v2867, %v2876
    %v2879 = vmul.f32 %v2869, %v2877
    %2880 = vrot.lane.b32.xlu0 %v2151, 32
    %v2881 = vpop.permute.xlu0 %2880
    %2882 = vrot.lane.b32.xlu0 %v2156, 32
    %v2883 = vpop.permute.xlu0 %2882
    %v2887 = vsel %vm475, %v2878, 0
    %v2890 = vsel %vm475, %v2879, 0
    %2892 = vmatprep.subr.mxu0 0.0
    %2893 = vmatpush1.msra.mxu0 %v2881
    %2894 = vmatprep.subr.mxu0 0.0
    %2895 = vmatpush1.msra.mxu0 %v2883
    %2896 = vmatprep.subr.mxu0 0.0
    %2897 = vmatpush1.msra.mxu0 0.0
    %2898 = vmatprep.subr.mxu0 0.0
    %2899 = vmatpush1.msra.mxu0 0.0
    %2900 = vmatprep.subr.mxu0 0.0
    %2901 = vmatpush1.msra.mxu0 0.0
    %2902 = vmatprep.subr.mxu0 0.0
    %2903 = vmatpush1.msra.mxu0 0.0
    %2904 = vmatprep.subr.mxu0 0.0
    %2905 = vmatpush1.msra.mxu0 0.0
    %2906 = vmatprep.subr.mxu0 0.0
    %2907 = vmatpush1.msra.mxu0 0.0
    %2908 = vmatprep.subr.mxu0 0.0
    %2909 = vmatpush1.msra.mxu0 0.0
    %2910 = vmatprep.subr.mxu0 0.0
    %2911 = vmatpush1.msra.mxu0 0.0
    %2912 = vmatprep.subr.mxu0 0.0
    %2913 = vmatpush1.msra.mxu0 0.0
    %2914 = vmatprep.subr.mxu0 0.0
    %2915 = vmatpush1.msra.mxu0 0.0
    %2916 = vmatprep.subr.mxu0 0.0
    %2917 = vmatpush1.msra.mxu0 0.0
    %2918 = vmatprep.subr.mxu0 0.0
    %2919 = vmatpush1.msra.mxu0 0.0
    %2920 = vmatprep.subr.mxu0 0.0
    %2921 = vmatpush1.msra.mxu0 0.0
    %2922 = vmatprep.subr.mxu0 0.0
    %2923 = vmatpush1.msra.mxu0 0.0
    %2924 = vmatprep.subr.mxu0 0.0
    %2925 = vmatpush1.msra.mxu0 0.0
    %2926 = vmatprep.subr.mxu0 0.0
    %2927 = vmatpush1.msra.mxu0 0.0
    %2928 = vmatprep.subr.mxu0 0.0
    %2929 = vmatpush1.msra.mxu0 0.0
    %2930 = vmatprep.subr.mxu0 0.0
    %2931 = vmatpush1.msra.mxu0 0.0
    %2932 = vmatprep.subr.mxu0 0.0
    %2933 = vmatpush1.msra.mxu0 0.0
    %2934 = vmatprep.subr.mxu0 0.0
    %2935 = vmatpush1.msra.mxu0 0.0
    %2936 = vmatprep.subr.mxu0 0.0
    %2937 = vmatpush1.msra.mxu0 0.0
    %2938 = vmatprep.subr.mxu0 0.0
    %2939 = vmatpush1.msra.mxu0 0.0
    %2940 = vmatprep.subr.mxu0 0.0
    %2941 = vmatpush1.msra.mxu0 0.0
    %2942 = vmatprep.subr.mxu0 0.0
    %2943 = vmatpush1.msra.mxu0 0.0
    %2944 = vmatprep.subr.mxu0 0.0
    %2945 = vmatpush1.msra.mxu0 0.0
    %2946 = vmatprep.subr.mxu0 0.0
    %2947 = vmatpush1.msra.mxu0 0.0
    %2948 = vmatprep.subr.mxu0 0.0
    %2949 = vmatpush1.msra.mxu0 0.0
    %2950 = vmatprep.subr.mxu0 0.0
    %2951 = vmatpush1.msra.mxu0 0.0
    %2952 = vmatprep.subr.mxu0 0.0
    %2953 = vmatpush1.msra.mxu0 0.0
    %2954 = vmatprep.subr.mxu0 0.0
    %2955 = vmatpush1.msra.mxu0 0.0
    %2956 = vmatprep.mubr.f32.mxu0 0.0
    %2957 = vmatmul.mubr.f32.gmra.mrb[0].mxu0 %v2887
    %v2958 = vpop.f32.mrb[0].mxu0
    %v2959 = vadd.f32 0.0, %v2958
    %v2960 = vpop.f32.mrb[0].mxu0
    %2961 = vmatprep.mubr.f32.mxu0 0.0
    %2962 = vmatmul.mubr.f32.gmra.mrb[0].mxu0 %v2890
    %v2963 = vpop.f32.mrb[0].mxu0
    %v2964 = vadd.f32 0.0, %v2963
    %v2965 = vpop.f32.mrb[0].mxu0
    %2966 = vdwg.mxu0
    %2969 = vrot.lane.b32.xlu0 %v2551, 32
    %v2970 = vpop.permute.xlu0 %2969
    %2971 = vrot.lane.b32.xlu0 %v2556, 32
    %v2972 = vpop.permute.xlu0 %2971
    %2977 = vrot.lane.b32.xlu0 %v2755, 64
    %v2978 = vpop.permute.xlu0 %2977
    %2979 = vrot.lane.b32.xlu0 %v2760, 64
    %v2980 = vpop.permute.xlu0 %2979
    %2985 = vrot.lane.b32.xlu0 %v2959, 96
    %v2986 = vpop.permute.xlu0 %2985
    %2987 = vrot.lane.b32.xlu0 %v2964, 96
    %v2988 = vpop.permute.xlu0 %2987
    %v2991 = vsel %vm383, %v2345, %v2970
    %v2992 = vsel %vm383, %v2350, %v2972
    %v2993 = vsel %vm1219, %v2991, %v2978
    %v2994 = vsel %vm1219, %v2992, %v2980
    %v2995 = vsel %vm1222, %v2993, %v2986
    %v2996 = vsel %vm1222, %v2994, %v2988
    %s2997 = scalar_lea.vmem %s6, 128
    %v2998 = vld [vmem:[%s2997] sm:$0xff]
    %v2999 = vld [vmem:[%s2997 + $0x8] sm:$0xff]
    %v3000 = vld [vmem:[%s2997 + $0x10] sm:$0xff]
    %v3001 = vld [vmem:[%s2997 + $0x18] sm:$0xff]
    %v3002 = vld [vmem:[%s2997 + $0x20] sm:$0xff]
    %v3003 = vld [vmem:[%s2997 + $0x28] sm:$0xff]
    %v3004 = vld [vmem:[%s2997 + $0x30] sm:$0xff]
    %v3005 = vld [vmem:[%s2997 + $0x38] sm:$0xff]
    %v3006 = vld [vmem:[%s2997 + $0x40] sm:$0xff]
    %v3007 = vld [vmem:[%s2997 + $0x48] sm:$0xff]
    %v3008 = vld [vmem:[%s2997 + $0x50] sm:$0xff]
    %v3009 = vld [vmem:[%s2997 + $0x58] sm:$0xff]
    %v3010 = vld [vmem:[%s2997 + $0x60] sm:$0xff]
    %v3011 = vld [vmem:[%s2997 + $0x68] sm:$0xff]
    %v3012 = vld [vmem:[%s2997 + $0x70] sm:$0xff]
    %v3013 = vld [vmem:[%s2997 + $0x78] sm:$0xff]
    %s3014 = scalar_lea.vmem %s7, 1
    %v3015 = vld [vmem:[%s3014] sm:$0x1]
    %v3017 = vlaneseq
    %v3018 = vshrl.u32 %v3017, 7
    %v3019 = vsub.s32 0, %v3018
    %v3020 = vrot.slane %v3015, %v3019
    %3022 = vmatprep.subr.mxu0 0.0
    %3023 = vmatpush1.msra.mxu0 %v2998
    %3024 = vmatprep.subr.mxu0 0.0
    %3025 = vmatpush1.msra.mxu0 %v2999
    %3026 = vmatprep.subr.mxu0 0.0
    %3027 = vmatpush1.msra.mxu0 %v3000
    %3028 = vmatprep.subr.mxu0 0.0
    %3029 = vmatpush1.msra.mxu0 %v3001
    %3030 = vmatprep.subr.mxu0 0.0
    %3031 = vmatpush1.msra.mxu0 %v3002
    %3032 = vmatprep.subr.mxu0 0.0
    %3033 = vmatpush1.msra.mxu0 %v3003
    %3034 = vmatprep.subr.mxu0 0.0
    %3035 = vmatpush1.msra.mxu0 %v3004
    %3036 = vmatprep.subr.mxu0 0.0
    %3037 = vmatpush1.msra.mxu0 %v3005
    %3038 = vmatprep.subr.mxu0 0.0
    %3039 = vmatpush1.msra.mxu0 %v3006
    %3040 = vmatprep.subr.mxu0 0.0
    %3041 = vmatpush1.msra.mxu0 %v3007
    %3042 = vmatprep.subr.mxu0 0.0
    %3043 = vmatpush1.msra.mxu0 %v3008
    %3044 = vmatprep.subr.mxu0 0.0
    %3045 = vmatpush1.msra.mxu0 %v3009
    %3046 = vmatprep.subr.mxu0 0.0
    %3047 = vmatpush1.msra.mxu0 %v3010
    %3048 = vmatprep.subr.mxu0 0.0
    %3049 = vmatpush1.msra.mxu0 %v3011
    %3050 = vmatprep.subr.mxu0 0.0
    %3051 = vmatpush1.msra.mxu0 %v3012
    %3052 = vmatprep.subr.mxu0 0.0
    %3053 = vmatpush1.msra.mxu0 %v3013
    %3054 = vmatprep.subr.mxu0 0.0
    %3055 = vmatpush1.msra.mxu0 0.0
    %3056 = vmatprep.subr.mxu0 0.0
    %3057 = vmatpush1.msra.mxu0 0.0
    %3058 = vmatprep.subr.mxu0 0.0
    %3059 = vmatpush1.msra.mxu0 0.0
    %3060 = vmatprep.subr.mxu0 0.0
    %3061 = vmatpush1.msra.mxu0 0.0
    %3062 = vmatprep.subr.mxu0 0.0
    %3063 = vmatpush1.msra.mxu0 0.0
    %3064 = vmatprep.subr.mxu0 0.0
    %3065 = vmatpush1.msra.mxu0 0.0
    %3066 = vmatprep.subr.mxu0 0.0
    %3067 = vmatpush1.msra.mxu0 0.0
    %3068 = vmatprep.subr.mxu0 0.0
    %3069 = vmatpush1.msra.mxu0 0.0
    %3070 = vmatprep.subr.mxu0 0.0
    %3071 = vmatpush1.msra.mxu0 0.0
    %3072 = vmatprep.subr.mxu0 0.0
    %3073 = vmatpush1.msra.mxu0 0.0
    %3074 = vmatprep.subr.mxu0 0.0
    %3075 = vmatpush1.msra.mxu0 0.0
    %3076 = vmatprep.subr.mxu0 0.0
    %3077 = vmatpush1.msra.mxu0 0.0
    %3078 = vmatprep.subr.mxu0 0.0
    %3079 = vmatpush1.msra.mxu0 0.0
    %3080 = vmatprep.subr.mxu0 0.0
    %3081 = vmatpush1.msra.mxu0 0.0
    %3082 = vmatprep.subr.mxu0 0.0
    %3083 = vmatpush1.msra.mxu0 0.0
    %3084 = vmatprep.subr.mxu0 0.0
    %3085 = vmatpush1.msra.mxu0 0.0
    %3086 = vmatprep.mubr.f32.mxu0 0.0
    %3087 = vmatmul.mubr.f32.gmra.mrb[0].mxu0 %v2995
    %v3088 = vpop.f32.mrb[0].mxu0
    %v3089 = vadd.f32 %v3020, %v3088
    %v3090 = vpop.f32.mrb[0].mxu0
    %3091 = vmatprep.mubr.f32.mxu0 0.0
    %3092 = vmatmul.mubr.f32.gmra.mrb[0].mxu0 %v2996
    %v3093 = vpop.f32.mrb[0].mxu0
    %v3094 = vadd.f32 %v3020, %v3093
    %v3095 = vpop.f32.mrb[0].mxu0
    %3096 = vdwg.mxu0
    %v3097 = vadd.f32 %v3089, %v1938
    %v3098 = vadd.f32 %v3094, %v1939
    %s3099 = scalar_lea.vmem %s8, 1
    %v3100 = vld [vmem:[%s3099] sm:$0x1]
    %s3101 = scalar_lea.vmem %s9, 1
    %v3102 = vld [vmem:[%s3101] sm:$0x1]
    %3103 = vadd.xlane.f32.xlu0 %v3097
    %v3104 = vpop.xlane.xlu0 %3103
    %3105 = vadd.xlane.f32.xlu0 %v3098
    %v3106 = vpop.xlane.xlu0 %3105
    %v3107 = vmul.f32 %v3104, %v131
    %v3108 = vmul.f32 %v3106, %v131
    %v3109 = vsub.f32 %v3097, %v3107
    %v3110 = vsub.f32 %v3098, %v3108
    %v3111 = vmul.f32 %v3109, %v3109
    %v3112 = vmul.f32 %v3110, %v3110
    %3113 = vadd.xlane.f32.xlu0 %v3111
    %v3114 = vpop.xlane.xlu0 %3113
    %3115 = vadd.xlane.f32.xlu0 %v3112
    %v3116 = vpop.xlane.xlu0 %3115
    %v3117 = vmul.f32 %v3114, %v131
    %v3118 = vmul.f32 %v3116, %v131
    %v3119 = vadd.f32 %v3117, 1e-12
    %v3120 = vadd.f32 %v3118, 1e-12
    %v3121 = vrsqrt.pop %v3119
    %v3122 = vrsqrt.pop %v3120
    %v3123 = vmul.f32 %v3109, %v3121
    %v3124 = vmul.f32 %v3110, %v3122
    %v3126 = vlaneseq
    %v3127 = vshrl.u32 %v3126, 7
    %v3128 = vsub.s32 0, %v3127
    %v3129 = vrot.slane %v3100, %v3128
    %v3131 = vmul.f32 %v3123, %v3129
    %v3132 = vmul.f32 %v3124, %v3129
    %v3134 = vlaneseq
    %v3135 = vshrl.u32 %v3134, 7
    %v3136 = vsub.s32 0, %v3135
    %v3137 = vrot.slane %v3102, %v3136
    %v3139 = vadd.f32 %v3131, %v3137
    %v3140 = vadd.f32 %v3132, %v3137
    %s3141 = scalar_lea.vmem [#allocation5], 512
    %v3142 = vld [vmem:[%s3141] sm:$0xff]
    %v3143 = vld [vmem:[%s3141 + $0x8] sm:$0xff]
    %v3144 = vld [vmem:[%s3141 + $0x10] sm:$0xff]
    %v3145 = vld [vmem:[%s3141 + $0x18] sm:$0xff]
    %v3146 = vld [vmem:[%s3141 + $0x20] sm:$0xff]
    %v3147 = vld [vmem:[%s3141 + $0x28] sm:$0xff]
    %v3148 = vld [vmem:[%s3141 + $0x30] sm:$0xff]
    %v3149 = vld [vmem:[%s3141 + $0x38] sm:$0xff]
    %v3150 = vld [vmem:[%s3141 + $0x40] sm:$0xff]
    %v3151 = vld [vmem:[%s3141 + $0x48] sm:$0xff]
    %v3152 = vld [vmem:[%s3141 + $0x50] sm:$0xff]
    %v3153 = vld [vmem:[%s3141 + $0x58] sm:$0xff]
    %v3154 = vld [vmem:[%s3141 + $0x60] sm:$0xff]
    %v3155 = vld [vmem:[%s3141 + $0x68] sm:$0xff]
    %v3156 = vld [vmem:[%s3141 + $0x70] sm:$0xff]
    %v3157 = vld [vmem:[%s3141 + $0x78] sm:$0xff]
    %v3158 = vld [vmem:[%s3141 + $0x80] sm:$0xff]
    %v3159 = vld [vmem:[%s3141 + $0x88] sm:$0xff]
    %v3160 = vld [vmem:[%s3141 + $0x90] sm:$0xff]
    %v3161 = vld [vmem:[%s3141 + $0x98] sm:$0xff]
    %v3162 = vld [vmem:[%s3141 + $0xa0] sm:$0xff]
    %v3163 = vld [vmem:[%s3141 + $0xa8] sm:$0xff]
    %v3164 = vld [vmem:[%s3141 + $0xb0] sm:$0xff]
    %v3165 = vld [vmem:[%s3141 + $0xb8] sm:$0xff]
    %v3166 = vld [vmem:[%s3141 + $0xc0] sm:$0xff]
    %v3167 = vld [vmem:[%s3141 + $0xc8] sm:$0xff]
    %v3168 = vld [vmem:[%s3141 + $0xd0] sm:$0xff]
    %v3169 = vld [vmem:[%s3141 + $0xd8] sm:$0xff]
    %v3170 = vld [vmem:[%s3141 + $0xe0] sm:$0xff]
    %v3171 = vld [vmem:[%s3141 + $0xe8] sm:$0xff]
    %v3172 = vld [vmem:[%s3141 + $0xf0] sm:$0xff]
    %v3173 = vld [vmem:[%s3141 + $0xf8] sm:$0xff]
    %v3174 = vld [vmem:[%s3141 + $0x100] sm:$0xff]
    %v3175 = vld [vmem:[%s3141 + $0x108] sm:$0xff]
    %v3176 = vld [vmem:[%s3141 + $0x110] sm:$0xff]
    %v3177 = vld [vmem:[%s3141 + $0x118] sm:$0xff]
    %v3178 = vld [vmem:[%s3141 + $0x120] sm:$0xff]
    %v3179 = vld [vmem:[%s3141 + $0x128] sm:$0xff]
    %v3180 = vld [vmem:[%s3141 + $0x130] sm:$0xff]
    %v3181 = vld [vmem:[%s3141 + $0x138] sm:$0xff]
    %v3182 = vld [vmem:[%s3141 + $0x140] sm:$0xff]
    %v3183 = vld [vmem:[%s3141 + $0x148] sm:$0xff]
    %v3184 = vld [vmem:[%s3141 + $0x150] sm:$0xff]
    %v3185 = vld [vmem:[%s3141 + $0x158] sm:$0xff]
    %v3186 = vld [vmem:[%s3141 + $0x160] sm:$0xff]
    %v3187 = vld [vmem:[%s3141 + $0x168] sm:$0xff]
    %v3188 = vld [vmem:[%s3141 + $0x170] sm:$0xff]
    %v3189 = vld [vmem:[%s3141 + $0x178] sm:$0xff]
    %v3190 = vld [vmem:[%s3141 + $0x180] sm:$0xff]
    %v3191 = vld [vmem:[%s3141 + $0x188] sm:$0xff]
    %v3192 = vld [vmem:[%s3141 + $0x190] sm:$0xff]
    %v3193 = vld [vmem:[%s3141 + $0x198] sm:$0xff]
    %v3194 = vld [vmem:[%s3141 + $0x1a0] sm:$0xff]
    %v3195 = vld [vmem:[%s3141 + $0x1a8] sm:$0xff]
    %v3196 = vld [vmem:[%s3141 + $0x1b0] sm:$0xff]
    %v3197 = vld [vmem:[%s3141 + $0x1b8] sm:$0xff]
    %v3198 = vld [vmem:[%s3141 + $0x1c0] sm:$0xff]
    %v3199 = vld [vmem:[%s3141 + $0x1c8] sm:$0xff]
    %v3200 = vld [vmem:[%s3141 + $0x1d0] sm:$0xff]
    %v3201 = vld [vmem:[%s3141 + $0x1d8] sm:$0xff]
    %v3202 = vld [vmem:[%s3141 + $0x1e0] sm:$0xff]
    %v3203 = vld [vmem:[%s3141 + $0x1e8] sm:$0xff]
    %v3204 = vld [vmem:[%s3141 + $0x1f0] sm:$0xff]
    %v3205 = vld [vmem:[%s3141 + $0x1f8] sm:$0xff]
    %s3206 = scalar_lea.vmem %s11, 4
    %v3207 = vld [vmem:[%s3206] sm:$0xf]
    %v3209 = vlaneseq
    %v3210 = vshrl.u32 %v3209, 7
    %v3211 = vsub.s32 0, %v3210
    %v3212 = vrot.slane %v3207, %v3211
    %v3213 = vlaneseq
    %v3214 = vshrl.u32 %v3213, 7
    %v3215 = vsub.s32 1, %v3214
    %v3216 = vrot.slane %v3207, %v3215
    %v3217 = vlaneseq
    %v3218 = vshrl.u32 %v3217, 7
    %v3219 = vsub.s32 2, %v3218
    %v3220 = vrot.slane %v3207, %v3219
    %v3221 = vlaneseq
    %v3222 = vshrl.u32 %v3221, 7
    %v3223 = vsub.s32 3, %v3222
    %v3224 = vrot.slane %v3207, %v3223
    %3229 = vmatprep.subr.mxu0 %v3143
    %3230 = vmatpush1.msra.mxu0 %v3142
    %3231 = vmatprep.subr.mxu0 %v3147
    %3232 = vmatpush1.msra.mxu0 %v3146
    %3233 = vmatprep.subr.mxu0 %v3151
    %3234 = vmatpush1.msra.mxu0 %v3150
    %3235 = vmatprep.subr.mxu0 %v3155
    %3236 = vmatpush1.msra.mxu0 %v3154
    %3237 = vmatprep.subr.mxu0 %v3159
    %3238 = vmatpush1.msra.mxu0 %v3158
    %3239 = vmatprep.subr.mxu0 %v3163
    %3240 = vmatpush1.msra.mxu0 %v3162
    %3241 = vmatprep.subr.mxu0 %v3167
    %3242 = vmatpush1.msra.mxu0 %v3166
    %3243 = vmatprep.subr.mxu0 %v3171
    %3244 = vmatpush1.msra.mxu0 %v3170
    %3245 = vmatprep.subr.mxu0 %v3175
    %3246 = vmatpush1.msra.mxu0 %v3174
    %3247 = vmatprep.subr.mxu0 %v3179
    %3248 = vmatpush1.msra.mxu0 %v3178
    %3249 = vmatprep.subr.mxu0 %v3183
    %3250 = vmatpush1.msra.mxu0 %v3182
    %3251 = vmatprep.subr.mxu0 %v3187
    %3252 = vmatpush1.msra.mxu0 %v3186
    %3253 = vmatprep.subr.mxu0 %v3191
    %3254 = vmatpush1.msra.mxu0 %v3190
    %3255 = vmatprep.subr.mxu0 %v3195
    %3256 = vmatpush1.msra.mxu0 %v3194
    %3257 = vmatprep.subr.mxu0 %v3199
    %3258 = vmatpush1.msra.mxu0 %v3198
    %3259 = vmatprep.subr.mxu0 %v3203
    %3260 = vmatpush1.msra.mxu0 %v3202
    %3261 = vmatprep.subr.mxu0 0.0
    %3262 = vmatpush1.msra.mxu0 0.0
    %3263 = vmatprep.subr.mxu0 0.0
    %3264 = vmatpush1.msra.mxu0 0.0
    %3265 = vmatprep.subr.mxu0 0.0
    %3266 = vmatpush1.msra.mxu0 0.0
    %3267 = vmatprep.subr.mxu0 0.0
    %3268 = vmatpush1.msra.mxu0 0.0
    %3269 = vmatprep.subr.mxu0 0.0
    %3270 = vmatpush1.msra.mxu0 0.0
    %3271 = vmatprep.subr.mxu0 0.0
    %3272 = vmatpush1.msra.mxu0 0.0
    %3273 = vmatprep.subr.mxu0 0.0
    %3274 = vmatpush1.msra.mxu0 0.0
    %3275 = vmatprep.subr.mxu0 0.0
    %3276 = vmatpush1.msra.mxu0 0.0
    %3277 = vmatprep.subr.mxu0 0.0
    %3278 = vmatpush1.msra.mxu0 0.0
    %3279 = vmatprep.subr.mxu0 0.0
    %3280 = vmatpush1.msra.mxu0 0.0
    %3281 = vmatprep.subr.mxu0 0.0
    %3282 = vmatpush1.msra.mxu0 0.0
    %3283 = vmatprep.subr.mxu0 0.0
    %3284 = vmatpush1.msra.mxu0 0.0
    %3285 = vmatprep.subr.mxu0 0.0
    %3286 = vmatpush1.msra.mxu0 0.0
    %3287 = vmatprep.subr.mxu0 0.0
    %3288 = vmatpush1.msra.mxu0 0.0
    %3289 = vmatprep.subr.mxu0 0.0
    %3290 = vmatpush1.msra.mxu0 0.0
    %3291 = vmatprep.subr.mxu0 0.0
    %3292 = vmatpush1.msra.mxu0 0.0
    %3293 = vmatprep.mubr.f32.mxu0 0.0
    %3294 = vmatmul.mubr.f32.gmra.mrb[0].mxu0 %v3139
    %v3295 = vpop.f32.mrb[0].mxu0
    %v3296 = vadd.f32 %v3212, %v3295
    %v3297 = vpop.f32.mrb[0].mxu0
    %v3298 = vadd.f32 %v3216, %v3297
    %3299 = vmatprep.mubr.f32.mxu0 0.0
    %3300 = vmatmul.mubr.f32.gmra.mrb[0].mxu0 %v3140
    %v3301 = vpop.f32.mrb[0].mxu0
    %v3302 = vadd.f32 %v3212, %v3301
    %v3303 = vpop.f32.mrb[0].mxu0
    %v3304 = vadd.f32 %v3216, %v3303
    %3305 = vdwg.mxu0
    %3306 = vmatprep.subr.mxu0 %v3145
    %3307 = vmatpush1.msra.mxu0 %v3144
    %3308 = vmatprep.subr.mxu0 %v3149
    %3309 = vmatpush1.msra.mxu0 %v3148
    %3310 = vmatprep.subr.mxu0 %v3153
    %3311 = vmatpush1.msra.mxu0 %v3152
    %3312 = vmatprep.subr.mxu0 %v3157
    %3313 = vmatpush1.msra.mxu0 %v3156
    %3314 = vmatprep.subr.mxu0 %v3161
    %3315 = vmatpush1.msra.mxu0 %v3160
    %3316 = vmatprep.subr.mxu0 %v3165
    %3317 = vmatpush1.msra.mxu0 %v3164
    %3318 = vmatprep.subr.mxu0 %v3169
    %3319 = vmatpush1.msra.mxu0 %v3168
    %3320 = vmatprep.subr.mxu0 %v3173
    %3321 = vmatpush1.msra.mxu0 %v3172
    %3322 = vmatprep.subr.mxu0 %v3177
    %3323 = vmatpush1.msra.mxu0 %v3176
    %3324 = vmatprep.subr.mxu0 %v3181
    %3325 = vmatpush1.msra.mxu0 %v3180
    %3326 = vmatprep.subr.mxu0 %v3185
    %3327 = vmatpush1.msra.mxu0 %v3184
    %3328 = vmatprep.subr.mxu0 %v3189
    %3329 = vmatpush1.msra.mxu0 %v3188
    %3330 = vmatprep.subr.mxu0 %v3193
    %3331 = vmatpush1.msra.mxu0 %v3192
    %3332 = vmatprep.subr.mxu0 %v3197
    %3333 = vmatpush1.msra.mxu0 %v3196
    %3334 = vmatprep.subr.mxu0 %v3201
    %3335 = vmatpush1.msra.mxu0 %v3200
    %3336 = vmatprep.subr.mxu0 %v3205
    %3337 = vmatpush1.msra.mxu0 %v3204
    %3338 = vmatprep.subr.mxu0 0.0
    %3339 = vmatpush1.msra.mxu0 0.0
    %3340 = vmatprep.subr.mxu0 0.0
    %3341 = vmatpush1.msra.mxu0 0.0
    %3342 = vmatprep.subr.mxu0 0.0
    %3343 = vmatpush1.msra.mxu0 0.0
    %3344 = vmatprep.subr.mxu0 0.0
    %3345 = vmatpush1.msra.mxu0 0.0
    %3346 = vmatprep.subr.mxu0 0.0
    %3347 = vmatpush1.msra.mxu0 0.0
    %3348 = vmatprep.subr.mxu0 0.0
    %3349 = vmatpush1.msra.mxu0 0.0
    %3350 = vmatprep.subr.mxu0 0.0
    %3351 = vmatpush1.msra.mxu0 0.0
    %3352 = vmatprep.subr.mxu0 0.0
    %3353 = vmatpush1.msra.mxu0 0.0
    %3354 = vmatprep.subr.mxu0 0.0
    %3355 = vmatpush1.msra.mxu0 0.0
    %3356 = vmatprep.subr.mxu0 0.0
    %3357 = vmatpush1.msra.mxu0 0.0
    %3358 = vmatprep.subr.mxu0 0.0
    %3359 = vmatpush1.msra.mxu0 0.0
    %3360 = vmatprep.subr.mxu0 0.0
    %3361 = vmatpush1.msra.mxu0 0.0
    %3362 = vmatprep.subr.mxu0 0.0
    %3363 = vmatpush1.msra.mxu0 0.0
    %3364 = vmatprep.subr.mxu0 0.0
    %3365 = vmatpush1.msra.mxu0 0.0
    %3366 = vmatprep.subr.mxu0 0.0
    %3367 = vmatpush1.msra.mxu0 0.0
    %3368 = vmatprep.subr.mxu0 0.0
    %3369 = vmatpush1.msra.mxu0 0.0
    %3370 = vmatprep.mubr.f32.mxu0 0.0
    %3371 = vmatmul.mubr.f32.gmra.mrb[0].mxu0 %v3139
    %v3372 = vpop.f32.mrb[0].mxu0
    %v3373 = vadd.f32 %v3220, %v3372
    %v3374 = vpop.f32.mrb[0].mxu0
    %v3375 = vadd.f32 %v3224, %v3374
    %3376 = vmatprep.mubr.f32.mxu0 0.0
    %3377 = vmatmul.mubr.f32.gmra.mrb[0].mxu0 %v3140
    %v3378 = vpop.f32.mrb[0].mxu0
    %v3379 = vadd.f32 %v3220, %v3378
    %v3380 = vpop.f32.mrb[0].mxu0
    %v3381 = vadd.f32 %v3224, %v3380
    %3382 = vdwg.mxu0
    %v3383 = vmul.f32 %v3296, 0.5
    %v3384 = vmul.f32 %v3298, 0.5
    %v3385 = vmul.f32 %v3373, 0.5
    %v3386 = vmul.f32 %v3375, 0.5
    %v3387 = vmul.f32 %v3302, 0.5
    %v3388 = vmul.f32 %v3304, 0.5
    %v3389 = vmul.f32 %v3379, 0.5
    %v3390 = vmul.f32 %v3381, 0.5
    %v3391 = vmul.f32 %v3296, 0.044715
    %v3392 = vmul.f32 %v3298, 0.044715
    %v3393 = vmul.f32 %v3373, 0.044715
    %v3394 = vmul.f32 %v3375, 0.044715
    %v3395 = vmul.f32 %v3302, 0.044715
    %v3396 = vmul.f32 %v3304, 0.044715
    %v3397 = vmul.f32 %v3379, 0.044715
    %v3398 = vmul.f32 %v3381, 0.044715
    %v3399 = vmul.f32 %v3391, %v3296
    %v3400 = vmul.f32 %v3392, %v3298
    %v3401 = vmul.f32 %v3393, %v3373
    %v3402 = vmul.f32 %v3394, %v3375
    %v3403 = vmul.f32 %v3395, %v3302
    %v3404 = vmul.f32 %v3396, %v3304
    %v3405 = vmul.f32 %v3397, %v3379
    %v3406 = vmul.f32 %v3398, %v3381
    %v3407 = vmul.f32 %v3399, %v3296
    %v3408 = vmul.f32 %v3400, %v3298
    %v3409 = vmul.f32 %v3401, %v3373
    %v3410 = vmul.f32 %v3402, %v3375
    %v3411 = vmul.f32 %v3403, %v3302
    %v3412 = vmul.f32 %v3404, %v3304
    %v3413 = vmul.f32 %v3405, %v3379
    %v3414 = vmul.f32 %v3406, %v3381
    %v3415 = vadd.f32 %v3296, %v3407
    %v3416 = vadd.f32 %v3298, %v3408
    %v3417 = vadd.f32 %v3373, %v3409
    %v3418 = vadd.f32 %v3375, %v3410
    %v3419 = vadd.f32 %v3302, %v3411
    %v3420 = vadd.f32 %v3304, %v3412
    %v3421 = vadd.f32 %v3379, %v3413
    %v3422 = vadd.f32 %v3381, %v3414
    %v3423 = vmul.f32 %v3415, 0.7978846
    %v3424 = vmul.f32 %v3416, 0.7978846
    %v3425 = vmul.f32 %v3417, 0.7978846
    %v3426 = vmul.f32 %v3418, 0.7978846
    %v3427 = vmul.f32 %v3419, 0.7978846
    %v3428 = vmul.f32 %v3420, 0.7978846
    %v3429 = vmul.f32 %v3421, 0.7978846
    %v3430 = vmul.f32 %v3422, 0.7978846
    %v3431 = vtanh.pop %v3423
    %v3432 = vtanh.pop %v3424
    %v3433 = vtanh.pop %v3425
    %v3434 = vtanh.pop %v3426
    %v3435 = vtanh.pop %v3427
    %v3436 = vtanh.pop %v3428
    %v3437 = vtanh.pop %v3429
    %v3438 = vtanh.pop %v3430
    %v3439 = vadd.f32 %v3431, 1.0
    %v3440 = vadd.f32 %v3432, 1.0
    %v3441 = vadd.f32 %v3433, 1.0
    %v3442 = vadd.f32 %v3434, 1.0
    %v3443 = vadd.f32 %v3435, 1.0
    %v3444 = vadd.f32 %v3436, 1.0
    %v3445 = vadd.f32 %v3437, 1.0
    %v3446 = vadd.f32 %v3438, 1.0
    %v3447 = vmul.f32 %v3383, %v3439
    %v3448 = vmul.f32 %v3384, %v3440
    %v3449 = vmul.f32 %v3385, %v3441
    %v3450 = vmul.f32 %v3386, %v3442
    %v3451 = vmul.f32 %v3387, %v3443
    %v3452 = vmul.f32 %v3388, %v3444
    %v3453 = vmul.f32 %v3389, %v3445
    %v3454 = vmul.f32 %v3390, %v3446
    %s3455 = scalar_lea.vmem [#allocation7], 512
    %v3456 = vld [vmem:[%s3455] sm:$0xff]
    %v3457 = vld [vmem:[%s3455 + $0x8] sm:$0xff]
    %v3458 = vld [vmem:[%s3455 + $0x10] sm:$0xff]
    %v3459 = vld [vmem:[%s3455 + $0x18] sm:$0xff]
    %v3460 = vld [vmem:[%s3455 + $0x20] sm:$0xff]
    %v3461 = vld [vmem:[%s3455 + $0x28] sm:$0xff]
    %v3462 = vld [vmem:[%s3455 + $0x30] sm:$0xff]
    %v3463 = vld [vmem:[%s3455 + $0x38] sm:$0xff]
    %v3464 = vld [vmem:[%s3455 + $0x40] sm:$0xff]
    %v3465 = vld [vmem:[%s3455 + $0x48] sm:$0xff]
    %v3466 = vld [vmem:[%s3455 + $0x50] sm:$0xff]
    %v3467 = vld [vmem:[%s3455 + $0x58] sm:$0xff]
    %v3468 = vld [vmem:[%s3455 + $0x60] sm:$0xff]
    %v3469 = vld [vmem:[%s3455 + $0x68] sm:$0xff]
    %v3470 = vld [vmem:[%s3455 + $0x70] sm:$0xff]
    %v3471 = vld [vmem:[%s3455 + $0x78] sm:$0xff]
    %v3472 = vld [vmem:[%s3455 + $0x80] sm:$0xff]
    %v3473 = vld [vmem:[%s3455 + $0x88] sm:$0xff]
    %v3474 = vld [vmem:[%s3455 + $0x90] sm:$0xff]
    %v3475 = vld [vmem:[%s3455 + $0x98] sm:$0xff]
    %v3476 = vld [vmem:[%s3455 + $0xa0] sm:$0xff]
    %v3477 = vld [vmem:[%s3455 + $0xa8] sm:$0xff]
    %v3478 = vld [vmem:[%s3455 + $0xb0] sm:$0xff]
    %v3479 = vld [vmem:[%s3455 + $0xb8] sm:$0xff]
    %v3480 = vld [vmem:[%s3455 + $0xc0] sm:$0xff]
    %v3481 = vld [vmem:[%s3455 + $0xc8] sm:$0xff]
    %v3482 = vld [vmem:[%s3455 + $0xd0] sm:$0xff]
    %v3483 = vld [vmem:[%s3455 + $0xd8] sm:$0xff]
    %v3484 = vld [vmem:[%s3455 + $0xe0] sm:$0xff]
    %v3485 = vld [vmem:[%s3455 + $0xe8] sm:$0xff]
    %v3486 = vld [vmem:[%s3455 + $0xf0] sm:$0xff]
    %v3487 = vld [vmem:[%s3455 + $0xf8] sm:$0xff]
    %v3488 = vld [vmem:[%s3455 + $0x100] sm:$0xff]
    %v3489 = vld [vmem:[%s3455 + $0x108] sm:$0xff]
    %v3490 = vld [vmem:[%s3455 + $0x110] sm:$0xff]
    %v3491 = vld [vmem:[%s3455 + $0x118] sm:$0xff]
    %v3492 = vld [vmem:[%s3455 + $0x120] sm:$0xff]
    %v3493 = vld [vmem:[%s3455 + $0x128] sm:$0xff]
    %v3494 = vld [vmem:[%s3455 + $0x130] sm:$0xff]
    %v3495 = vld [vmem:[%s3455 + $0x138] sm:$0xff]
    %v3496 = vld [vmem:[%s3455 + $0x140] sm:$0xff]
    %v3497 = vld [vmem:[%s3455 + $0x148] sm:$0xff]
    %v3498 = vld [vmem:[%s3455 + $0x150] sm:$0xff]
    %v3499 = vld [vmem:[%s3455 + $0x158] sm:$0xff]
    %v3500 = vld [vmem:[%s3455 + $0x160] sm:$0xff]
    %v3501 = vld [vmem:[%s3455 + $0x168] sm:$0xff]
    %v3502 = vld [vmem:[%s3455 + $0x170] sm:$0xff]
    %v3503 = vld [vmem:[%s3455 + $0x178] sm:$0xff]
    %v3504 = vld [vmem:[%s3455 + $0x180] sm:$0xff]
    %v3505 = vld [vmem:[%s3455 + $0x188] sm:$0xff]
    %v3506 = vld [vmem:[%s3455 + $0x190] sm:$0xff]
    %v3507 = vld [vmem:[%s3455 + $0x198] sm:$0xff]
    %v3508 = vld [vmem:[%s3455 + $0x1a0] sm:$0xff]
    %v3509 = vld [vmem:[%s3455 + $0x1a8] sm:$0xff]
    %v3510 = vld [vmem:[%s3455 + $0x1b0] sm:$0xff]
    %v3511 = vld [vmem:[%s3455 + $0x1b8] sm:$0xff]
    %v3512 = vld [vmem:[%s3455 + $0x1c0] sm:$0xff]
    %v3513 = vld [vmem:[%s3455 + $0x1c8] sm:$0xff]
    %v3514 = vld [vmem:[%s3455 + $0x1d0] sm:$0xff]
    %v3515 = vld [vmem:[%s3455 + $0x1d8] sm:$0xff]
    %v3516 = vld [vmem:[%s3455 + $0x1e0] sm:$0xff]
    %v3517 = vld [vmem:[%s3455 + $0x1e8] sm:$0xff]
    %v3518 = vld [vmem:[%s3455 + $0x1f0] sm:$0xff]
    %v3519 = vld [vmem:[%s3455 + $0x1f8] sm:$0xff]
    %s3520 = scalar_lea.vmem %s13, 1
    %v3521 = vld [vmem:[%s3520] sm:$0x1]
    %v3523 = vlaneseq
    %v3524 = vshrl.u32 %v3523, 7
    %v3525 = vsub.s32 0, %v3524
    %v3526 = vrot.slane %v3521, %v3525
    %3528 = vmatprep.subr.mxu0 0.0
    %3529 = vmatpush1.msra.mxu0 %v3456
    %3530 = vmatprep.subr.mxu0 0.0
    %3531 = vmatpush1.msra.mxu0 %v3457
    %3532 = vmatprep.subr.mxu0 0.0
    %3533 = vmatpush1.msra.mxu0 %v3458
    %3534 = vmatprep.subr.mxu0 0.0
    %3535 = vmatpush1.msra.mxu0 %v3459
    %3536 = vmatprep.subr.mxu0 0.0
    %3537 = vmatpush1.msra.mxu0 %v3460
    %3538 = vmatprep.subr.mxu0 0.0
    %3539 = vmatpush1.msra.mxu0 %v3461
    %3540 = vmatprep.subr.mxu0 0.0
    %3541 = vmatpush1.msra.mxu0 %v3462
    %3542 = vmatprep.subr.mxu0 0.0
    %3543 = vmatpush1.msra.mxu0 %v3463
    %3544 = vmatprep.subr.mxu0 0.0
    %3545 = vmatpush1.msra.mxu0 %v3464
    %3546 = vmatprep.subr.mxu0 0.0
    %3547 = vmatpush1.msra.mxu0 %v3465
    %3548 = vmatprep.subr.mxu0 0.0
    %3549 = vmatpush1.msra.mxu0 %v3466
    %3550 = vmatprep.subr.mxu0 0.0
    %3551 = vmatpush1.msra.mxu0 %v3467
    %3552 = vmatprep.subr.mxu0 0.0
    %3553 = vmatpush1.msra.mxu0 %v3468
    %3554 = vmatprep.subr.mxu0 0.0
    %3555 = vmatpush1.msra.mxu0 %v3469
    %3556 = vmatprep.subr.mxu0 0.0
    %3557 = vmatpush1.msra.mxu0 %v3470
    %3558 = vmatprep.subr.mxu0 0.0
    %3559 = vmatpush1.msra.mxu0 %v3471
    %3560 = vmatprep.subr.mxu0 0.0
    %3561 = vmatpush1.msra.mxu0 %v3472
    %3562 = vmatprep.subr.mxu0 0.0
    %3563 = vmatpush1.msra.mxu0 %v3473
    %3564 = vmatprep.subr.mxu0 0.0
    %3565 = vmatpush1.msra.mxu0 %v3474
    %3566 = vmatprep.subr.mxu0 0.0
    %3567 = vmatpush1.msra.mxu0 %v3475
    %3568 = vmatprep.subr.mxu0 0.0
    %3569 = vmatpush1.msra.mxu0 %v3476
    %3570 = vmatprep.subr.mxu0 0.0
    %3571 = vmatpush1.msra.mxu0 %v3477
    %3572 = vmatprep.subr.mxu0 0.0
    %3573 = vmatpush1.msra.mxu0 %v3478
    %3574 = vmatprep.subr.mxu0 0.0
    %3575 = vmatpush1.msra.mxu0 %v3479
    %3576 = vmatprep.subr.mxu0 0.0
    %3577 = vmatpush1.msra.mxu0 %v3480
    %3578 = vmatprep.subr.mxu0 0.0
    %3579 = vmatpush1.msra.mxu0 %v3481
    %3580 = vmatprep.subr.mxu0 0.0
    %3581 = vmatpush1.msra.mxu0 %v3482
    %3582 = vmatprep.subr.mxu0 0.0
    %3583 = vmatpush1.msra.mxu0 %v3483
    %3584 = vmatprep.subr.mxu0 0.0
    %3585 = vmatpush1.msra.mxu0 %v3484
    %3586 = vmatprep.subr.mxu0 0.0
    %3587 = vmatpush1.msra.mxu0 %v3485
    %3588 = vmatprep.subr.mxu0 0.0
    %3589 = vmatpush1.msra.mxu0 %v3486
    %3590 = vmatprep.subr.mxu0 0.0
    %3591 = vmatpush1.msra.mxu0 %v3487
    %3592 = vmatprep.mubr.f32.mxu0 %v3448
    %3593 = vmatmul.mubr.f32.gmra.mrb[0].mxu0 %v3447
    %v3594 = vpop.f32.mrb[0].mxu0
    %v3595 = vadd.f32 %v3526, %v3594
    %v3596 = vpop.f32.mrb[0].mxu0
    %3597 = vmatprep.mubr.f32.mxu0 %v3452
    %3598 = vmatmul.mubr.f32.gmra.mrb[0].mxu0 %v3451
    %v3599 = vpop.f32.mrb[0].mxu0
    %v3600 = vadd.f32 %v3526, %v3599
    %v3601 = vpop.f32.mrb[0].mxu0
    %3602 = vdwg.mxu0
    %3603 = vmatprep.subr.mxu0 0.0
    %3604 = vmatpush1.msra.mxu0 %v3488
    %3605 = vmatprep.subr.mxu0 0.0
    %3606 = vmatpush1.msra.mxu0 %v3489
    %3607 = vmatprep.subr.mxu0 0.0
    %3608 = vmatpush1.msra.mxu0 %v3490
    %3609 = vmatprep.subr.mxu0 0.0
    %3610 = vmatpush1.msra.mxu0 %v3491
    %3611 = vmatprep.subr.mxu0 0.0
    %3612 = vmatpush1.msra.mxu0 %v3492
    %3613 = vmatprep.subr.mxu0 0.0
    %3614 = vmatpush1.msra.mxu0 %v3493
    %3615 = vmatprep.subr.mxu0 0.0
    %3616 = vmatpush1.msra.mxu0 %v3494
    %3617 = vmatprep.subr.mxu0 0.0
    %3618 = vmatpush1.msra.mxu0 %v3495
    %3619 = vmatprep.subr.mxu0 0.0
    %3620 = vmatpush1.msra.mxu0 %v3496
    %3621 = vmatprep.subr.mxu0 0.0
    %3622 = vmatpush1.msra.mxu0 %v3497
    %3623 = vmatprep.subr.mxu0 0.0
    %3624 = vmatpush1.msra.mxu0 %v3498
    %3625 = vmatprep.subr.mxu0 0.0
    %3626 = vmatpush1.msra.mxu0 %v3499
    %3627 = vmatprep.subr.mxu0 0.0
    %3628 = vmatpush1.msra.mxu0 %v3500
    %3629 = vmatprep.subr.mxu0 0.0
    %3630 = vmatpush1.msra.mxu0 %v3501
    %3631 = vmatprep.subr.mxu0 0.0
    %3632 = vmatpush1.msra.mxu0 %v3502
    %3633 = vmatprep.subr.mxu0 0.0
    %3634 = vmatpush1.msra.mxu0 %v3503
    %3635 = vmatprep.subr.mxu0 0.0
    %3636 = vmatpush1.msra.mxu0 %v3504
    %3637 = vmatprep.subr.mxu0 0.0
    %3638 = vmatpush1.msra.mxu0 %v3505
    %3639 = vmatprep.subr.mxu0 0.0
    %3640 = vmatpush1.msra.mxu0 %v3506
    %3641 = vmatprep.subr.mxu0 0.0
    %3642 = vmatpush1.msra.mxu0 %v3507
    %3643 = vmatprep.subr.mxu0 0.0
    %3644 = vmatpush1.msra.mxu0 %v3508
    %3645 = vmatprep.subr.mxu0 0.0
    %3646 = vmatpush1.msra.mxu0 %v3509
    %3647 = vmatprep.subr.mxu0 0.0
    %3648 = vmatpush1.msra.mxu0 %v3510
    %3649 = vmatprep.subr.mxu0 0.0
    %3650 = vmatpush1.msra.mxu0 %v3511
    %3651 = vmatprep.subr.mxu0 0.0
    %3652 = vmatpush1.msra.mxu0 %v3512
    %3653 = vmatprep.subr.mxu0 0.0
    %3654 = vmatpush1.msra.mxu0 %v3513
    %3655 = vmatprep.subr.mxu0 0.0
    %3656 = vmatpush1.msra.mxu0 %v3514
    %3657 = vmatprep.subr.mxu0 0.0
    %3658 = vmatpush1.msra.mxu0 %v3515
    %3659 = vmatprep.subr.mxu0 0.0
    %3660 = vmatpush1.msra.mxu0 %v3516
    %3661 = vmatprep.subr.mxu0 0.0
    %3662 = vmatpush1.msra.mxu0 %v3517
    %3663 = vmatprep.subr.mxu0 0.0
    %3664 = vmatpush1.msra.mxu0 %v3518
    %3665 = vmatprep.subr.mxu0 0.0
    %3666 = vmatpush1.msra.mxu0 %v3519
    %3667 = vmatprep.mubr.f32.mxu0 %v3450
    %3668 = vmatmul.mubr.f32.gmra.mrb[0].mxu0 %v3449
    %v3669 = vpop.f32.mrb[0].mxu0
    %v3670 = vadd.f32 %v3595, %v3669
    %v3671 = vpop.f32.mrb[0].mxu0
    %3672 = vmatprep.mubr.f32.mxu0 %v3454
    %3673 = vmatmul.mubr.f32.gmra.mrb[0].mxu0 %v3453
    %v3674 = vpop.f32.mrb[0].mxu0
    %v3675 = vadd.f32 %v3600, %v3674
    %v3676 = vpop.f32.mrb[0].mxu0
    %3677 = vdwg.mxu0
    %v3678 = vadd.f32 %v3670, %v3139
    %v3679 = vadd.f32 %v3675, %v3140
    %s3680 = scalar_lea.vmem %s14, 1
    %v3681 = vld [vmem:[%s3680] sm:$0x1]
    %s3682 = scalar_lea.vmem %s15, 1
    %v3683 = vld [vmem:[%s3682] sm:$0x1]
    %3684 = vadd.xlane.f32.xlu0 %v3678
    %v3685 = vpop.xlane.xlu0 %3684
    %3686 = vadd.xlane.f32.xlu0 %v3679
    %v3687 = vpop.xlane.xlu0 %3686
    %v3688 = vmul.f32 %v3685, %v131
    %v3689 = vmul.f32 %v3687, %v131
    %v3690 = vsub.f32 %v3678, %v3688
    %v3691 = vsub.f32 %v3679, %v3689
    %v3692 = vmul.f32 %v3690, %v3690
    %v3693 = vmul.f32 %v3691, %v3691
    %3694 = vadd.xlane.f32.xlu0 %v3692
    %v3695 = vpop.xlane.xlu0 %3694
    %3696 = vadd.xlane.f32.xlu0 %v3693
    %v3697 = vpop.xlane.xlu0 %3696
    %v3698 = vmul.f32 %v3695, %v131
    %v3699 = vmul.f32 %v3697, %v131
    %v3700 = vadd.f32 %v3698, 1e-12
    %v3701 = vadd.f32 %v3699, 1e-12
    %v3702 = vrsqrt.pop %v3700
    %v3703 = vrsqrt.pop %v3701
    %v3704 = vmul.f32 %v3690, %v3702
    %v3705 = vmul.f32 %v3691, %v3703
    %v3707 = vlaneseq
    %v3708 = vshrl.u32 %v3707, 7
    %v3709 = vsub.s32 0, %v3708
    %v3710 = vrot.slane %v3681, %v3709
    %v3712 = vmul.f32 %v3704, %v3710
    %v3713 = vmul.f32 %v3705, %v3710
    %v3715 = vlaneseq
    %v3716 = vshrl.u32 %v3715, 7
    %v3717 = vsub.s32 0, %v3716
    %v3718 = vrot.slane %v3683, %v3717
    %v3720 = vadd.f32 %v3712, %v3718
    %v3721 = vadd.f32 %v3713, %v3718
    %v3723 = vrot.slane %v3721, 7
    %vm3725 = vcmask 1040384
    %v3726 = vsel %vm3725, %v3720, %v3723
    %v3727 = vld [vmem:[%s16] sm:$0xff]
    %v3728 = vld [vmem:[%s16 + $0x8] sm:$0xff]
    %v3729 = vld [vmem:[%s16 + $0x10] sm:$0xff]
    %v3730 = vld [vmem:[%s16 + $0x18] sm:$0xff]
    %v3731 = vld [vmem:[%s16 + $0x20] sm:$0xff]
    %v3732 = vld [vmem:[%s16 + $0x28] sm:$0xff]
    %v3733 = vld [vmem:[%s16 + $0x30] sm:$0xff]
    %v3734 = vld [vmem:[%s16 + $0x38] sm:$0xff]
    %v3735 = vld [vmem:[%s16 + $0x40] sm:$0xff]
    %v3736 = vld [vmem:[%s16 + $0x48] sm:$0xff]
    %v3737 = vld [vmem:[%s16 + $0x50] sm:$0xff]
    %v3738 = vld [vmem:[%s16 + $0x58] sm:$0xff]
    %v3739 = vld [vmem:[%s16 + $0x60] sm:$0xff]
    %v3740 = vld [vmem:[%s16 + $0x68] sm:$0xff]
    %v3741 = vld [vmem:[%s16 + $0x70] sm:$0xff]
    %v3742 = vld [vmem:[%s16 + $0x78] sm:$0xff]
    %v3743 = vld [vmem:[%s17] sm:$0x1]
    %v3745 = vlaneseq
    %v3746 = vshrl.u32 %v3745, 7
    %v3747 = vsub.s32 0, %v3746
    %v3748 = vrot.slane %v3743, %v3747
    %3750 = vmatprep.subr.mxu0 0.0
    %3751 = vmatpush1.msra.mxu0 %v3727
    %3752 = vmatprep.subr.mxu0 0.0
    %3753 = vmatpush1.msra.mxu0 %v3728
    %3754 = vmatprep.subr.mxu0 0.0
    %3755 = vmatpush1.msra.mxu0 %v3729
    %3756 = vmatprep.subr.mxu0 0.0
    %3757 = vmatpush1.msra.mxu0 %v3730
    %3758 = vmatprep.subr.mxu0 0.0
    %3759 = vmatpush1.msra.mxu0 %v3731
    %3760 = vmatprep.subr.mxu0 0.0
    %3761 = vmatpush1.msra.mxu0 %v3732
    %3762 = vmatprep.subr.mxu0 0.0
    %3763 = vmatpush1.msra.mxu0 %v3733
    %3764 = vmatprep.subr.mxu0 0.0
    %3765 = vmatpush1.msra.mxu0 %v3734
    %3766 = vmatprep.subr.mxu0 0.0
    %3767 = vmatpush1.msra.mxu0 %v3735
    %3768 = vmatprep.subr.mxu0 0.0
    %3769 = vmatpush1.msra.mxu0 %v3736
    %3770 = vmatprep.subr.mxu0 0.0
    %3771 = vmatpush1.msra.mxu0 %v3737
    %3772 = vmatprep.subr.mxu0 0.0
    %3773 = vmatpush1.msra.mxu0 %v3738
    %3774 = vmatprep.subr.mxu0 0.0
    %3775 = vmatpush1.msra.mxu0 %v3739
    %3776 = vmatprep.subr.mxu0 0.0
    %3777 = vmatpush1.msra.mxu0 %v3740
    %3778 = vmatprep.subr.mxu0 0.0
    %3779 = vmatpush1.msra.mxu0 %v3741
    %3780 = vmatprep.subr.mxu0 0.0
    %3781 = vmatpush1.msra.mxu0 %v3742
    %3782 = vmatprep.subr.mxu0 0.0
    %3783 = vmatpush1.msra.mxu0 0.0
    %3784 = vmatprep.subr.mxu0 0.0
    %3785 = vmatpush1.msra.mxu0 0.0
    %3786 = vmatprep.subr.mxu0 0.0
    %3787 = vmatpush1.msra.mxu0 0.0
    %3788 = vmatprep.subr.mxu0 0.0
    %3789 = vmatpush1.msra.mxu0 0.0
    %3790 = vmatprep.subr.mxu0 0.0
    %3791 = vmatpush1.msra.mxu0 0.0
    %3792 = vmatprep.subr.mxu0 0.0
    %3793 = vmatpush1.msra.mxu0 0.0
    %3794 = vmatprep.subr.mxu0 0.0
    %3795 = vmatpush1.msra.mxu0 0.0
    %3796 = vmatprep.subr.mxu0 0.0
    %3797 = vmatpush1.msra.mxu0 0.0
    %3798 = vmatprep.subr.mxu0 0.0
    %3799 = vmatpush1.msra.mxu0 0.0
    %3800 = vmatprep.subr.mxu0 0.0
    %3801 = vmatpush1.msra.mxu0 0.0
    %3802 = vmatprep.subr.mxu0 0.0
    %3803 = vmatpush1.msra.mxu0 0.0
    %3804 = vmatprep.subr.mxu0 0.0
    %3805 = vmatpush1.msra.mxu0 0.0
    %3806 = vmatprep.subr.mxu0 0.0
    %3807 = vmatpush1.msra.mxu0 0.0
    %3808 = vmatprep.subr.mxu0 0.0
    %3809 = vmatpush1.msra.mxu0 0.0
    %3810 = vmatprep.subr.mxu0 0.0
    %3811 = vmatpush1.msra.mxu0 0.0
    %3812 = vmatprep.subr.mxu0 0.0
    %3813 = vmatpush1.msra.mxu0 0.0
    %3814 = vmatprep.mubr.f32.mxu0 0.0
    %3815 = vmatmul.mubr.f32.gmra.mrb[0].mxu0 %v3726
    %v3816 = vpop.f32.mrb[0].mxu0
    %v3817 = vadd.f32 %v3748, %v3816
    %v3818 = vpop.f32.mrb[0].mxu0
    %3819 = vdwg.mxu0
    %v3820 = vtanh.pop %v3817
    %v3821 = vld [vmem:[#allocation8] sm:$0xff]
    %v3822 = vld [vmem:[#allocation8 + $0x8] sm:$0xff]
    %v3823 = vld [vmem:[#allocation8 + $0x10] sm:$0xff]
    %v3824 = vld [vmem:[#allocation8 + $0x18] sm:$0xff]
    %v3825 = vld [vmem:[#allocation8 + $0x20] sm:$0xff]
    %v3826 = vld [vmem:[#allocation8 + $0x28] sm:$0xff]
    %v3827 = vld [vmem:[#allocation8 + $0x30] sm:$0xff]
    %v3828 = vld [vmem:[#allocation8 + $0x38] sm:$0xff]
    %v3829 = vld [vmem:[#allocation8 + $0x40] sm:$0xff]
    %v3830 = vld [vmem:[#allocation8 + $0x48] sm:$0xff]
    %v3831 = vld [vmem:[#allocation8 + $0x50] sm:$0xff]
    %v3832 = vld [vmem:[#allocation8 + $0x58] sm:$0xff]
    %v3833 = vld [vmem:[#allocation8 + $0x60] sm:$0xff]
    %v3834 = vld [vmem:[#allocation8 + $0x68] sm:$0xff]
    %v3835 = vld [vmem:[#allocation8 + $0x70] sm:$0xff]
    %v3836 = vld [vmem:[#allocation8 + $0x78] sm:$0xff]
    %v3837 = vld [vmem:[%s19] sm:$0x1]
    %v3839 = vlaneseq
    %v3840 = vshrl.u32 %v3839, 7
    %v3841 = vsub.s32 0, %v3840
    %v3842 = vrot.slane %v3837, %v3841
    %3844 = vmatprep.subr.mxu0 0.0
    %3845 = vmatpush1.msra.mxu0 %v3821
    %3846 = vmatprep.subr.mxu0 0.0
    %3847 = vmatpush1.msra.mxu0 %v3822
    %3848 = vmatprep.subr.mxu0 0.0
    %3849 = vmatpush1.msra.mxu0 %v3823
    %3850 = vmatprep.subr.mxu0 0.0
    %3851 = vmatpush1.msra.mxu0 %v3824
    %3852 = vmatprep.subr.mxu0 0.0
    %3853 = vmatpush1.msra.mxu0 %v3825
    %3854 = vmatprep.subr.mxu0 0.0
    %3855 = vmatpush1.msra.mxu0 %v3826
    %3856 = vmatprep.subr.mxu0 0.0
    %3857 = vmatpush1.msra.mxu0 %v3827
    %3858 = vmatprep.subr.mxu0 0.0
    %3859 = vmatpush1.msra.mxu0 %v3828
    %3860 = vmatprep.subr.mxu0 0.0
    %3861 = vmatpush1.msra.mxu0 %v3829
    %3862 = vmatprep.subr.mxu0 0.0
    %3863 = vmatpush1.msra.mxu0 %v3830
    %3864 = vmatprep.subr.mxu0 0.0
    %3865 = vmatpush1.msra.mxu0 %v3831
    %3866 = vmatprep.subr.mxu0 0.0
    %3867 = vmatpush1.msra.mxu0 %v3832
    %3868 = vmatprep.subr.mxu0 0.0
    %3869 = vmatpush1.msra.mxu0 %v3833
    %3870 = vmatprep.subr.mxu0 0.0
    %3871 = vmatpush1.msra.mxu0 %v3834
    %3872 = vmatprep.subr.mxu0 0.0
    %3873 = vmatpush1.msra.mxu0 %v3835
    %3874 = vmatprep.subr.mxu0 0.0
    %3875 = vmatpush1.msra.mxu0 %v3836
    %3876 = vmatprep.subr.mxu0 0.0
    %3877 = vmatpush1.msra.mxu0 0.0
    %3878 = vmatprep.subr.mxu0 0.0
    %3879 = vmatpush1.msra.mxu0 0.0
    %3880 = vmatprep.subr.mxu0 0.0
    %3881 = vmatpush1.msra.mxu0 0.0
    %3882 = vmatprep.subr.mxu0 0.0
    %3883 = vmatpush1.msra.mxu0 0.0
    %3884 = vmatprep.subr.mxu0 0.0
    %3885 = vmatpush1.msra.mxu0 0.0
    %3886 = vmatprep.subr.mxu0 0.0
    %3887 = vmatpush1.msra.mxu0 0.0
    %3888 = vmatprep.subr.mxu0 0.0
    %3889 = vmatpush1.msra.mxu0 0.0
    %3890 = vmatprep.subr.mxu0 0.0
    %3891 = vmatpush1.msra.mxu0 0.0
    %3892 = vmatprep.subr.mxu0 0.0
    %3893 = vmatpush1.msra.mxu0 0.0
    %3894 = vmatprep.subr.mxu0 0.0
    %3895 = vmatpush1.msra.mxu0 0.0
    %3896 = vmatprep.subr.mxu0 0.0
    %3897 = vmatpush1.msra.mxu0 0.0
    %3898 = vmatprep.subr.mxu0 0.0
    %3899 = vmatpush1.msra.mxu0 0.0
    %3900 = vmatprep.subr.mxu0 0.0
    %3901 = vmatpush1.msra.mxu0 0.0
    %3902 = vmatprep.subr.mxu0 0.0
    %3903 = vmatpush1.msra.mxu0 0.0
    %3904 = vmatprep.subr.mxu0 0.0
    %3905 = vmatpush1.msra.mxu0 0.0
    %3906 = vmatprep.subr.mxu0 0.0
    %3907 = vmatpush1.msra.mxu0 0.0
    %3908 = vmatprep.mubr.f32.mxu0 0.0
    %3909 = vmatmul.mubr.f32.gmra.mrb[0].mxu0 %v3820
    %v3910 = vpop.f32.mrb[0].mxu0
    %v3911 = vadd.f32 %v3842, %v3910
    %v3912 = vpop.f32.mrb[0].mxu0
    %3913 = vdwg.mxu0
    %3914 = vst [vmem:[#allocation10] sm:$0x3] %v3911
    // Predicated region
    $region98: #{forward.1} parent=1 // pred_check
      _
    $region99: #{forward.1} parent=1 // pred_check_branch
      %3916 = sbr.rel (0) target = $region101
    $region100: #{forward.1} parent=1 // pred_region
      %s3918 = ssub.s32 32, 32
      %3919 = vsyncadd [#allocation4], %s3918
      %s3921 = sshll.u32 [#allocation10], 4
      %s3922 = int_to_ptr.vmem [resolvable:$true] %s3921
      %3924 = dma.vmem_to_hbm [thread:$0]  %s3922, 32, %s20, [#allocation4]
    $region101: #{forward.1} parent=1 // pred_fallthru
      _
    // Predicated region
    $region102: #{forward.1} parent=1 // pred_check
      _
    $region103: #{forward.1} parent=1 // pred_check_branch
      %3926 = sbr.rel (0) target = $region105
    $region104: #{forward.1} parent=1 // pred_region
      %3927 = dma.done [#allocation4], 32
    $region105: #{forward.1} parent=1 // pred_fallthru
      _
    %3928 = vsyncpa [#allocation3], 1
    %3929 = vsyncpa [#allocation6], 1
    %3930 = vsyncpa [#allocation9], 1
    %3931 = vsyncpa [#allocation4], 1

</llo_original>
